<compile_context>
chip_gen: v7x
topology: tpu7x:2x2x1
jax: 0.10.0
libtpu: 0.0.40
codegen_flags: <defaults>
</compile_context>

<pallas_src>
import functools

import jax
import jax.numpy as jnp
from jax import lax
from jax.experimental import pallas as pl
from jax.experimental.pallas import tpu as pltpu


# ----------------------------------------------------------------------------
# Fused flash-attention + fc_o Pallas kernel (h = 1)
# ----------------------------------------------------------------------------
def _flash_attn_fco_kernel(*refs, scale, kv_shared, nk_valid, kv_tile,
                           compute_dtype, use_q_scratch):
    """Grid = (batch, q_tile, kv_tile); kv_tile innermost.

    Refs (in order):
      q_ref  : (1, tq, d_k)   one (batch, q-tile) Q block        [compute_dtype]
      k_ref  : (1, tk, d_k)   one (batch, kv-tile) K block       [compute_dtype]
      v_ref  : (1, tk, d_v)   matching V block (absent if kv_shared -> k_ref)
      wo_ref : (d_v, d_out)   fc_o weight, PRE-TRANSPOSED        [compute_dtype]
      bo_ref : (1, d_out)     fc_o bias (f32)
      o_ref  : (1, tq, d_out) output block for this (batch, q-tile)
      m_ref, l_ref : (tq, 1)  online-softmax running max / sum (f32 scratch)
      acc_ref: (tq, d_v)      unnormalized attention output (f32 scratch)
      q_scr  : (tq, d_k)      scaled-q scratch (only when use_q_scratch)
    """
    it = iter(refs)
    q_ref = next(it)
    k_ref = next(it)
    v_ref = k_ref if kv_shared else next(it)
    wo_ref = next(it)
    bo_ref = next(it)
    o_ref = next(it)
    m_ref = next(it)
    l_ref = next(it)
    acc_ref = next(it)
    q_scr = next(it) if use_q_scratch else None

    ki = pl.program_id(2)
    last_kv = pl.num_programs(2) - 1

    @pl.when(ki == 0)
    def _():
        m_ref[...] = jnp.full_like(m_ref, -jnp.inf)
        l_ref[...] = jnp.zeros_like(l_ref)
        acc_ref[...] = jnp.zeros_like(acc_ref)
        if q_scr is not None:
            # Scale q ONCE per q-tile (not every kv step); mul in f32.
            q_scr[...] = (q_ref[0].astype(jnp.float32) * scale).astype(
                compute_dtype)

    qc = q_scr[...] if q_scr is not None else q_ref[0]

    # s = q @ k^T : contract the last dims directly (no K transpose).
    s = lax.dot_general(qc, k_ref[0],
                        dimension_numbers=(((1,), (1,)), ((), ())),
                        preferred_element_type=jnp.float32)          # (tq, tk)

    if nk_valid % kv_tile != 0:  # static: padded kv columns exist -> mask them
        col = lax.broadcasted_iota(jnp.int32, s.shape, 1)
        s = jnp.where(ki * kv_tile + col < nk_valid, s, -jnp.inf)

    # Online softmax update (all f32).
    m_prev = m_ref[...]
    m_new = jnp.maximum(m_prev, jnp.max(s, axis=-1, keepdims=True))
    alpha = jnp.exp(m_prev - m_new)
    p = jnp.exp(s - m_new)
    l_ref[...] = alpha * l_ref[...] + jnp.sum(p, axis=-1, keepdims=True)
    m_ref[...] = m_new

    pv = lax.dot_general(p.astype(compute_dtype), v_ref[0],
                         dimension_numbers=(((1,), (0,)), ((), ())),
                         preferred_element_type=jnp.float32)         # (tq, d_v)
    acc_ref[...] = alpha * acc_ref[...] + pv

    # Finalize: normalize + ONE (tq, d_v) x (d_v, d_out) GEMM + bias.
    @pl.when(ki == last_kv)
    def _():
        approx = jnp.dtype(compute_dtype) != jnp.dtype(jnp.float32)
        inv_l = pl.reciprocal(l_ref[...], approx=bool(approx))
        attn = (acc_ref[...] * inv_l).astype(compute_dtype)
        out = lax.dot_general(attn, wo_ref[...],
                              dimension_numbers=(((1,), (0,)), ((), ())),
                              preferred_element_type=jnp.float32)
        o_ref[0] = (out + bo_ref[...]).astype(o_ref.dtype)


def _round_up(x, m):
    return ((x + m - 1) // m) * m


def _vmem_limit_bytes(default=64 * 1024 * 1024):
    """Generation-aware scoped-VMEM budget: ~96 MiB on v5e/v6e, ~48 MiB on v7x."""
    try:
        info = pltpu.get_tpu_info()
        cap = getattr(info, "vmem_capacity_bytes", None)
        if not cap:
            return default
        return int(min(cap * 3 // 4, 96 * 1024 * 1024))
    except Exception:
        return default


def flash_attention_fc_o(q, k, v, w_o, b_o, *, scale=None, kv_shared=False,
                         max_q_tile=256, max_kv_tile=256,
                         compute_dtype=jnp.float32, vmem_limit=None):
    """out = fc_o(softmax(scale * q @ k^T) @ v)   (h = 1)

    q: (b, nq, d_k)   k: (b, nk, d_k)   v: (b, nk, d_v)  (ignored if kv_shared)
    w_o: (d_out, d_v) (PyTorch Linear layout)   b_o: (d_out,)
    scale: None -> 1/sqrt(d_k); pass 1.0 if already folded into q.
    Returns (b, nq, d_out) in q's original dtype.
    """
    b_s, nq, d_k = q.shape
    _, nk, d_k2 = k.shape
    assert d_k2 == d_k
    d_v = k.shape[2] if kv_shared else v.shape[2]
    d_out = w_o.shape[0]
    assert w_o.shape == (d_out, d_v)

    if scale is None:
        scale = 1.0 / float(d_k) ** 0.5
    scale = float(scale)
    out_dtype = q.dtype

    # Tile selection: biggest tile up to 256 (full extent if it already fits).
    if nq <= max_q_tile:
        tq, nq_pad = nq, nq
    else:
        tq = max_q_tile
        nq_pad = _round_up(nq, tq)
    if nk <= max_kv_tile:
        tk, nk_pad = nk, nk
    else:
        tk = max_kv_tile
        nk_pad = _round_up(nk, tk)

    qp = q if nq_pad == nq else jnp.pad(q, ((0, 0), (0, nq_pad - nq), (0, 0)))
    kp = k if nk_pad == nk else jnp.pad(k, ((0, 0), (0, nk_pad - nk), (0, 0)))
    qp = qp.astype(compute_dtype)      # bf16 streaming halves Q/K/V DMA bytes
    kp = kp.astype(compute_dtype)

    inputs = [qp, kp]
    in_specs = [
        pl.BlockSpec((1, tq, d_k), lambda b, qi, ki: (b, qi, 0)),
        pl.BlockSpec((1, tk, d_k), lambda b, qi, ki: (b, ki, 0)),
    ]
    if not kv_shared:
        vp = v if nk_pad == nk else jnp.pad(v, ((0, 0), (0, nk_pad - nk), (0, 0)))
        inputs.append(vp.astype(compute_dtype))
        in_specs.append(pl.BlockSpec((1, tk, d_v), lambda b, qi, ki: (b, ki, 0)))

    # fc_o weight: transpose ONCE here (param prep) so the in-kernel GEMM
    # contracts (((1,),(0,))) with no per-tile XLU transpose.
    wo_t = w_o.T.astype(compute_dtype)                     # (d_v, d_out)
    bo2 = b_o.reshape(1, d_out).astype(jnp.float32)
    inputs += [wo_t, bo2]
    in_specs += [
        pl.BlockSpec((d_v, d_out), lambda b, qi, ki: (0, 0)),
        pl.BlockSpec((1, d_out), lambda b, qi, ki: (0, 0)),
    ]

    use_q_scratch = (scale != 1.0)
    scratch = [pltpu.VMEM((tq, 1), jnp.float32),           # running max
               pltpu.VMEM((tq, 1), jnp.float32),           # running sum
               pltpu.VMEM((tq, d_v), jnp.float32)]         # unnormalized out
    if use_q_scratch:
        scratch.append(pltpu.VMEM((tq, d_k), compute_dtype))

    kernel = functools.partial(
        _flash_attn_fco_kernel, scale=scale, kv_shared=kv_shared,
        nk_valid=nk, kv_tile=tk, compute_dtype=compute_dtype,
        use_q_scratch=use_q_scratch)

    grid = (b_s, nq_pad // tq, nk_pad // tk)
    if vmem_limit is None:
        vmem_limit = _vmem_limit_bytes()

    out = pl.pallas_call(
        kernel,
        out_shape=jax.ShapeDtypeStruct((b_s, nq_pad, d_out), out_dtype),
        grid_spec=pltpu.PrefetchScalarGridSpec(
            num_scalar_prefetch=0,
            grid=grid,
            in_specs=in_specs,
            out_specs=pl.BlockSpec((1, tq, d_out), lambda b, qi, ki: (b, qi, 0)),
            scratch_shapes=scratch,
        ),
        compiler_params=pltpu.CompilerParams(
            dimension_semantics=("parallel", "parallel", "arbitrary"),
            vmem_limit_bytes=int(vmem_limit),
        ),
    )(*inputs)
    return out if nq_pad == nq else out[:, :nq, :]


# ----------------------------------------------------------------------------
# DAModule forward (Pallas attention; conv / small projections via XLA)
# ----------------------------------------------------------------------------
def _conv2d_same(x, w, b):
    # 3x3 "same" conv, NCHW/OIHW, stride 1 (matches nn.Conv2d(padding=1)).
    # TODO(synk): conv + the tiny fc_q/k/v GEMMs stay on XLA; the attention +
    # fused fc_o blocks are the Pallas kernels.
    y = lax.conv_general_dilated(x, w, window_strides=(1, 1), padding="SAME",
                                 dimension_numbers=("NCHW", "OIHW", "NCHW"))
    return y + b[None, :, None, None]


def da_module_forward(x, p, compute_dtype=jnp.float32):
    """Pallas-accelerated DAModule forward. x: (bs, c, H, W) -> (bs, c, H, W)."""
    bs, c, H, W = x.shape
    n = H * W

    # --- PositionAttentionModule: attention over n = H*W tokens of dim c ---
    y = _conv2d_same(x, p["pa_conv_w"], p["pa_conv_b"])
    y = y.reshape(bs, c, n).transpose(0, 2, 1)                       # (bs, n, c)
    scale = 1.0 / float(c) ** 0.5          # d_k = d_model = c  (h = 1)
    # Fold 1/sqrt(d_k) into fc_q's weight & bias (parameter prep, free).
    q = y @ (p["pa_fc_q_w"] * scale).T + p["pa_fc_q_b"] * scale
    k = y @ p["pa_fc_k_w"].T + p["pa_fc_k_b"]
    v = y @ p["pa_fc_v_w"].T + p["pa_fc_v_b"]
    p_out = flash_attention_fc_o(q, k, v, p["pa_fc_o_w"], p["pa_fc_o_b"],
                                 scale=1.0, compute_dtype=compute_dtype)

    # --- ChannelAttentionModule: attention over c tokens of dim n = H*W ---
    # q = k = v = z  -> kv_shared path (single K/V DMA stream); q scaling
    # happens once per q-tile inside the kernel.
    z = _conv2d_same(x, p["ca_conv_w"], p["ca_conv_b"]).reshape(bs, c, n)
    c_out = flash_attention_fc_o(z, z, None, p["ca_fc_o_w"], p["ca_fc_o_b"],
                                 kv_shared=True, compute_dtype=compute_dtype)

    p_out = p_out.transpose(0, 2, 1).reshape(bs, c, H, W)
    c_out = c_out.reshape(bs, c, H, W)
    return p_out + c_out


# ----------------------------------------------------------------------------
# Pure-JAX reference (mirrors the PyTorch forward exactly)
# ----------------------------------------------------------------------------
def _sdpa_reference(q, k, v, w_o, b_o, num_heads):
    b_s, nq, dq = q.shape
    nk = k.shape[1]
    d_k = dq // num_heads
    d_v = v.shape[2] // num_heads
    qh = q.reshape(b_s, nq, num_heads, d_k).transpose(0, 2, 1, 3)
    kh = k.reshape(b_s, nk, num_heads, d_k).transpose(0, 2, 3, 1)
    vh = v.reshape(b_s, nk, num_heads, d_v).transpose(0, 2, 1, 3)
    att = jnp.matmul(qh, kh) / jnp.sqrt(jnp.float32(d_k))
    att = jax.nn.softmax(att, axis=-1)
    out = jnp.matmul(att, vh).transpose(0, 2, 1, 3).reshape(b_s, nq,
                                                            num_heads * d_v)
    return out @ w_o.T + b_o


def da_module_reference(x, p):
    bs, c, H, W = x.shape
    n = H * W
    y = _conv2d_same(x, p["pa_conv_w"], p["pa_conv_b"])
    y = y.reshape(bs, c, n).transpose(0, 2, 1)
    q = y @ p["pa_fc_q_w"].T + p["pa_fc_q_b"]
    k = y @ p["pa_fc_k_w"].T + p["pa_fc_k_b"]
    v = y @ p["pa_fc_v_w"].T + p["pa_fc_v_b"]
    p_out = _sdpa_reference(q, k, v, p["pa_fc_o_w"], p["pa_fc_o_b"], 1)

    z = _conv2d_same(x, p["ca_conv_w"], p["ca_conv_b"]).reshape(bs, c, n)
    c_out = _sdpa_reference(z, z, z, p["ca_fc_o_w"], p["ca_fc_o_b"], 1)

    p_out = p_out.transpose(0, 2, 1).reshape(bs, c, H, W)
    c_out = c_out.reshape(bs, c, H, W)
    return p_out + c_out


# ----------------------------------------------------------------------------
# Parameter init (mirrors DAModule.init_weights: conv kaiming fan_out,
# Linear std=0.001, all biases 0)
# ----------------------------------------------------------------------------
def init_da_params(key, c, H, W):
    n = H * W
    ks = jax.random.split(key, 7)
    conv_std = (2.0 / (9 * c)) ** 0.5
    f32 = jnp.float32
    return {
        "pa_conv_w": conv_std * jax.random.normal(ks[0], (c, c, 3, 3), f32),
        "pa_conv_b": jnp.zeros((c,), f32),
        "pa_fc_q_w": 0.001 * jax.random.normal(ks[1], (c, c), f32),
        "pa_fc_q_b": jnp.zeros((c,), f32),
        "pa_fc_k_w": 0.001 * jax.random.normal(ks[2], (c, c), f32),
        "pa_fc_k_b": jnp.zeros((c,), f32),
        "pa_fc_v_w": 0.001 * jax.random.normal(ks[3], (c, c), f32),
        "pa_fc_v_b": jnp.zeros((c,), f32),
        "pa_fc_o_w": 0.001 * jax.random.normal(ks[4], (c, c), f32),
        "pa_fc_o_b": jnp.zeros((c,), f32),
        "ca_conv_w": conv_std * jax.random.normal(ks[5], (c, c, 3, 3), f32),
        "ca_conv_b": jnp.zeros((c,), f32),
        "ca_fc_o_w": 0.001 * jax.random.normal(ks[6], (n, n), f32),
        "ca_fc_o_b": jnp.zeros((n,), f32),
    }


def _rel_err(a, b):
    return float(jnp.max(jnp.abs(a - b)) / (jnp.max(jnp.abs(b)) + 1e-12))


if __name__ == "__main__":
    key = jax.random.PRNGKey(0)

    # --- Test 1: aligned shapes (n = 256 exercises 256-tiles cleanly) ---
    bs, c, H, W = 2, 32, 16, 16
    k1, k2 = jax.random.split(key)
    x = jax.random.normal(k1, (bs, c, H, W), dtype=jnp.float32)
    params = init_da_params(k2, c, H, W)

    out = jax.block_until_ready(
        da_module_forward(x, params, compute_dtype=jnp.float32))
    ref = jax.block_until_ready(da_module_reference(x, params))
    assert out.shape == (bs, c, H, W)
    assert _rel_err(out, ref) < 1e-2, _rel_err(out, ref)

    # bf16-streamed MXU path — looser sanity check.
    out_bf16 = jax.block_until_ready(
        da_module_forward(x, params, compute_dtype=jnp.bfloat16))
    assert _rel_err(out_bf16, ref) < 5e-2, _rel_err(out_bf16, ref)

    # --- Test 2: unaligned shapes (n = 400 > 256 -> kv tiling, kv mask,
    #     padded q rows; d = 24 / 400 not lane-aligned, like real DANet 7x7) ---
    bs2, c2, H2, W2 = 1, 24, 20, 20
    k3, k4 = jax.random.split(k2)
    x2 = jax.random.normal(k3, (bs2, c2, H2, W2), dtype=jnp.float32)
    params2 = init_da_params(k4, c2, H2, W2)

    out2 = jax.block_until_ready(
        da_module_forward(x2, params2, compute_dtype=jnp.float32))
    ref2 = jax.block_until_ready(da_module_reference(x2, params2))
    assert out2.shape == (bs2, c2, H2, W2)
    assert _rel_err(out2, ref2) < 1e-2, _rel_err(out2, ref2)

    print("KERNEL_OK")
</pallas_src>

<mosaic_0001>
module attributes {stable_mosaic.version = 11 : i64} {
  func.func @_flash_attn_fco_kernel(%arg0: i32, %arg1: i32, %arg2: i32, %arg3: memref<1x256x32xf32, #tpu.memory_space<vmem>>, %arg4: memref<1x256x32xf32, #tpu.memory_space<vmem>>, %arg5: memref<1x256x32xf32, #tpu.memory_space<vmem>>, %arg6: memref<32x32xf32, #tpu.memory_space<vmem>>, %arg7: memref<1x32xf32, #tpu.memory_space<vmem>>, %arg8: memref<1x256x32xf32, #tpu.memory_space<vmem>>, %arg9: memref<256x1xf32, #tpu.memory_space<vmem>>, %arg10: memref<256x1xf32, #tpu.memory_space<vmem>>, %arg11: memref<256x32xf32, #tpu.memory_space<vmem>>) attributes {dimension_semantics = [#tpu.dimension_semantics<parallel>, #tpu.dimension_semantics<parallel>, #tpu.dimension_semantics<arbitrary>], iteration_bounds = array<i64: 2, 1, 1>, scalar_prefetch = 0 : i64, scratch_operands = 3 : i64, tpu.core_type = #tpu.core_type<tc>, window_params = [{transform_indices = @transform_0, window_bounds = array<i64: 1, 256, 32>}, {transform_indices = @transform_1, window_bounds = array<i64: 1, 256, 32>}, {transform_indices = @transform_2, window_bounds = array<i64: 1, 256, 32>}, {pipeline_mode = #tpu.pipeline_mode<synchronous>, transform_indices = @transform_3, window_bounds = array<i64: 32, 32>}, {pipeline_mode = #tpu.pipeline_mode<synchronous>, transform_indices = @transform_4, window_bounds = array<i64: 1, 32>}, {transform_indices = @transform_5, window_bounds = array<i64: 1, 256, 32>}]} {
    %c0_i32 = arith.constant 0 : i32
    %0 = arith.cmpi eq, %arg2, %c0_i32 : i32
    %1 = arith.extui %0 : i1 to i32
    %c0_i32_0 = arith.constant 0 : i32
    %2 = arith.cmpi ne, %1, %c0_i32_0 : i32
    scf.if %2 {
      %cst_26 = arith.constant 0xFF800000 : f32
      %35 = vector.broadcast %cst_26 : f32 to vector<256x1xf32>
      %c0_27 = arith.constant 0 : index
      %c0_28 = arith.constant 0 : index
      %36 = vector.load %arg9[%c0_27, %c0_28] : memref<256x1xf32, #tpu.memory_space<vmem>>, vector<256x1xf32>
      tpu.vector_store %arg9[%c0_27, %c0_28], %35 {strides = array<i32>} : memref<256x1xf32, #tpu.memory_space<vmem>>, vector<256x1xf32>,
      %cst_29 = arith.constant 0.000000e+00 : f32
      %37 = vector.broadcast %cst_29 : f32 to vector<256x1xf32>
      %c0_30 = arith.constant 0 : index
      %c0_31 = arith.constant 0 : index
      %38 = vector.load %arg10[%c0_30, %c0_31] : memref<256x1xf32, #tpu.memory_space<vmem>>, vector<256x1xf32>
      tpu.vector_store %arg10[%c0_30, %c0_31], %37 {strides = array<i32>} : memref<256x1xf32, #tpu.memory_space<vmem>>, vector<256x1xf32>,
      %cst_32 = arith.constant 0.000000e+00 : f32
      %39 = vector.broadcast %cst_32 : f32 to vector<256x32xf32>
      %c0_33 = arith.constant 0 : index
      %c0_34 = arith.constant 0 : index
      %40 = vector.load %arg11[%c0_33, %c0_34] : memref<256x32xf32, #tpu.memory_space<vmem>>, vector<256x32xf32>
      tpu.vector_store %arg11[%c0_33, %c0_34], %39 {strides = array<i32>} : memref<256x32xf32, #tpu.memory_space<vmem>>, vector<256x32xf32>,
    } else {
    }
    %c0 = arith.constant 0 : index
    %c0_1 = arith.constant 0 : index
    %c0_2 = arith.constant 0 : index
    %3 = vector.load %arg3[%c0, %c0_1, %c0_2] : memref<1x256x32xf32, #tpu.memory_space<vmem>>, vector<1x256x32xf32>
    %4 = vector.shape_cast %3 : vector<1x256x32xf32> to vector<256x32xf32>
    %c0_3 = arith.constant 0 : index
    %c0_4 = arith.constant 0 : index
    %c0_5 = arith.constant 0 : index
    %5 = vector.load %arg4[%c0_3, %c0_4, %c0_5] : memref<1x256x32xf32, #tpu.memory_space<vmem>>, vector<1x256x32xf32>
    %6 = vector.shape_cast %5 : vector<1x256x32xf32> to vector<256x32xf32>
    %cst = arith.constant dense<0.000000e+00> : vector<256x256xf32>
    %7 = tpu.matmul %4, %6, %cst {dimension_numbers = #tpu.dot_dimension_numbers<[1], [1], [0], [0], [0, 0, 1, 0], [], []>} : vector<256x32xf32>, vector<256x32xf32>, vector<256x256xf32> -> vector<256x256xf32>
    %c0_6 = arith.constant 0 : index
    %c0_7 = arith.constant 0 : index
    %8 = vector.load %arg9[%c0_6, %c0_7] : memref<256x1xf32, #tpu.memory_space<vmem>>, vector<256x1xf32>
    %cst_8 = arith.constant dense<0xFF800000> : vector<256xf32>
    %9 = vector.multi_reduction <maximumf>, %7, %cst_8 [1] : vector<256x256xf32> to vector<256xf32>
    %10 = vector.shape_cast %9 : vector<256xf32> to vector<256x1xf32>
    %11 = arith.maximumf %8, %10 : vector<256x1xf32>
    %12 = arith.subf %8, %11 : vector<256x1xf32>
    %13 = math.exp %12 : vector<256x1xf32>
    %14 = vector.broadcast %11 : vector<256x1xf32> to vector<256x256xf32>
    %15 = arith.subf %7, %14 : vector<256x256xf32>
    %16 = math.exp %15 : vector<256x256xf32>
    %c0_9 = arith.constant 0 : index
    %c0_10 = arith.constant 0 : index
    %17 = vector.load %arg10[%c0_9, %c0_10] : memref<256x1xf32, #tpu.memory_space<vmem>>, vector<256x1xf32>
    %18 = arith.mulf %13, %17 : vector<256x1xf32>
    %cst_11 = arith.constant dense<0.000000e+00> : vector<256xf32>
    %19 = vector.multi_reduction <add>, %16, %cst_11 [1] : vector<256x256xf32> to vector<256xf32>
    %20 = vector.shape_cast %19 : vector<256xf32> to vector<256x1xf32>
    %21 = arith.addf %18, %20 : vector<256x1xf32>
    %c0_12 = arith.constant 0 : index
    %c0_13 = arith.constant 0 : index
    %22 = vector.load %arg10[%c0_12, %c0_13] : memref<256x1xf32, #tpu.memory_space<vmem>>, vector<256x1xf32>
    tpu.vector_store %arg10[%c0_12, %c0_13], %21 {strides = array<i32>} : memref<256x1xf32, #tpu.memory_space<vmem>>, vector<256x1xf32>,
    %c0_14 = arith.constant 0 : index
    %c0_15 = arith.constant 0 : index
    %23 = vector.load %arg9[%c0_14, %c0_15] : memref<256x1xf32, #tpu.memory_space<vmem>>, vector<256x1xf32>
    tpu.vector_store %arg9[%c0_14, %c0_15], %11 {strides = array<i32>} : memref<256x1xf32, #tpu.memory_space<vmem>>, vector<256x1xf32>,
    %c0_16 = arith.constant 0 : index
    %c0_17 = arith.constant 0 : index
    %c0_18 = arith.constant 0 : index
    %24 = vector.load %arg5[%c0_16, %c0_17, %c0_18] : memref<1x256x32xf32, #tpu.memory_space<vmem>>, vector<1x256x32xf32>
    %25 = vector.shape_cast %24 : vector<1x256x32xf32> to vector<256x32xf32>
    %cst_19 = arith.constant dense<0.000000e+00> : vector<256x32xf32>
    %26 = tpu.matmul %16, %25, %cst_19 {dimension_numbers = #tpu.dot_dimension_numbers<[1], [0], [0], [1], [0, 0, 1, 1], [], []>} : vector<256x256xf32>, vector<256x32xf32>, vector<256x32xf32> -> vector<256x32xf32>
    %c0_20 = arith.constant 0 : index
    %c0_21 = arith.constant 0 : index
    %27 = vector.load %arg11[%c0_20, %c0_21] : memref<256x32xf32, #tpu.memory_space<vmem>>, vector<256x32xf32>
    %28 = vector.broadcast %13 : vector<256x1xf32> to vector<256x32xf32>
    %29 = arith.mulf %28, %27 : vector<256x32xf32>
    %30 = arith.addf %29, %26 : vector<256x32xf32>
    %c0_22 = arith.constant 0 : index
    %c0_23 = arith.constant 0 : index
    %31 = vector.load %arg11[%c0_22, %c0_23] : memref<256x32xf32, #tpu.memory_space<vmem>>, vector<256x32xf32>
    tpu.vector_store %arg11[%c0_22, %c0_23], %30 {strides = array<i32>} : memref<256x32xf32, #tpu.memory_space<vmem>>, vector<256x32xf32>,
    %c0_i32_24 = arith.constant 0 : i32
    %32 = arith.cmpi eq, %arg2, %c0_i32_24 : i32
    %33 = arith.extui %32 : i1 to i32
    %c0_i32_25 = arith.constant 0 : i32
    %34 = arith.cmpi ne, %33, %c0_i32_25 : i32
    scf.if %34 {
      %c0_26 = arith.constant 0 : index
      %c0_27 = arith.constant 0 : index
      %35 = vector.load %arg10[%c0_26, %c0_27] : memref<256x1xf32, #tpu.memory_space<vmem>>, vector<256x1xf32>
      %36 = tpu.reciprocal %35 : vector<256x1xf32> -> vector<256x1xf32>
      %c0_28 = arith.constant 0 : index
      %c0_29 = arith.constant 0 : index
      %37 = vector.load %arg11[%c0_28, %c0_29] : memref<256x32xf32, #tpu.memory_space<vmem>>, vector<256x32xf32>
      %38 = vector.broadcast %36 : vector<256x1xf32> to vector<256x32xf32>
      %39 = arith.mulf %37, %38 : vector<256x32xf32>
      %c0_30 = arith.constant 0 : index
      %c0_31 = arith.constant 0 : index
      %40 = vector.load %arg6[%c0_30, %c0_31] : memref<32x32xf32, #tpu.memory_space<vmem>>, vector<32x32xf32>
      %cst_32 = arith.constant dense<0.000000e+00> : vector<256x32xf32>
      %41 = tpu.matmul %39, %40, %cst_32 {dimension_numbers = #tpu.dot_dimension_numbers<[1], [0], [0], [1], [0, 0, 1, 1], [], []>} : vector<256x32xf32>, vector<32x32xf32>, vector<256x32xf32> -> vector<256x32xf32>
      %c0_33 = arith.constant 0 : index
      %c0_34 = arith.constant 0 : index
      %42 = vector.load %arg7[%c0_33, %c0_34] : memref<1x32xf32, #tpu.memory_space<vmem>>, vector<1x32xf32>
      %43 = vector.broadcast %42 : vector<1x32xf32> to vector<256x32xf32>
      %44 = arith.addf %41, %43 : vector<256x32xf32>
      %c0_35 = arith.constant 0 : index
      %c0_36 = arith.constant 0 : index
      %c0_37 = arith.constant 0 : index
      %45 = vector.load %arg8[%c0_35, %c0_36, %c0_37] : memref<1x256x32xf32, #tpu.memory_space<vmem>>, vector<1x256x32xf32>
      %46 = vector.shape_cast %45 : vector<1x256x32xf32> to vector<256x32xf32>
      %47 = vector.shape_cast %44 : vector<256x32xf32> to vector<1x256x32xf32>
      tpu.vector_store %arg8[%c0_35, %c0_36, %c0_37], %47 {strides = array<i32>} : memref<1x256x32xf32, #tpu.memory_space<vmem>>, vector<1x256x32xf32>,
    } else {
    }
    return
  }
  func.func @transform_0(%arg0: i32, %arg1: i32, %arg2: i32) -> (i32, i32, i32) {
    %c0_i32 = arith.constant 0 : i32
    %c0_i32_0 = arith.constant 0 : i32
    return %arg0, %arg1, %c0_i32 : i32, i32, i32
  }
  func.func @transform_1(%arg0: i32, %arg1: i32, %arg2: i32) -> (i32, i32, i32) {
    %c0_i32 = arith.constant 0 : i32
    %c0_i32_0 = arith.constant 0 : i32
    return %arg0, %arg2, %c0_i32 : i32, i32, i32
  }
  func.func @transform_2(%arg0: i32, %arg1: i32, %arg2: i32) -> (i32, i32, i32) {
    %c0_i32 = arith.constant 0 : i32
    %c0_i32_0 = arith.constant 0 : i32
    return %arg0, %arg2, %c0_i32 : i32, i32, i32
  }
  func.func @transform_3(%arg0: i32, %arg1: i32, %arg2: i32) -> (i32, i32) {
    %c0_i32 = arith.constant 0 : i32
    %c0_i32_0 = arith.constant 0 : i32
    %c0_i32_1 = arith.constant 0 : i32
    return %c0_i32, %c0_i32_0 : i32, i32
  }
  func.func @transform_4(%arg0: i32, %arg1: i32, %arg2: i32) -> (i32, i32) {
    %c0_i32 = arith.constant 0 : i32
    %c0_i32_0 = arith.constant 0 : i32
    %c0_i32_1 = arith.constant 0 : i32
    return %c0_i32, %c0_i32_0 : i32, i32
  }
  func.func @transform_5(%arg0: i32, %arg1: i32, %arg2: i32) -> (i32, i32, i32) {
    %c0_i32 = arith.constant 0 : i32
    %c0_i32_0 = arith.constant 0 : i32
    return %arg0, %arg1, %c0_i32 : i32, i32, i32
  }
}

</mosaic_0001>

<llo_original>
// kernel: tpu_custom_call.1
$region0: #{tpu_custom_call.1}
  #allocation0 [shape = 'u32[]', space=smem, size = 0x4, offset = 0x4, fixed_abs, tag = 'smem constant byte address 0x4 - core index']
  #allocation1 [shape = 'u32[144,128]{1,0:T(1,128)}', space=vmem, size = 0x12000, scoped, tag = 'internal scratch']
  #allocation2 [shape = 'f32[256,1]{1,0:T(8,128)}', space=vmem, size = 0x20000, scoped, tag = 'scratch operand']
  #allocation3 [shape = 'f32[256,1]{1,0:T(8,128)}', space=vmem, size = 0x20000, scoped, tag = 'scratch operand']
  #allocation4 [shape = 'f32[256,32]{1,0:T(8,128)}', space=vmem, size = 0x20000, scoped, tag = 'scratch operand']
  %s0 = inlined_call_operand.hbm [shape: f32[2,256,32], index: 0, kind: input, shape index: {}]
  %s1 = inlined_call_operand.hbm [shape: f32[2,256,32], index: 1, kind: input, shape index: {}]
  %s2 = inlined_call_operand.hbm [shape: f32[2,256,32], index: 2, kind: input, shape index: {}]
  %s3 = inlined_call_operand.hbm [shape: f32[32,32], index: 3, kind: input, shape index: {}]
  %s4 = inlined_call_operand.hbm [shape: f32[1,32], index: 4, kind: input, shape index: {}]
  %s5 = inlined_call_operand.hbm [shape: f32[2,256,32], index: 5, kind: output, shape index: {}]
  %s6 = sld [smem:[#allocation0]]
  $region81: #{tpu_custom_call.1} parent=0
    _
  %s8 = ssub.s32 1, %s6
  %s9 = scalar_select 0, %s8, %s6
  $region1: #{tpu_custom_call.1} parent=0
    #allocation5 [shape = 'u8[262144]{0}', space=vmem, size = 0x40000, scoped, tag = 'input window, operand 0']
    #allocation6 [shape = 's32[2]{0}', space=sflag, size = 0x8, scoped, tag = 'scoped memory for tpu_custom_call.1']
    #allocation7 [shape = 's32[2]{0}', space=sflag, size = 0x8, scoped, tag = 'scoped memory for tpu_custom_call.1']
    #allocation8 [shape = 'u8[262144]{0}', space=vmem, size = 0x40000, scoped, tag = 'input window, operand 1']
    #allocation9 [shape = 's32[2]{0}', space=sflag, size = 0x8, scoped, tag = 'scoped memory for tpu_custom_call.1']
    #allocation10 [shape = 'u8[262144]{0}', space=vmem, size = 0x40000, scoped, tag = 'input window, operand 2']
    #allocation11 [shape = 'u8[16384]{0}', space=vmem, size = 0x4000, scoped, tag = 'input window, operand 3, single buffered']
    #allocation12 [shape = 's32[1]{0}', space=sflag, size = 0x4, scoped, tag = 'scoped memory for tpu_custom_call.1']
    #allocation13 [shape = 'u8[512]{0}', space=vmem, size = 0x400, scoped, tag = 'input window, operand 4, single buffered']
    #allocation14 [shape = 'u8[262144]{0}', space=vmem, size = 0x40000, scoped, tag = 'output window, operand 0']
    %10 = vsyncpa [#allocation6], 0
    %s11 = scalar_lea.sflag [#allocation6], 1
    %12 = vsyncpa %s11, 0
    %13 = vsyncpa [#allocation9], 0
    %s14 = scalar_lea.sflag [#allocation9], 1
    %15 = vsyncpa %s14, 0
    %16 = vsyncpa [#allocation12], 0
    %17 = vsyncpa [#allocation7], 0
    %s18 = scalar_lea.sflag [#allocation7], 1
    %19 = vsyncpa %s18, 0
    loop: start=0, step=1, limit=4
    $region2: #{tpu_custom_call.1} parent=1 // loop_pre_header
      _
    $region3: #{tpu_custom_call.1} parent=1 // loop_header
      %s21 = sphi 0, %s25
      %p22 = scmp.ge.s32.totalorder %s21, 4
      %s28 = sphi 0, %s47
      %s29 = sphi 0, %s43
      %s30 = sphi 0, %s39
      %s31 = sphi 0, %s28
      %s32 = sphi 0, %s29
      %s33 = sphi 0, %s30
      %s34 = sphi 0, %s31
      %s35 = sphi 0, %s32
      %s36 = sphi 0, %s33
      %s52 = sphi 0, %s54
      %s55 = sphi 0, %s52
      %s56 = sphi 0, %s55
      %s72 = sphi 0, %s56
      %s80 = sphi 0, %s82
      %s83 = sphi 0, %s80
      %s84 = sphi 0, %s83
      %s100 = sphi 0, %s84
      %s108 = sphi 0, %s110
      %s111 = sphi 0, %s108
      %s112 = sphi 0, %s111
      %s128 = sphi 0, %s112
      %s132 = sphi 0, %s132
      %s134 = sphi 0, %s132
      %s135 = sphi 0, %s134
      %s149 = sphi 0, %s135
      %s153 = sphi 0, %s153
      %s155 = sphi 0, %s153
      %s156 = sphi 0, %s155
      %s170 = sphi 0, %s156
      %s178 = sphi 0, %s180
      %s181 = sphi 0, %s178
      %s182 = sphi 0, %s181
      %s198 = sphi 0, %s182
    $region4: #{tpu_custom_call.1} parent=1 // loop_header_branch
      %24 = sbr.rel (%p22) target = $region8
    $region5: #{tpu_custom_call.1} parent=1 // loop_body
      %s26 = ssub.s32 %s21, 1
      %s27 = ssub.s32 %s21, 2
      %s37 = sadd.s32 1, %s30
      %p38 = scmp.ge.s32.totalorder %s37, 1
      %s39 = scalar_select %p38, 0, %s37
      %s40 = sadd.s32 1, %s29
      %s41 = scalar_select %p38, %s40, %s29
      %p42 = scmp.ge.s32.totalorder %s41, 1
      %s43 = scalar_select %p42, 0, %s41
      %s44 = sadd.s32 1, %s28
      %s45 = scalar_select %p42, %s44, %s28
      %p46 = scmp.ge.s32.totalorder %s45, 2
      %s47 = scalar_select %p46, 0, %s45
      %s48 = ssub.s32 %s28, %s47
      %s49 = ssub.s32 %s29, %s43
      %s50 = sor.u32 %s48, %s49
      %p51 = scmp.eq.s32.totalorder %s50, 0
      %s53 = sadd.s32 %s52, 1
      %s54 = scalar_select %p51, %s52, %s53
      %p57 = pneg %p51
      %p58 = scmp.eq.s32.totalorder %s21, 1
      %p59 = por %p57, %p58
      %p60 = scmp.ne.s32.totalorder %s52, %s55
      %p61 = scmp.eq.s32.totalorder %s21, 0
      %p62 = por %p60, %p61
      %p63 = scmp.ne.s32.totalorder %s52, %s55
      %p64 = scmp.eq.s32.totalorder %s26, 1
      %p65 = por %p63, %p64
      %p66 = scmp.ne.s32.totalorder %s55, %s56
      %p67 = scmp.eq.s32.totalorder %s26, 0
      %p68 = por %p66, %p67
      %p69 = scmp.ne.s32.totalorder %s55, %s56
      %p70 = scmp.eq.s32.totalorder %s27, 1
      %p71 = por %p69, %p70
      %p73 = scmp.ne.s32.totalorder %s56, %s72
      %p74 = scmp.eq.s32.totalorder %s27, 0
      %p75 = por %p73, %p74
      %s76 = ssub.s32 %s28, %s47
      %s77 = ssub.s32 %s30, %s39
      %s78 = sor.u32 %s76, %s77
      %p79 = scmp.eq.s32.totalorder %s78, 0
      %s81 = sadd.s32 %s80, 1
      %s82 = scalar_select %p79, %s80, %s81
      %p85 = pneg %p79
      %p86 = scmp.eq.s32.totalorder %s21, 1
      %p87 = por %p85, %p86
      %p88 = scmp.ne.s32.totalorder %s80, %s83
      %p89 = scmp.eq.s32.totalorder %s21, 0
      %p90 = por %p88, %p89
      %p91 = scmp.ne.s32.totalorder %s80, %s83
      %p92 = scmp.eq.s32.totalorder %s26, 1
      %p93 = por %p91, %p92
      %p94 = scmp.ne.s32.totalorder %s83, %s84
      %p95 = scmp.eq.s32.totalorder %s26, 0
      %p96 = por %p94, %p95
      %p97 = scmp.ne.s32.totalorder %s83, %s84
      %p98 = scmp.eq.s32.totalorder %s27, 1
      %p99 = por %p97, %p98
      %p101 = scmp.ne.s32.totalorder %s84, %s100
      %p102 = scmp.eq.s32.totalorder %s27, 0
      %p103 = por %p101, %p102
      %s104 = ssub.s32 %s28, %s47
      %s105 = ssub.s32 %s30, %s39
      %s106 = sor.u32 %s104, %s105
      %p107 = scmp.eq.s32.totalorder %s106, 0
      %s109 = sadd.s32 %s108, 1
      %s110 = scalar_select %p107, %s108, %s109
      %p113 = pneg %p107
      %p114 = scmp.eq.s32.totalorder %s21, 1
      %p115 = por %p113, %p114
      %p116 = scmp.ne.s32.totalorder %s108, %s111
      %p117 = scmp.eq.s32.totalorder %s21, 0
      %p118 = por %p116, %p117
      %p119 = scmp.ne.s32.totalorder %s108, %s111
      %p120 = scmp.eq.s32.totalorder %s26, 1
      %p121 = por %p119, %p120
      %p122 = scmp.ne.s32.totalorder %s111, %s112
      %p123 = scmp.eq.s32.totalorder %s26, 0
      %p124 = por %p122, %p123
      %p125 = scmp.ne.s32.totalorder %s111, %s112
      %p126 = scmp.eq.s32.totalorder %s27, 1
      %p127 = por %p125, %p126
      %p129 = scmp.ne.s32.totalorder %s112, %s128
      %p130 = scmp.eq.s32.totalorder %s27, 0
      %p131 = por %p129, %p130
      %s133 = sadd.s32 %s132, 1
      %p136 = scmp.eq.s32.totalorder %s21, 1
      %p137 = scmp.ne.s32.totalorder %s132, %s134
      %p138 = scmp.eq.s32.totalorder %s21, 0
      %p139 = por %p137, %p138
      %p140 = scmp.ne.s32.totalorder %s132, %s134
      %p141 = scmp.eq.s32.totalorder %s26, 1
      %p142 = por %p140, %p141
      %p143 = scmp.ne.s32.totalorder %s134, %s135
      %p144 = scmp.eq.s32.totalorder %s26, 0
      %p145 = por %p143, %p144
      %p146 = scmp.ne.s32.totalorder %s134, %s135
      %p147 = scmp.eq.s32.totalorder %s27, 1
      %p148 = por %p146, %p147
      %p150 = scmp.ne.s32.totalorder %s135, %s149
      %p151 = scmp.eq.s32.totalorder %s27, 0
      %p152 = por %p150, %p151
      %s154 = sadd.s32 %s153, 1
      %p157 = scmp.eq.s32.totalorder %s21, 1
      %p158 = scmp.ne.s32.totalorder %s153, %s155
      %p159 = scmp.eq.s32.totalorder %s21, 0
      %p160 = por %p158, %p159
      %p161 = scmp.ne.s32.totalorder %s153, %s155
      %p162 = scmp.eq.s32.totalorder %s26, 1
      %p163 = por %p161, %p162
      %p164 = scmp.ne.s32.totalorder %s155, %s156
      %p165 = scmp.eq.s32.totalorder %s26, 0
      %p166 = por %p164, %p165
      %p167 = scmp.ne.s32.totalorder %s155, %s156
      %p168 = scmp.eq.s32.totalorder %s27, 1
      %p169 = por %p167, %p168
      %p171 = scmp.ne.s32.totalorder %s156, %s170
      %p172 = scmp.eq.s32.totalorder %s27, 0
      %p173 = por %p171, %p172
      %s174 = ssub.s32 %s28, %s47
      %s175 = ssub.s32 %s29, %s43
      %s176 = sor.u32 %s174, %s175
      %p177 = scmp.eq.s32.totalorder %s176, 0
      %s179 = sadd.s32 %s178, 1
      %s180 = scalar_select %p177, %s178, %s179
      %p183 = pneg %p177
      %p184 = scmp.eq.s32.totalorder %s21, 1
      %p185 = por %p183, %p184
      %p186 = scmp.ne.s32.totalorder %s178, %s181
      %p187 = scmp.eq.s32.totalorder %s21, 0
      %p188 = por %p186, %p187
      %p189 = scmp.ne.s32.totalorder %s178, %s181
      %p190 = scmp.eq.s32.totalorder %s26, 1
      %p191 = por %p189, %p190
      %p192 = scmp.ne.s32.totalorder %s181, %s182
      %p193 = scmp.eq.s32.totalorder %s26, 0
      %p194 = por %p192, %p193
      %p195 = scmp.ne.s32.totalorder %s181, %s182
      %p196 = scmp.eq.s32.totalorder %s27, 1
      %p197 = por %p195, %p196
      %p199 = scmp.ne.s32.totalorder %s182, %s198
      %p200 = scmp.eq.s32.totalorder %s27, 0
      %p201 = por %p199, %p200
      %p202 = scmp.le.s32.totalorder 1, %s21
      %p203 = scmp.lt.s32.totalorder %s21, 3
      %p204 = pnand %p202, %p203
      %p205 = pneg %p204
      // Predicated region
      $region9: #{tpu_custom_call.1} parent=5 // pred_check
        _
      $region10: #{tpu_custom_call.1} parent=5 // pred_check_branch
        %207 = sbr.rel (%p204) target = $region12
      $region11: #{tpu_custom_call.1} parent=5 // pred_region
        %s208 = ssub.s32 %s21, 1
        // Predicated region
        $region13: #{tpu_custom_call.1} parent=11 // pred_check
          %p209 = pneg %p145
        $region14: #{tpu_custom_call.1} parent=11 // pred_check_branch
          %211 = sbr.rel (%p209) target = $region16
        $region15: #{tpu_custom_call.1} parent=11 // pred_region
          %s213 = ssub.s32 512, 512
          %214 = vsyncadd [#allocation12], %s213
          %s215 = sshll.u32 [#allocation11], 4
          %s216 = int_to_ptr.vmem [resolvable:$true] %s215
          %221 = dma.hbm_to_vmem [thread:$0]  %s3, 512, %s216, [#allocation12], 128, 128, 8
        $region16: #{tpu_custom_call.1} parent=11 // pred_fallthru
          _
        // Predicated region
        $region17: #{tpu_custom_call.1} parent=11 // pred_check
          %p222 = pneg %p166
        $region18: #{tpu_custom_call.1} parent=11 // pred_check_branch
          %224 = sbr.rel (%p222) target = $region20
        $region19: #{tpu_custom_call.1} parent=11 // pred_region
          %s226 = ssub.s32 16, 16
          %227 = vsyncadd [#allocation12], %s226
          %s229 = sshll.u32 [#allocation13], 4
          %s230 = int_to_ptr.vmem [resolvable:$true] %s229
          %232 = dma.hbm_to_vmem [thread:$0]  %s4, 16, %s230, [#allocation12]
        $region20: #{tpu_custom_call.1} parent=11 // pred_fallthru
          _
      $region12: #{tpu_custom_call.1} parent=5 // pred_fallthru
        _
      %p233 = scmp.lt.s32.totalorder %s21, 2
      // Predicated region
      $region21: #{tpu_custom_call.1} parent=5 // pred_check
        %p234 = pneg %p233
      $region22: #{tpu_custom_call.1} parent=5 // pred_check_branch
        %236 = sbr.rel (%p234) target = $region24
      $region23: #{tpu_custom_call.1} parent=5 // pred_region
        // Predicated region
        $region25: #{tpu_custom_call.1} parent=23 // pred_check
          %p237 = pneg %p62
        $region26: #{tpu_custom_call.1} parent=23 // pred_check_branch
          %239 = sbr.rel (%p237) target = $region28
        $region27: #{tpu_custom_call.1} parent=23 // pred_region
          %s240 = sand.u32 %s52, 1
          %s241 = scalar_lea.sflag [#allocation6], %s240
          %s242 = sand.u32 %s52, 1
          %s243 = smul.addr %s242, 256
          %s244 = scalar_lea.vmem [#allocation5], %s243
          %s245 = smul.u32 32, %s29
          %s247 = ssub.s32 4096, 4096
          %248 = vsyncadd %s241, %s247
          %s249 = smul.addr %s28, 32
          %s250 = sadd.s32 %s245, %s249
          %s251 = smul.addr %s250, 128
          %s252 = scalar_lea.hbm %s0, %s251
          %s253 = sshll.u32 %s244, 4
          %s254 = int_to_ptr.vmem [resolvable:$true] %s253
          %259 = dma.hbm_to_vmem [thread:$0]  %s252, 4096, %s254, %s241, 128, 128, 8
        $region28: #{tpu_custom_call.1} parent=23 // pred_fallthru
          _
        // Predicated region
        $region29: #{tpu_custom_call.1} parent=23 // pred_check
          %p260 = pneg %p90
        $region30: #{tpu_custom_call.1} parent=23 // pred_check_branch
          %262 = sbr.rel (%p260) target = $region32
        $region31: #{tpu_custom_call.1} parent=23 // pred_region
          %s263 = sand.u32 %s21, 1
          %s264 = scalar_lea.sflag [#allocation9], %s263
          %s265 = sand.u32 %s80, 1
          %s266 = smul.addr %s265, 256
          %s267 = scalar_lea.vmem [#allocation8], %s266
          %s268 = smul.u32 32, %s30
          %s270 = ssub.s32 4096, 4096
          %271 = vsyncadd %s264, %s270
          %s272 = smul.addr %s28, 32
          %s273 = sadd.s32 %s268, %s272
          %s274 = smul.addr %s273, 128
          %s275 = scalar_lea.hbm %s1, %s274
          %s276 = sshll.u32 %s267, 4
          %s277 = int_to_ptr.vmem [resolvable:$true] %s276
          %282 = dma.hbm_to_vmem [thread:$0]  %s275, 4096, %s277, %s264, 128, 128, 8
        $region32: #{tpu_custom_call.1} parent=23 // pred_fallthru
          _
        // Predicated region
        $region33: #{tpu_custom_call.1} parent=23 // pred_check
          %p283 = pneg %p118
        $region34: #{tpu_custom_call.1} parent=23 // pred_check_branch
          %285 = sbr.rel (%p283) target = $region36
        $region35: #{tpu_custom_call.1} parent=23 // pred_region
          %s286 = sand.u32 %s21, 1
          %s287 = scalar_lea.sflag [#allocation9], %s286
          %s288 = sand.u32 %s108, 1
          %s289 = smul.addr %s288, 256
          %s290 = scalar_lea.vmem [#allocation10], %s289
          %s291 = smul.u32 32, %s30
          %s293 = ssub.s32 4096, 4096
          %294 = vsyncadd %s287, %s293
          %s295 = smul.addr %s28, 32
          %s296 = sadd.s32 %s291, %s295
          %s297 = smul.addr %s296, 128
          %s298 = scalar_lea.hbm %s2, %s297
          %s299 = sshll.u32 %s290, 4
          %s300 = int_to_ptr.vmem [resolvable:$true] %s299
          %305 = dma.hbm_to_vmem [thread:$0]  %s298, 4096, %s300, %s287, 128, 128, 8
        $region36: #{tpu_custom_call.1} parent=23 // pred_fallthru
          _
      $region24: #{tpu_custom_call.1} parent=5 // pred_fallthru
        _
      %p306 = scmp.le.s32.totalorder 1, %s21
      %p307 = scmp.lt.s32.totalorder %s21, 3
      %p308 = pnand %p306, %p307
      %p309 = pneg %p308
      // Predicated region
      $region37: #{tpu_custom_call.1} parent=5 // pred_check
        _
      $region38: #{tpu_custom_call.1} parent=5 // pred_check_branch
        %311 = sbr.rel (%p308) target = $region40
      $region39: #{tpu_custom_call.1} parent=5 // pred_region
        %s312 = ssub.s32 %s21, 1
        %s313 = sand.u32 %s55, 1
        %s314 = scalar_lea.sflag [#allocation6], %s313
        %s315 = sand.u32 %s55, 1
        %s316 = smul.addr %s315, 256
        %s317 = scalar_lea.vmem [#allocation5], %s316
        // Predicated region
        $region41: #{tpu_custom_call.1} parent=39 // pred_check
          %p318 = pneg %p68
        $region42: #{tpu_custom_call.1} parent=39 // pred_check_branch
          %320 = sbr.rel (%p318) target = $region44
        $region43: #{tpu_custom_call.1} parent=39 // pred_region
          %321 = dma.done %s314, 4096
        $region44: #{tpu_custom_call.1} parent=39 // pred_fallthru
          _
        %s322 = sand.u32 %s26, 1
        %s323 = scalar_lea.sflag [#allocation9], %s322
        %s324 = sand.u32 %s83, 1
        %s325 = smul.addr %s324, 256
        %s326 = scalar_lea.vmem [#allocation8], %s325
        // Predicated region
        $region45: #{tpu_custom_call.1} parent=39 // pred_check
          %p327 = pneg %p96
        $region46: #{tpu_custom_call.1} parent=39 // pred_check_branch
          %329 = sbr.rel (%p327) target = $region48
        $region47: #{tpu_custom_call.1} parent=39 // pred_region
          %330 = dma.done %s323, 4096
        $region48: #{tpu_custom_call.1} parent=39 // pred_fallthru
          _
        %s331 = sand.u32 %s26, 1
        %s332 = scalar_lea.sflag [#allocation9], %s331
        %s333 = sand.u32 %s111, 1
        %s334 = smul.addr %s333, 256
        %s335 = scalar_lea.vmem [#allocation10], %s334
        // Predicated region
        $region49: #{tpu_custom_call.1} parent=39 // pred_check
          %p336 = pneg %p124
        $region50: #{tpu_custom_call.1} parent=39 // pred_check_branch
          %338 = sbr.rel (%p336) target = $region52
        $region51: #{tpu_custom_call.1} parent=39 // pred_region
          %339 = dma.done %s332, 4096
        $region52: #{tpu_custom_call.1} parent=39 // pred_fallthru
          _
        // Predicated region
        $region53: #{tpu_custom_call.1} parent=39 // pred_check
          %p340 = pneg %p145
        $region54: #{tpu_custom_call.1} parent=39 // pred_check_branch
          %342 = sbr.rel (%p340) target = $region56
        $region55: #{tpu_custom_call.1} parent=39 // pred_region
          %343 = dma.done [#allocation12], 512
        $region56: #{tpu_custom_call.1} parent=39 // pred_fallthru
          _
        // Predicated region
        $region57: #{tpu_custom_call.1} parent=39 // pred_check
          %p344 = pneg %p166
        $region58: #{tpu_custom_call.1} parent=39 // pred_check_branch
          %346 = sbr.rel (%p344) target = $region60
        $region59: #{tpu_custom_call.1} parent=39 // pred_region
          %347 = dma.done [#allocation12], 16
        $region60: #{tpu_custom_call.1} parent=39 // pred_fallthru
          _
        %s348 = sand.u32 %s55, 1
        %s349 = scalar_lea.sflag [#allocation6], %s348
        %s350 = sand.u32 %s55, 1
        %s351 = smul.addr %s350, 256
        %s352 = scalar_lea.vmem [#allocation5], %s351
        %p353 = pneg %p68
        %p354 = pneg %p65
        %s355 = sand.u32 %s26, 1
        %s356 = scalar_lea.sflag [#allocation9], %s355
        %s357 = sand.u32 %s83, 1
        %s358 = smul.addr %s357, 256
        %s359 = scalar_lea.vmem [#allocation8], %s358
        %p360 = pneg %p96
        %p361 = pneg %p93
        %s362 = sand.u32 %s26, 1
        %s363 = scalar_lea.sflag [#allocation9], %s362
        %s364 = sand.u32 %s111, 1
        %s365 = smul.addr %s364, 256
        %s366 = scalar_lea.vmem [#allocation10], %s365
        %p367 = pneg %p124
        %p368 = pneg %p121
        %p369 = pneg %p145
        %p370 = pneg %p142
        %p371 = pneg %p166
        %p372 = pneg %p163
        %p373 = pneg %p194
        %p374 = pneg %p191
        %s375 = sand.u32 %s181, 1
        %s376 = scalar_lea.sflag [#allocation7], %s375
        %s377 = sand.u32 %s181, 1
        %s378 = smul.addr %s377, 256
        %s379 = scalar_lea.vmem [#allocation14], %s378
        %s380 = smul.u32 32, %s32
        %s381 = smul.u32 32, %s33
        %s382 = smul.u32 32, %s33
        %s383 = smul.u32 32, %s32
        %p384 = scmp.eq.s32.totalorder %s33, 0
        // Predicated region
        $region61: #{tpu_custom_call.1} parent=39 // pred_check
          %p385 = pneg %p384
        $region62: #{tpu_custom_call.1} parent=39 // pred_check_branch
          %387 = sbr.rel (%p385) target = $region64
        $region63: #{tpu_custom_call.1} parent=39 // pred_region
          %vm388 = vcmask 7168
          %389 = vst.msk [vmem:[#allocation2] sm:$0xff] %vm388, -inf
          %390 = vst.msk [vmem:[#allocation2 + $0x8] sm:$0xff] %vm388, -inf
          %391 = vst.msk [vmem:[#allocation2 + $0x10] sm:$0xff] %vm388, -inf
          %392 = vst.msk [vmem:[#allocation2 + $0x18] sm:$0xff] %vm388, -inf
          %393 = vst.msk [vmem:[#allocation2 + $0x20] sm:$0xff] %vm388, -inf
          %394 = vst.msk [vmem:[#allocation2 + $0x28] sm:$0xff] %vm388, -inf
          %395 = vst.msk [vmem:[#allocation2 + $0x30] sm:$0xff] %vm388, -inf
          %396 = vst.msk [vmem:[#allocation2 + $0x38] sm:$0xff] %vm388, -inf
          %397 = vst.msk [vmem:[#allocation2 + $0x40] sm:$0xff] %vm388, -inf
          %398 = vst.msk [vmem:[#allocation2 + $0x48] sm:$0xff] %vm388, -inf
          %399 = vst.msk [vmem:[#allocation2 + $0x50] sm:$0xff] %vm388, -inf
          %400 = vst.msk [vmem:[#allocation2 + $0x58] sm:$0xff] %vm388, -inf
          %401 = vst.msk [vmem:[#allocation2 + $0x60] sm:$0xff] %vm388, -inf
          %402 = vst.msk [vmem:[#allocation2 + $0x68] sm:$0xff] %vm388, -inf
          %403 = vst.msk [vmem:[#allocation2 + $0x70] sm:$0xff] %vm388, -inf
          %404 = vst.msk [vmem:[#allocation2 + $0x78] sm:$0xff] %vm388, -inf
          %405 = vst.msk [vmem:[#allocation2 + $0x80] sm:$0xff] %vm388, -inf
          %406 = vst.msk [vmem:[#allocation2 + $0x88] sm:$0xff] %vm388, -inf
          %407 = vst.msk [vmem:[#allocation2 + $0x90] sm:$0xff] %vm388, -inf
          %408 = vst.msk [vmem:[#allocation2 + $0x98] sm:$0xff] %vm388, -inf
          %409 = vst.msk [vmem:[#allocation2 + $0xa0] sm:$0xff] %vm388, -inf
          %410 = vst.msk [vmem:[#allocation2 + $0xa8] sm:$0xff] %vm388, -inf
          %411 = vst.msk [vmem:[#allocation2 + $0xb0] sm:$0xff] %vm388, -inf
          %412 = vst.msk [vmem:[#allocation2 + $0xb8] sm:$0xff] %vm388, -inf
          %413 = vst.msk [vmem:[#allocation2 + $0xc0] sm:$0xff] %vm388, -inf
          %414 = vst.msk [vmem:[#allocation2 + $0xc8] sm:$0xff] %vm388, -inf
          %415 = vst.msk [vmem:[#allocation2 + $0xd0] sm:$0xff] %vm388, -inf
          %416 = vst.msk [vmem:[#allocation2 + $0xd8] sm:$0xff] %vm388, -inf
          %417 = vst.msk [vmem:[#allocation2 + $0xe0] sm:$0xff] %vm388, -inf
          %418 = vst.msk [vmem:[#allocation2 + $0xe8] sm:$0xff] %vm388, -inf
          %419 = vst.msk [vmem:[#allocation2 + $0xf0] sm:$0xff] %vm388, -inf
          %420 = vst.msk [vmem:[#allocation2 + $0xf8] sm:$0xff] %vm388, -inf
          %421 = vst.msk [vmem:[#allocation3] sm:$0xff] %vm388, 0.0
          %422 = vst.msk [vmem:[#allocation3 + $0x8] sm:$0xff] %vm388, 0.0
          %423 = vst.msk [vmem:[#allocation3 + $0x10] sm:$0xff] %vm388, 0.0
          %424 = vst.msk [vmem:[#allocation3 + $0x18] sm:$0xff] %vm388, 0.0
          %425 = vst.msk [vmem:[#allocation3 + $0x20] sm:$0xff] %vm388, 0.0
          %426 = vst.msk [vmem:[#allocation3 + $0x28] sm:$0xff] %vm388, 0.0
          %427 = vst.msk [vmem:[#allocation3 + $0x30] sm:$0xff] %vm388, 0.0
          %428 = vst.msk [vmem:[#allocation3 + $0x38] sm:$0xff] %vm388, 0.0
          %429 = vst.msk [vmem:[#allocation3 + $0x40] sm:$0xff] %vm388, 0.0
          %430 = vst.msk [vmem:[#allocation3 + $0x48] sm:$0xff] %vm388, 0.0
          %431 = vst.msk [vmem:[#allocation3 + $0x50] sm:$0xff] %vm388, 0.0
          %432 = vst.msk [vmem:[#allocation3 + $0x58] sm:$0xff] %vm388, 0.0
          %433 = vst.msk [vmem:[#allocation3 + $0x60] sm:$0xff] %vm388, 0.0
          %434 = vst.msk [vmem:[#allocation3 + $0x68] sm:$0xff] %vm388, 0.0
          %435 = vst.msk [vmem:[#allocation3 + $0x70] sm:$0xff] %vm388, 0.0
          %436 = vst.msk [vmem:[#allocation3 + $0x78] sm:$0xff] %vm388, 0.0
          %437 = vst.msk [vmem:[#allocation3 + $0x80] sm:$0xff] %vm388, 0.0
          %438 = vst.msk [vmem:[#allocation3 + $0x88] sm:$0xff] %vm388, 0.0
          %439 = vst.msk [vmem:[#allocation3 + $0x90] sm:$0xff] %vm388, 0.0
          %440 = vst.msk [vmem:[#allocation3 + $0x98] sm:$0xff] %vm388, 0.0
          %441 = vst.msk [vmem:[#allocation3 + $0xa0] sm:$0xff] %vm388, 0.0
          %442 = vst.msk [vmem:[#allocation3 + $0xa8] sm:$0xff] %vm388, 0.0
          %443 = vst.msk [vmem:[#allocation3 + $0xb0] sm:$0xff] %vm388, 0.0
          %444 = vst.msk [vmem:[#allocation3 + $0xb8] sm:$0xff] %vm388, 0.0
          %445 = vst.msk [vmem:[#allocation3 + $0xc0] sm:$0xff] %vm388, 0.0
          %446 = vst.msk [vmem:[#allocation3 + $0xc8] sm:$0xff] %vm388, 0.0
          %447 = vst.msk [vmem:[#allocation3 + $0xd0] sm:$0xff] %vm388, 0.0
          %448 = vst.msk [vmem:[#allocation3 + $0xd8] sm:$0xff] %vm388, 0.0
          %449 = vst.msk [vmem:[#allocation3 + $0xe0] sm:$0xff] %vm388, 0.0
          %450 = vst.msk [vmem:[#allocation3 + $0xe8] sm:$0xff] %vm388, 0.0
          %451 = vst.msk [vmem:[#allocation3 + $0xf0] sm:$0xff] %vm388, 0.0
          %452 = vst.msk [vmem:[#allocation3 + $0xf8] sm:$0xff] %vm388, 0.0
          %vm453 = vcmask 261120
          %454 = vst.msk [vmem:[#allocation4] sm:$0xff] %vm453, 0.0
          %455 = vst.msk [vmem:[#allocation4 + $0x8] sm:$0xff] %vm453, 0.0
          %456 = vst.msk [vmem:[#allocation4 + $0x10] sm:$0xff] %vm453, 0.0
          %457 = vst.msk [vmem:[#allocation4 + $0x18] sm:$0xff] %vm453, 0.0
          %458 = vst.msk [vmem:[#allocation4 + $0x20] sm:$0xff] %vm453, 0.0
          %459 = vst.msk [vmem:[#allocation4 + $0x28] sm:$0xff] %vm453, 0.0
          %460 = vst.msk [vmem:[#allocation4 + $0x30] sm:$0xff] %vm453, 0.0
          %461 = vst.msk [vmem:[#allocation4 + $0x38] sm:$0xff] %vm453, 0.0
          %462 = vst.msk [vmem:[#allocation4 + $0x40] sm:$0xff] %vm453, 0.0
          %463 = vst.msk [vmem:[#allocation4 + $0x48] sm:$0xff] %vm453, 0.0
          %464 = vst.msk [vmem:[#allocation4 + $0x50] sm:$0xff] %vm453, 0.0
          %465 = vst.msk [vmem:[#allocation4 + $0x58] sm:$0xff] %vm453, 0.0
          %466 = vst.msk [vmem:[#allocation4 + $0x60] sm:$0xff] %vm453, 0.0
          %467 = vst.msk [vmem:[#allocation4 + $0x68] sm:$0xff] %vm453, 0.0
          %468 = vst.msk [vmem:[#allocation4 + $0x70] sm:$0xff] %vm453, 0.0
          %469 = vst.msk [vmem:[#allocation4 + $0x78] sm:$0xff] %vm453, 0.0
          %470 = vst.msk [vmem:[#allocation4 + $0x80] sm:$0xff] %vm453, 0.0
          %471 = vst.msk [vmem:[#allocation4 + $0x88] sm:$0xff] %vm453, 0.0
          %472 = vst.msk [vmem:[#allocation4 + $0x90] sm:$0xff] %vm453, 0.0
          %473 = vst.msk [vmem:[#allocation4 + $0x98] sm:$0xff] %vm453, 0.0
          %474 = vst.msk [vmem:[#allocation4 + $0xa0] sm:$0xff] %vm453, 0.0
          %475 = vst.msk [vmem:[#allocation4 + $0xa8] sm:$0xff] %vm453, 0.0
          %476 = vst.msk [vmem:[#allocation4 + $0xb0] sm:$0xff] %vm453, 0.0
          %477 = vst.msk [vmem:[#allocation4 + $0xb8] sm:$0xff] %vm453, 0.0
          %478 = vst.msk [vmem:[#allocation4 + $0xc0] sm:$0xff] %vm453, 0.0
          %479 = vst.msk [vmem:[#allocation4 + $0xc8] sm:$0xff] %vm453, 0.0
          %480 = vst.msk [vmem:[#allocation4 + $0xd0] sm:$0xff] %vm453, 0.0
          %481 = vst.msk [vmem:[#allocation4 + $0xd8] sm:$0xff] %vm453, 0.0
          %482 = vst.msk [vmem:[#allocation4 + $0xe0] sm:$0xff] %vm453, 0.0
          %483 = vst.msk [vmem:[#allocation4 + $0xe8] sm:$0xff] %vm453, 0.0
          %484 = vst.msk [vmem:[#allocation4 + $0xf0] sm:$0xff] %vm453, 0.0
          %485 = vst.msk [vmem:[#allocation4 + $0xf8] sm:$0xff] %vm453, 0.0
        $region64: #{tpu_custom_call.1} parent=39 // pred_fallthru
          _
        %v486 = vld [vmem:[%s317] sm:$0xff]
        %v487 = vld [vmem:[%s317 + $0x8] sm:$0xff]
        %v488 = vld [vmem:[%s317 + $0x10] sm:$0xff]
        %v489 = vld [vmem:[%s317 + $0x18] sm:$0xff]
        %v490 = vld [vmem:[%s317 + $0x20] sm:$0xff]
        %v491 = vld [vmem:[%s317 + $0x28] sm:$0xff]
        %v492 = vld [vmem:[%s317 + $0x30] sm:$0xff]
        %v493 = vld [vmem:[%s317 + $0x38] sm:$0xff]
        %v494 = vld [vmem:[%s317 + $0x40] sm:$0xff]
        %v495 = vld [vmem:[%s317 + $0x48] sm:$0xff]
        %v496 = vld [vmem:[%s317 + $0x50] sm:$0xff]
        %v497 = vld [vmem:[%s317 + $0x58] sm:$0xff]
        %v498 = vld [vmem:[%s317 + $0x60] sm:$0xff]
        %v499 = vld [vmem:[%s317 + $0x68] sm:$0xff]
        %v500 = vld [vmem:[%s317 + $0x70] sm:$0xff]
        %v501 = vld [vmem:[%s317 + $0x78] sm:$0xff]
        %v502 = vld [vmem:[%s317 + $0x80] sm:$0xff]
        %v503 = vld [vmem:[%s317 + $0x88] sm:$0xff]
        %v504 = vld [vmem:[%s317 + $0x90] sm:$0xff]
        %v505 = vld [vmem:[%s317 + $0x98] sm:$0xff]
        %v506 = vld [vmem:[%s317 + $0xa0] sm:$0xff]
        %v507 = vld [vmem:[%s317 + $0xa8] sm:$0xff]
        %v508 = vld [vmem:[%s317 + $0xb0] sm:$0xff]
        %v509 = vld [vmem:[%s317 + $0xb8] sm:$0xff]
        %v510 = vld [vmem:[%s317 + $0xc0] sm:$0xff]
        %v511 = vld [vmem:[%s317 + $0xc8] sm:$0xff]
        %v512 = vld [vmem:[%s317 + $0xd0] sm:$0xff]
        %v513 = vld [vmem:[%s317 + $0xd8] sm:$0xff]
        %v514 = vld [vmem:[%s317 + $0xe0] sm:$0xff]
        %v515 = vld [vmem:[%s317 + $0xe8] sm:$0xff]
        %v516 = vld [vmem:[%s317 + $0xf0] sm:$0xff]
        %v517 = vld [vmem:[%s317 + $0xf8] sm:$0xff]
        %v518 = vld [vmem:[%s326] sm:$0xff]
        %v519 = vld [vmem:[%s326 + $0x8] sm:$0xff]
        %v520 = vld [vmem:[%s326 + $0x10] sm:$0xff]
        %v521 = vld [vmem:[%s326 + $0x18] sm:$0xff]
        %v522 = vld [vmem:[%s326 + $0x20] sm:$0xff]
        %v523 = vld [vmem:[%s326 + $0x28] sm:$0xff]
        %v524 = vld [vmem:[%s326 + $0x30] sm:$0xff]
        %v525 = vld [vmem:[%s326 + $0x38] sm:$0xff]
        %v526 = vld [vmem:[%s326 + $0x40] sm:$0xff]
        %v527 = vld [vmem:[%s326 + $0x48] sm:$0xff]
        %v528 = vld [vmem:[%s326 + $0x50] sm:$0xff]
        %v529 = vld [vmem:[%s326 + $0x58] sm:$0xff]
        %v530 = vld [vmem:[%s326 + $0x60] sm:$0xff]
        %v531 = vld [vmem:[%s326 + $0x68] sm:$0xff]
        %v532 = vld [vmem:[%s326 + $0x70] sm:$0xff]
        %v533 = vld [vmem:[%s326 + $0x78] sm:$0xff]
        %v534 = vld [vmem:[%s326 + $0x80] sm:$0xff]
        %v535 = vld [vmem:[%s326 + $0x88] sm:$0xff]
        %v536 = vld [vmem:[%s326 + $0x90] sm:$0xff]
        %v537 = vld [vmem:[%s326 + $0x98] sm:$0xff]
        %v538 = vld [vmem:[%s326 + $0xa0] sm:$0xff]
        %v539 = vld [vmem:[%s326 + $0xa8] sm:$0xff]
        %v540 = vld [vmem:[%s326 + $0xb0] sm:$0xff]
        %v541 = vld [vmem:[%s326 + $0xb8] sm:$0xff]
        %v542 = vld [vmem:[%s326 + $0xc0] sm:$0xff]
        %v543 = vld [vmem:[%s326 + $0xc8] sm:$0xff]
        %v544 = vld [vmem:[%s326 + $0xd0] sm:$0xff]
        %v545 = vld [vmem:[%s326 + $0xd8] sm:$0xff]
        %v546 = vld [vmem:[%s326 + $0xe0] sm:$0xff]
        %v547 = vld [vmem:[%s326 + $0xe8] sm:$0xff]
        %v548 = vld [vmem:[%s326 + $0xf0] sm:$0xff]
        %v549 = vld [vmem:[%s326 + $0xf8] sm:$0xff]
        %vm550 = vcmask 261120
        %v552 = vsel %vm550, %v486, 0
        %v555 = vsel %vm550, %v487, 0
        %v558 = vsel %vm550, %v488, 0
        %v561 = vsel %vm550, %v489, 0
        %v564 = vsel %vm550, %v490, 0
        %v567 = vsel %vm550, %v491, 0
        %v570 = vsel %vm550, %v492, 0
        %v573 = vsel %vm550, %v493, 0
        %v576 = vsel %vm550, %v494, 0
        %v579 = vsel %vm550, %v495, 0
        %v582 = vsel %vm550, %v496, 0
        %v585 = vsel %vm550, %v497, 0
        %v588 = vsel %vm550, %v498, 0
        %v591 = vsel %vm550, %v499, 0
        %v594 = vsel %vm550, %v500, 0
        %v597 = vsel %vm550, %v501, 0
        %v600 = vsel %vm550, %v502, 0
        %v603 = vsel %vm550, %v503, 0
        %v606 = vsel %vm550, %v504, 0
        %v609 = vsel %vm550, %v505, 0
        %v612 = vsel %vm550, %v506, 0
        %v615 = vsel %vm550, %v507, 0
        %v618 = vsel %vm550, %v508, 0
        %v621 = vsel %vm550, %v509, 0
        %v624 = vsel %vm550, %v510, 0
        %v627 = vsel %vm550, %v511, 0
        %v630 = vsel %vm550, %v512, 0
        %v633 = vsel %vm550, %v513, 0
        %v636 = vsel %vm550, %v514, 0
        %v639 = vsel %vm550, %v515, 0
        %v642 = vsel %vm550, %v516, 0
        %v645 = vsel %vm550, %v517, 0
        %v648 = vsel %vm550, %v518, 0
        %v651 = vsel %vm550, %v519, 0
        %v654 = vsel %vm550, %v520, 0
        %v657 = vsel %vm550, %v521, 0
        %v660 = vsel %vm550, %v522, 0
        %v663 = vsel %vm550, %v523, 0
        %v666 = vsel %vm550, %v524, 0
        %v669 = vsel %vm550, %v525, 0
        %v672 = vsel %vm550, %v526, 0
        %v675 = vsel %vm550, %v527, 0
        %v678 = vsel %vm550, %v528, 0
        %v681 = vsel %vm550, %v529, 0
        %v684 = vsel %vm550, %v530, 0
        %v687 = vsel %vm550, %v531, 0
        %v690 = vsel %vm550, %v532, 0
        %v693 = vsel %vm550, %v533, 0
        %v696 = vsel %vm550, %v534, 0
        %v699 = vsel %vm550, %v535, 0
        %v702 = vsel %vm550, %v536, 0
        %v705 = vsel %vm550, %v537, 0
        %v708 = vsel %vm550, %v538, 0
        %v711 = vsel %vm550, %v539, 0
        %v714 = vsel %vm550, %v540, 0
        %v717 = vsel %vm550, %v541, 0
        %v720 = vsel %vm550, %v542, 0
        %v723 = vsel %vm550, %v543, 0
        %v726 = vsel %vm550, %v544, 0
        %v729 = vsel %vm550, %v545, 0
        %v732 = vsel %vm550, %v546, 0
        %v735 = vsel %vm550, %v547, 0
        %v738 = vsel %vm550, %v548, 0
        %v741 = vsel %vm550, %v549, 0
        %743 = vmatprep.subr.mxu0 0.0
        %744 = vmatpush1.xpose.msra.mxu0 %v648
        %745 = vmatprep.subr.mxu0 0.0
        %746 = vmatpush1.xpose.msra.mxu0 %v651
        %747 = vmatprep.subr.mxu0 0.0
        %748 = vmatpush1.xpose.msra.mxu0 %v654
        %749 = vmatprep.subr.mxu0 0.0
        %750 = vmatpush1.xpose.msra.mxu0 %v657
        %751 = vmatprep.subr.mxu0 0.0
        %752 = vmatpush1.xpose.msra.mxu0 %v660
        %753 = vmatprep.subr.mxu0 0.0
        %754 = vmatpush1.xpose.msra.mxu0 %v663
        %755 = vmatprep.subr.mxu0 0.0
        %756 = vmatpush1.xpose.msra.mxu0 %v666
        %757 = vmatprep.subr.mxu0 0.0
        %758 = vmatpush1.xpose.msra.mxu0 %v669
        %759 = vmatprep.subr.mxu0 0.0
        %760 = vmatpush1.xpose.msra.mxu0 %v672
        %761 = vmatprep.subr.mxu0 0.0
        %762 = vmatpush1.xpose.msra.mxu0 %v675
        %763 = vmatprep.subr.mxu0 0.0
        %764 = vmatpush1.xpose.msra.mxu0 %v678
        %765 = vmatprep.subr.mxu0 0.0
        %766 = vmatpush1.xpose.msra.mxu0 %v681
        %767 = vmatprep.subr.mxu0 0.0
        %768 = vmatpush1.xpose.msra.mxu0 %v684
        %769 = vmatprep.subr.mxu0 0.0
        %770 = vmatpush1.xpose.msra.mxu0 %v687
        %771 = vmatprep.subr.mxu0 0.0
        %772 = vmatpush1.xpose.msra.mxu0 %v690
        %773 = vmatprep.subr.mxu0 0.0
        %774 = vmatpush1.xpose.msra.mxu0 %v693
        %775 = vmatprep.subr.mxu0 0.0
        %776 = vmatpush1.xpose.msra.mxu0 %v696
        %777 = vmatprep.subr.mxu0 0.0
        %778 = vmatpush1.xpose.msra.mxu0 %v699
        %779 = vmatprep.subr.mxu0 0.0
        %780 = vmatpush1.xpose.msra.mxu0 %v702
        %781 = vmatprep.subr.mxu0 0.0
        %782 = vmatpush1.xpose.msra.mxu0 %v705
        %783 = vmatprep.subr.mxu0 0.0
        %784 = vmatpush1.xpose.msra.mxu0 %v708
        %785 = vmatprep.subr.mxu0 0.0
        %786 = vmatpush1.xpose.msra.mxu0 %v711
        %787 = vmatprep.subr.mxu0 0.0
        %788 = vmatpush1.xpose.msra.mxu0 %v714
        %789 = vmatprep.subr.mxu0 0.0
        %790 = vmatpush1.xpose.msra.mxu0 %v717
        %791 = vmatprep.subr.mxu0 0.0
        %792 = vmatpush1.xpose.msra.mxu0 %v720
        %793 = vmatprep.subr.mxu0 0.0
        %794 = vmatpush1.xpose.msra.mxu0 %v723
        %795 = vmatprep.subr.mxu0 0.0
        %796 = vmatpush1.xpose.msra.mxu0 %v726
        %797 = vmatprep.subr.mxu0 0.0
        %798 = vmatpush1.xpose.msra.mxu0 %v729
        %799 = vmatprep.subr.mxu0 0.0
        %800 = vmatpush1.xpose.msra.mxu0 %v732
        %801 = vmatprep.subr.mxu0 0.0
        %802 = vmatpush1.xpose.msra.mxu0 %v735
        %803 = vmatprep.subr.mxu0 0.0
        %804 = vmatpush1.xpose.msra.mxu0 %v738
        %805 = vmatprep.subr.mxu0 0.0
        %806 = vmatpush1.xpose.msra.mxu0 %v741
        %807 = vmatprep.mubr.f32.mxu0 0.0
        %808 = vmatmul.mubr.f32.gmra.mrb[0].mxu0 %v552
        %v809 = vpop.f32.mrb[0].mxu0
        %v810 = vadd.f32 0.0, %v809
        %v811 = vpop.f32.mrb[0].mxu0
        %v812 = vadd.f32 0.0, %v811
        %813 = vmatprep.mubr.f32.mxu0 0.0
        %814 = vmatmul.mubr.f32.gmra.mrb[0].mxu0 %v555
        %v815 = vpop.f32.mrb[0].mxu0
        %v816 = vadd.f32 0.0, %v815
        %v817 = vpop.f32.mrb[0].mxu0
        %v818 = vadd.f32 0.0, %v817
        %819 = vmatprep.mubr.f32.mxu0 0.0
        %820 = vmatmul.mubr.f32.gmra.mrb[0].mxu0 %v558
        %v821 = vpop.f32.mrb[0].mxu0
        %v822 = vadd.f32 0.0, %v821
        %v823 = vpop.f32.mrb[0].mxu0
        %v824 = vadd.f32 0.0, %v823
        %825 = vmatprep.mubr.f32.mxu0 0.0
        %826 = vmatmul.mubr.f32.gmra.mrb[0].mxu0 %v561
        %v827 = vpop.f32.mrb[0].mxu0
        %v828 = vadd.f32 0.0, %v827
        %v829 = vpop.f32.mrb[0].mxu0
        %v830 = vadd.f32 0.0, %v829
        %831 = vmatprep.mubr.f32.mxu0 0.0
        %832 = vmatmul.mubr.f32.gmra.mrb[0].mxu0 %v564
        %v833 = vpop.f32.mrb[0].mxu0
        %v834 = vadd.f32 0.0, %v833
        %v835 = vpop.f32.mrb[0].mxu0
        %v836 = vadd.f32 0.0, %v835
        %837 = vmatprep.mubr.f32.mxu0 0.0
        %838 = vmatmul.mubr.f32.gmra.mrb[0].mxu0 %v567
        %v839 = vpop.f32.mrb[0].mxu0
        %v840 = vadd.f32 0.0, %v839
        %v841 = vpop.f32.mrb[0].mxu0
        %v842 = vadd.f32 0.0, %v841
        %843 = vmatprep.mubr.f32.mxu0 0.0
        %844 = vmatmul.mubr.f32.gmra.mrb[0].mxu0 %v570
        %v845 = vpop.f32.mrb[0].mxu0
        %v846 = vadd.f32 0.0, %v845
        %v847 = vpop.f32.mrb[0].mxu0
        %v848 = vadd.f32 0.0, %v847
        %849 = vmatprep.mubr.f32.mxu0 0.0
        %850 = vmatmul.mubr.f32.gmra.mrb[0].mxu0 %v573
        %v851 = vpop.f32.mrb[0].mxu0
        %v852 = vadd.f32 0.0, %v851
        %v853 = vpop.f32.mrb[0].mxu0
        %v854 = vadd.f32 0.0, %v853
        %855 = vmatprep.mubr.f32.mxu0 0.0
        %856 = vmatmul.mubr.f32.gmra.mrb[0].mxu0 %v576
        %v857 = vpop.f32.mrb[0].mxu0
        %v858 = vadd.f32 0.0, %v857
        %v859 = vpop.f32.mrb[0].mxu0
        %v860 = vadd.f32 0.0, %v859
        %861 = vmatprep.mubr.f32.mxu0 0.0
        %862 = vmatmul.mubr.f32.gmra.mrb[0].mxu0 %v579
        %v863 = vpop.f32.mrb[0].mxu0
        %v864 = vadd.f32 0.0, %v863
        %v865 = vpop.f32.mrb[0].mxu0
        %v866 = vadd.f32 0.0, %v865
        %867 = vmatprep.mubr.f32.mxu0 0.0
        %868 = vmatmul.mubr.f32.gmra.mrb[0].mxu0 %v582
        %v869 = vpop.f32.mrb[0].mxu0
        %v870 = vadd.f32 0.0, %v869
        %v871 = vpop.f32.mrb[0].mxu0
        %v872 = vadd.f32 0.0, %v871
        %873 = vmatprep.mubr.f32.mxu0 0.0
        %874 = vmatmul.mubr.f32.gmra.mrb[0].mxu0 %v585
        %v875 = vpop.f32.mrb[0].mxu0
        %v876 = vadd.f32 0.0, %v875
        %v877 = vpop.f32.mrb[0].mxu0
        %v878 = vadd.f32 0.0, %v877
        %879 = vmatprep.mubr.f32.mxu0 0.0
        %880 = vmatmul.mubr.f32.gmra.mrb[0].mxu0 %v588
        %v881 = vpop.f32.mrb[0].mxu0
        %v882 = vadd.f32 0.0, %v881
        %v883 = vpop.f32.mrb[0].mxu0
        %v884 = vadd.f32 0.0, %v883
        %885 = vmatprep.mubr.f32.mxu0 0.0
        %886 = vmatmul.mubr.f32.gmra.mrb[0].mxu0 %v591
        %v887 = vpop.f32.mrb[0].mxu0
        %v888 = vadd.f32 0.0, %v887
        %v889 = vpop.f32.mrb[0].mxu0
        %v890 = vadd.f32 0.0, %v889
        %891 = vmatprep.mubr.f32.mxu0 0.0
        %892 = vmatmul.mubr.f32.gmra.mrb[0].mxu0 %v594
        %v893 = vpop.f32.mrb[0].mxu0
        %v894 = vadd.f32 0.0, %v893
        %v895 = vpop.f32.mrb[0].mxu0
        %v896 = vadd.f32 0.0, %v895
        %897 = vmatprep.mubr.f32.mxu0 0.0
        %898 = vmatmul.mubr.f32.gmra.mrb[0].mxu0 %v597
        %v899 = vpop.f32.mrb[0].mxu0
        %v900 = vadd.f32 0.0, %v899
        %v901 = vpop.f32.mrb[0].mxu0
        %v902 = vadd.f32 0.0, %v901
        %903 = vmatprep.mubr.f32.mxu0 0.0
        %904 = vmatmul.mubr.f32.gmra.mrb[0].mxu0 %v600
        %v905 = vpop.f32.mrb[0].mxu0
        %v906 = vadd.f32 0.0, %v905
        %v907 = vpop.f32.mrb[0].mxu0
        %v908 = vadd.f32 0.0, %v907
        %909 = vmatprep.mubr.f32.mxu0 0.0
        %910 = vmatmul.mubr.f32.gmra.mrb[0].mxu0 %v603
        %v911 = vpop.f32.mrb[0].mxu0
        %v912 = vadd.f32 0.0, %v911
        %v913 = vpop.f32.mrb[0].mxu0
        %v914 = vadd.f32 0.0, %v913
        %915 = vmatprep.mubr.f32.mxu0 0.0
        %916 = vmatmul.mubr.f32.gmra.mrb[0].mxu0 %v606
        %v917 = vpop.f32.mrb[0].mxu0
        %v918 = vadd.f32 0.0, %v917
        %v919 = vpop.f32.mrb[0].mxu0
        %v920 = vadd.f32 0.0, %v919
        %921 = vmatprep.mubr.f32.mxu0 0.0
        %922 = vmatmul.mubr.f32.gmra.mrb[0].mxu0 %v609
        %v923 = vpop.f32.mrb[0].mxu0
        %v924 = vadd.f32 0.0, %v923
        %v925 = vpop.f32.mrb[0].mxu0
        %v926 = vadd.f32 0.0, %v925
        %927 = vmatprep.mubr.f32.mxu0 0.0
        %928 = vmatmul.mubr.f32.gmra.mrb[0].mxu0 %v612
        %v929 = vpop.f32.mrb[0].mxu0
        %v930 = vadd.f32 0.0, %v929
        %v931 = vpop.f32.mrb[0].mxu0
        %v932 = vadd.f32 0.0, %v931
        %933 = vmatprep.mubr.f32.mxu0 0.0
        %934 = vmatmul.mubr.f32.gmra.mrb[0].mxu0 %v615
        %v935 = vpop.f32.mrb[0].mxu0
        %v936 = vadd.f32 0.0, %v935
        %v937 = vpop.f32.mrb[0].mxu0
        %v938 = vadd.f32 0.0, %v937
        %939 = vmatprep.mubr.f32.mxu0 0.0
        %940 = vmatmul.mubr.f32.gmra.mrb[0].mxu0 %v618
        %v941 = vpop.f32.mrb[0].mxu0
        %v942 = vadd.f32 0.0, %v941
        %v943 = vpop.f32.mrb[0].mxu0
        %v944 = vadd.f32 0.0, %v943
        %945 = vmatprep.mubr.f32.mxu0 0.0
        %946 = vmatmul.mubr.f32.gmra.mrb[0].mxu0 %v621
        %v947 = vpop.f32.mrb[0].mxu0
        %v948 = vadd.f32 0.0, %v947
        %v949 = vpop.f32.mrb[0].mxu0
        %v950 = vadd.f32 0.0, %v949
        %951 = vmatprep.mubr.f32.mxu0 0.0
        %952 = vmatmul.mubr.f32.gmra.mrb[0].mxu0 %v624
        %v953 = vpop.f32.mrb[0].mxu0
        %v954 = vadd.f32 0.0, %v953
        %v955 = vpop.f32.mrb[0].mxu0
        %v956 = vadd.f32 0.0, %v955
        %957 = vmatprep.mubr.f32.mxu0 0.0
        %958 = vmatmul.mubr.f32.gmra.mrb[0].mxu0 %v627
        %v959 = vpop.f32.mrb[0].mxu0
        %v960 = vadd.f32 0.0, %v959
        %v961 = vpop.f32.mrb[0].mxu0
        %v962 = vadd.f32 0.0, %v961
        %963 = vmatprep.mubr.f32.mxu0 0.0
        %964 = vmatmul.mubr.f32.gmra.mrb[0].mxu0 %v630
        %v965 = vpop.f32.mrb[0].mxu0
        %v966 = vadd.f32 0.0, %v965
        %v967 = vpop.f32.mrb[0].mxu0
        %v968 = vadd.f32 0.0, %v967
        %969 = vmatprep.mubr.f32.mxu0 0.0
        %970 = vmatmul.mubr.f32.gmra.mrb[0].mxu0 %v633
        %v971 = vpop.f32.mrb[0].mxu0
        %v972 = vadd.f32 0.0, %v971
        %v973 = vpop.f32.mrb[0].mxu0
        %v974 = vadd.f32 0.0, %v973
        %975 = vmatprep.mubr.f32.mxu0 0.0
        %976 = vmatmul.mubr.f32.gmra.mrb[0].mxu0 %v636
        %v977 = vpop.f32.mrb[0].mxu0
        %v978 = vadd.f32 0.0, %v977
        %v979 = vpop.f32.mrb[0].mxu0
        %v980 = vadd.f32 0.0, %v979
        %981 = vmatprep.mubr.f32.mxu0 0.0
        %982 = vmatmul.mubr.f32.gmra.mrb[0].mxu0 %v639
        %v983 = vpop.f32.mrb[0].mxu0
        %v984 = vadd.f32 0.0, %v983
        %v985 = vpop.f32.mrb[0].mxu0
        %v986 = vadd.f32 0.0, %v985
        %987 = vmatprep.mubr.f32.mxu0 0.0
        %988 = vmatmul.mubr.f32.gmra.mrb[0].mxu0 %v642
        %v989 = vpop.f32.mrb[0].mxu0
        %v990 = vadd.f32 0.0, %v989
        %v991 = vpop.f32.mrb[0].mxu0
        %v992 = vadd.f32 0.0, %v991
        %993 = vmatprep.mubr.f32.mxu0 0.0
        %994 = vmatmul.mubr.f32.gmra.mrb[0].mxu0 %v645
        %v995 = vpop.f32.mrb[0].mxu0
        %v996 = vadd.f32 0.0, %v995
        %v997 = vpop.f32.mrb[0].mxu0
        %v998 = vadd.f32 0.0, %v997
        %999 = vdwg.mxu0
        %v1000 = vld [vmem:[#allocation2] sm:$0xff]
        %v1001 = vld [vmem:[#allocation2 + $0x8] sm:$0xff]
        %v1002 = vld [vmem:[#allocation2 + $0x10] sm:$0xff]
        %v1003 = vld [vmem:[#allocation2 + $0x18] sm:$0xff]
        %v1004 = vld [vmem:[#allocation2 + $0x20] sm:$0xff]
        %v1005 = vld [vmem:[#allocation2 + $0x28] sm:$0xff]
        %v1006 = vld [vmem:[#allocation2 + $0x30] sm:$0xff]
        %v1007 = vld [vmem:[#allocation2 + $0x38] sm:$0xff]
        %v1008 = vld [vmem:[#allocation2 + $0x40] sm:$0xff]
        %v1009 = vld [vmem:[#allocation2 + $0x48] sm:$0xff]
        %v1010 = vld [vmem:[#allocation2 + $0x50] sm:$0xff]
        %v1011 = vld [vmem:[#allocation2 + $0x58] sm:$0xff]
        %v1012 = vld [vmem:[#allocation2 + $0x60] sm:$0xff]
        %v1013 = vld [vmem:[#allocation2 + $0x68] sm:$0xff]
        %v1014 = vld [vmem:[#allocation2 + $0x70] sm:$0xff]
        %v1015 = vld [vmem:[#allocation2 + $0x78] sm:$0xff]
        %v1016 = vld [vmem:[#allocation2 + $0x80] sm:$0xff]
        %v1017 = vld [vmem:[#allocation2 + $0x88] sm:$0xff]
        %v1018 = vld [vmem:[#allocation2 + $0x90] sm:$0xff]
        %v1019 = vld [vmem:[#allocation2 + $0x98] sm:$0xff]
        %v1020 = vld [vmem:[#allocation2 + $0xa0] sm:$0xff]
        %v1021 = vld [vmem:[#allocation2 + $0xa8] sm:$0xff]
        %v1022 = vld [vmem:[#allocation2 + $0xb0] sm:$0xff]
        %v1023 = vld [vmem:[#allocation2 + $0xb8] sm:$0xff]
        %v1024 = vld [vmem:[#allocation2 + $0xc0] sm:$0xff]
        %v1025 = vld [vmem:[#allocation2 + $0xc8] sm:$0xff]
        %v1026 = vld [vmem:[#allocation2 + $0xd0] sm:$0xff]
        %v1027 = vld [vmem:[#allocation2 + $0xd8] sm:$0xff]
        %v1028 = vld [vmem:[#allocation2 + $0xe0] sm:$0xff]
        %v1029 = vld [vmem:[#allocation2 + $0xe8] sm:$0xff]
        %v1030 = vld [vmem:[#allocation2 + $0xf0] sm:$0xff]
        %v1031 = vld [vmem:[#allocation2 + $0xf8] sm:$0xff]
        %v1032 = vmax.f32 %v810, %v812
        %1033 = vmax.xlane.f32.xlu0 %v1032
        %v1034 = vpop.xlane.xlu0 %1033
        %v1035 = vmax.f32 %v816, %v818
        %1036 = vmax.xlane.f32.xlu0 %v1035
        %v1037 = vpop.xlane.xlu0 %1036
        %v1038 = vmax.f32 %v822, %v824
        %1039 = vmax.xlane.f32.xlu0 %v1038
        %v1040 = vpop.xlane.xlu0 %1039
        %v1041 = vmax.f32 %v828, %v830
        %1042 = vmax.xlane.f32.xlu0 %v1041
        %v1043 = vpop.xlane.xlu0 %1042
        %v1044 = vmax.f32 %v834, %v836
        %1045 = vmax.xlane.f32.xlu0 %v1044
        %v1046 = vpop.xlane.xlu0 %1045
        %v1047 = vmax.f32 %v840, %v842
        %1048 = vmax.xlane.f32.xlu0 %v1047
        %v1049 = vpop.xlane.xlu0 %1048
        %v1050 = vmax.f32 %v846, %v848
        %1051 = vmax.xlane.f32.xlu0 %v1050
        %v1052 = vpop.xlane.xlu0 %1051
        %v1053 = vmax.f32 %v852, %v854
        %1054 = vmax.xlane.f32.xlu0 %v1053
        %v1055 = vpop.xlane.xlu0 %1054
        %v1056 = vmax.f32 %v858, %v860
        %1057 = vmax.xlane.f32.xlu0 %v1056
        %v1058 = vpop.xlane.xlu0 %1057
        %v1059 = vmax.f32 %v864, %v866
        %1060 = vmax.xlane.f32.xlu0 %v1059
        %v1061 = vpop.xlane.xlu0 %1060
        %v1062 = vmax.f32 %v870, %v872
        %1063 = vmax.xlane.f32.xlu0 %v1062
        %v1064 = vpop.xlane.xlu0 %1063
        %v1065 = vmax.f32 %v876, %v878
        %1066 = vmax.xlane.f32.xlu0 %v1065
        %v1067 = vpop.xlane.xlu0 %1066
        %v1068 = vmax.f32 %v882, %v884
        %1069 = vmax.xlane.f32.xlu0 %v1068
        %v1070 = vpop.xlane.xlu0 %1069
        %v1071 = vmax.f32 %v888, %v890
        %1072 = vmax.xlane.f32.xlu0 %v1071
        %v1073 = vpop.xlane.xlu0 %1072
        %v1074 = vmax.f32 %v894, %v896
        %1075 = vmax.xlane.f32.xlu0 %v1074
        %v1076 = vpop.xlane.xlu0 %1075
        %v1077 = vmax.f32 %v900, %v902
        %1078 = vmax.xlane.f32.xlu0 %v1077
        %v1079 = vpop.xlane.xlu0 %1078
        %v1080 = vmax.f32 %v906, %v908
        %1081 = vmax.xlane.f32.xlu0 %v1080
        %v1082 = vpop.xlane.xlu0 %1081
        %v1083 = vmax.f32 %v912, %v914
        %1084 = vmax.xlane.f32.xlu0 %v1083
        %v1085 = vpop.xlane.xlu0 %1084
        %v1086 = vmax.f32 %v918, %v920
        %1087 = vmax.xlane.f32.xlu0 %v1086
        %v1088 = vpop.xlane.xlu0 %1087
        %v1089 = vmax.f32 %v924, %v926
        %1090 = vmax.xlane.f32.xlu0 %v1089
        %v1091 = vpop.xlane.xlu0 %1090
        %v1092 = vmax.f32 %v930, %v932
        %1093 = vmax.xlane.f32.xlu0 %v1092
        %v1094 = vpop.xlane.xlu0 %1093
        %v1095 = vmax.f32 %v936, %v938
        %1096 = vmax.xlane.f32.xlu0 %v1095
        %v1097 = vpop.xlane.xlu0 %1096
        %v1098 = vmax.f32 %v942, %v944
        %1099 = vmax.xlane.f32.xlu0 %v1098
        %v1100 = vpop.xlane.xlu0 %1099
        %v1101 = vmax.f32 %v948, %v950
        %1102 = vmax.xlane.f32.xlu0 %v1101
        %v1103 = vpop.xlane.xlu0 %1102
        %v1104 = vmax.f32 %v954, %v956
        %1105 = vmax.xlane.f32.xlu0 %v1104
        %v1106 = vpop.xlane.xlu0 %1105
        %v1107 = vmax.f32 %v960, %v962
        %1108 = vmax.xlane.f32.xlu0 %v1107
        %v1109 = vpop.xlane.xlu0 %1108
        %v1110 = vmax.f32 %v966, %v968
        %1111 = vmax.xlane.f32.xlu0 %v1110
        %v1112 = vpop.xlane.xlu0 %1111
        %v1113 = vmax.f32 %v972, %v974
        %1114 = vmax.xlane.f32.xlu0 %v1113
        %v1115 = vpop.xlane.xlu0 %1114
        %v1116 = vmax.f32 %v978, %v980
        %1117 = vmax.xlane.f32.xlu0 %v1116
        %v1118 = vpop.xlane.xlu0 %1117
        %v1119 = vmax.f32 %v984, %v986
        %1120 = vmax.xlane.f32.xlu0 %v1119
        %v1121 = vpop.xlane.xlu0 %1120
        %v1122 = vmax.f32 %v990, %v992
        %1123 = vmax.xlane.f32.xlu0 %v1122
        %v1124 = vpop.xlane.xlu0 %1123
        %v1125 = vmax.f32 %v996, %v998
        %1126 = vmax.xlane.f32.xlu0 %v1125
        %v1127 = vpop.xlane.xlu0 %1126
        %v1128 = vmax.f32 %v1000, %v1034
        %v1129 = vmax.f32 %v1001, %v1037
        %v1130 = vmax.f32 %v1002, %v1040
        %v1131 = vmax.f32 %v1003, %v1043
        %v1132 = vmax.f32 %v1004, %v1046
        %v1133 = vmax.f32 %v1005, %v1049
        %v1134 = vmax.f32 %v1006, %v1052
        %v1135 = vmax.f32 %v1007, %v1055
        %v1136 = vmax.f32 %v1008, %v1058
        %v1137 = vmax.f32 %v1009, %v1061
        %v1138 = vmax.f32 %v1010, %v1064
        %v1139 = vmax.f32 %v1011, %v1067
        %v1140 = vmax.f32 %v1012, %v1070
        %v1141 = vmax.f32 %v1013, %v1073
        %v1142 = vmax.f32 %v1014, %v1076
        %v1143 = vmax.f32 %v1015, %v1079
        %v1144 = vmax.f32 %v1016, %v1082
        %v1145 = vmax.f32 %v1017, %v1085
        %v1146 = vmax.f32 %v1018, %v1088
        %v1147 = vmax.f32 %v1019, %v1091
        %v1148 = vmax.f32 %v1020, %v1094
        %v1149 = vmax.f32 %v1021, %v1097
        %v1150 = vmax.f32 %v1022, %v1100
        %v1151 = vmax.f32 %v1023, %v1103
        %v1152 = vmax.f32 %v1024, %v1106
        %v1153 = vmax.f32 %v1025, %v1109
        %v1154 = vmax.f32 %v1026, %v1112
        %v1155 = vmax.f32 %v1027, %v1115
        %v1156 = vmax.f32 %v1028, %v1118
        %v1157 = vmax.f32 %v1029, %v1121
        %v1158 = vmax.f32 %v1030, %v1124
        %v1159 = vmax.f32 %v1031, %v1127
        %v1160 = vsub.f32 %v1000, %v1128
        %v1161 = vsub.f32 %v1001, %v1129
        %v1162 = vsub.f32 %v1002, %v1130
        %v1163 = vsub.f32 %v1003, %v1131
        %v1164 = vsub.f32 %v1004, %v1132
        %v1165 = vsub.f32 %v1005, %v1133
        %v1166 = vsub.f32 %v1006, %v1134
        %v1167 = vsub.f32 %v1007, %v1135
        %v1168 = vsub.f32 %v1008, %v1136
        %v1169 = vsub.f32 %v1009, %v1137
        %v1170 = vsub.f32 %v1010, %v1138
        %v1171 = vsub.f32 %v1011, %v1139
        %v1172 = vsub.f32 %v1012, %v1140
        %v1173 = vsub.f32 %v1013, %v1141
        %v1174 = vsub.f32 %v1014, %v1142
        %v1175 = vsub.f32 %v1015, %v1143
        %v1176 = vsub.f32 %v1016, %v1144
        %v1177 = vsub.f32 %v1017, %v1145
        %v1178 = vsub.f32 %v1018, %v1146
        %v1179 = vsub.f32 %v1019, %v1147
        %v1180 = vsub.f32 %v1020, %v1148
        %v1181 = vsub.f32 %v1021, %v1149
        %v1182 = vsub.f32 %v1022, %v1150
        %v1183 = vsub.f32 %v1023, %v1151
        %v1184 = vsub.f32 %v1024, %v1152
        %v1185 = vsub.f32 %v1025, %v1153
        %v1186 = vsub.f32 %v1026, %v1154
        %v1187 = vsub.f32 %v1027, %v1155
        %v1188 = vsub.f32 %v1028, %v1156
        %v1189 = vsub.f32 %v1029, %v1157
        %v1190 = vsub.f32 %v1030, %v1158
        %v1191 = vsub.f32 %v1031, %v1159
        %v1192 = vmul.f32 %v1160, 1.442695
        %v1193 = vpow.pop %v1192
        %v1194 = vmul.f32 %v1161, 1.442695
        %v1195 = vpow.pop %v1194
        %v1196 = vmul.f32 %v1162, 1.442695
        %v1197 = vpow.pop %v1196
        %v1198 = vmul.f32 %v1163, 1.442695
        %v1199 = vpow.pop %v1198
        %v1200 = vmul.f32 %v1164, 1.442695
        %v1201 = vpow.pop %v1200
        %v1202 = vmul.f32 %v1165, 1.442695
        %v1203 = vpow.pop %v1202
        %v1204 = vmul.f32 %v1166, 1.442695
        %v1205 = vpow.pop %v1204
        %v1206 = vmul.f32 %v1167, 1.442695
        %v1207 = vpow.pop %v1206
        %v1208 = vmul.f32 %v1168, 1.442695
        %v1209 = vpow.pop %v1208
        %v1210 = vmul.f32 %v1169, 1.442695
        %v1211 = vpow.pop %v1210
        %v1212 = vmul.f32 %v1170, 1.442695
        %v1213 = vpow.pop %v1212
        %v1214 = vmul.f32 %v1171, 1.442695
        %v1215 = vpow.pop %v1214
        %v1216 = vmul.f32 %v1172, 1.442695
        %v1217 = vpow.pop %v1216
        %v1218 = vmul.f32 %v1173, 1.442695
        %v1219 = vpow.pop %v1218
        %v1220 = vmul.f32 %v1174, 1.442695
        %v1221 = vpow.pop %v1220
        %v1222 = vmul.f32 %v1175, 1.442695
        %v1223 = vpow.pop %v1222
        %v1224 = vmul.f32 %v1176, 1.442695
        %v1225 = vpow.pop %v1224
        %v1226 = vmul.f32 %v1177, 1.442695
        %v1227 = vpow.pop %v1226
        %v1228 = vmul.f32 %v1178, 1.442695
        %v1229 = vpow.pop %v1228
        %v1230 = vmul.f32 %v1179, 1.442695
        %v1231 = vpow.pop %v1230
        %v1232 = vmul.f32 %v1180, 1.442695
        %v1233 = vpow.pop %v1232
        %v1234 = vmul.f32 %v1181, 1.442695
        %v1235 = vpow.pop %v1234
        %v1236 = vmul.f32 %v1182, 1.442695
        %v1237 = vpow.pop %v1236
        %v1238 = vmul.f32 %v1183, 1.442695
        %v1239 = vpow.pop %v1238
        %v1240 = vmul.f32 %v1184, 1.442695
        %v1241 = vpow.pop %v1240
        %v1242 = vmul.f32 %v1185, 1.442695
        %v1243 = vpow.pop %v1242
        %v1244 = vmul.f32 %v1186, 1.442695
        %v1245 = vpow.pop %v1244
        %v1246 = vmul.f32 %v1187, 1.442695
        %v1247 = vpow.pop %v1246
        %v1248 = vmul.f32 %v1188, 1.442695
        %v1249 = vpow.pop %v1248
        %v1250 = vmul.f32 %v1189, 1.442695
        %v1251 = vpow.pop %v1250
        %v1252 = vmul.f32 %v1190, 1.442695
        %v1253 = vpow.pop %v1252
        %v1254 = vmul.f32 %v1191, 1.442695
        %v1255 = vpow.pop %v1254
        %1257 = vset.pattern.permute.xlu0 0
        %1258 = vperm.xlu0 %1257, %v1128
        %v1259 = vpop.permute.xlu0 %1258
        %1262 = vset.pattern.permute.xlu0 0
        %1263 = vperm.xlu0 %1262, %v1129
        %v1264 = vpop.permute.xlu0 %1263
        %1267 = vset.pattern.permute.xlu0 0
        %1268 = vperm.xlu0 %1267, %v1130
        %v1269 = vpop.permute.xlu0 %1268
        %1272 = vset.pattern.permute.xlu0 0
        %1273 = vperm.xlu0 %1272, %v1131
        %v1274 = vpop.permute.xlu0 %1273
        %1277 = vset.pattern.permute.xlu0 0
        %1278 = vperm.xlu0 %1277, %v1132
        %v1279 = vpop.permute.xlu0 %1278
        %1282 = vset.pattern.permute.xlu0 0
        %1283 = vperm.xlu0 %1282, %v1133
        %v1284 = vpop.permute.xlu0 %1283
        %1287 = vset.pattern.permute.xlu0 0
        %1288 = vperm.xlu0 %1287, %v1134
        %v1289 = vpop.permute.xlu0 %1288
        %1292 = vset.pattern.permute.xlu0 0
        %1293 = vperm.xlu0 %1292, %v1135
        %v1294 = vpop.permute.xlu0 %1293
        %1297 = vset.pattern.permute.xlu0 0
        %1298 = vperm.xlu0 %1297, %v1136
        %v1299 = vpop.permute.xlu0 %1298
        %1302 = vset.pattern.permute.xlu0 0
        %1303 = vperm.xlu0 %1302, %v1137
        %v1304 = vpop.permute.xlu0 %1303
        %1307 = vset.pattern.permute.xlu0 0
        %1308 = vperm.xlu0 %1307, %v1138
        %v1309 = vpop.permute.xlu0 %1308
        %1312 = vset.pattern.permute.xlu0 0
        %1313 = vperm.xlu0 %1312, %v1139
        %v1314 = vpop.permute.xlu0 %1313
        %1317 = vset.pattern.permute.xlu0 0
        %1318 = vperm.xlu0 %1317, %v1140
        %v1319 = vpop.permute.xlu0 %1318
        %1322 = vset.pattern.permute.xlu0 0
        %1323 = vperm.xlu0 %1322, %v1141
        %v1324 = vpop.permute.xlu0 %1323
        %1327 = vset.pattern.permute.xlu0 0
        %1328 = vperm.xlu0 %1327, %v1142
        %v1329 = vpop.permute.xlu0 %1328
        %1332 = vset.pattern.permute.xlu0 0
        %1333 = vperm.xlu0 %1332, %v1143
        %v1334 = vpop.permute.xlu0 %1333
        %1337 = vset.pattern.permute.xlu0 0
        %1338 = vperm.xlu0 %1337, %v1144
        %v1339 = vpop.permute.xlu0 %1338
        %1342 = vset.pattern.permute.xlu0 0
        %1343 = vperm.xlu0 %1342, %v1145
        %v1344 = vpop.permute.xlu0 %1343
        %1347 = vset.pattern.permute.xlu0 0
        %1348 = vperm.xlu0 %1347, %v1146
        %v1349 = vpop.permute.xlu0 %1348
        %1352 = vset.pattern.permute.xlu0 0
        %1353 = vperm.xlu0 %1352, %v1147
        %v1354 = vpop.permute.xlu0 %1353
        %1357 = vset.pattern.permute.xlu0 0
        %1358 = vperm.xlu0 %1357, %v1148
        %v1359 = vpop.permute.xlu0 %1358
        %1362 = vset.pattern.permute.xlu0 0
        %1363 = vperm.xlu0 %1362, %v1149
        %v1364 = vpop.permute.xlu0 %1363
        %1367 = vset.pattern.permute.xlu0 0
        %1368 = vperm.xlu0 %1367, %v1150
        %v1369 = vpop.permute.xlu0 %1368
        %1372 = vset.pattern.permute.xlu0 0
        %1373 = vperm.xlu0 %1372, %v1151
        %v1374 = vpop.permute.xlu0 %1373
        %1377 = vset.pattern.permute.xlu0 0
        %1378 = vperm.xlu0 %1377, %v1152
        %v1379 = vpop.permute.xlu0 %1378
        %1382 = vset.pattern.permute.xlu0 0
        %1383 = vperm.xlu0 %1382, %v1153
        %v1384 = vpop.permute.xlu0 %1383
        %1387 = vset.pattern.permute.xlu0 0
        %1388 = vperm.xlu0 %1387, %v1154
        %v1389 = vpop.permute.xlu0 %1388
        %1392 = vset.pattern.permute.xlu0 0
        %1393 = vperm.xlu0 %1392, %v1155
        %v1394 = vpop.permute.xlu0 %1393
        %1397 = vset.pattern.permute.xlu0 0
        %1398 = vperm.xlu0 %1397, %v1156
        %v1399 = vpop.permute.xlu0 %1398
        %1402 = vset.pattern.permute.xlu0 0
        %1403 = vperm.xlu0 %1402, %v1157
        %v1404 = vpop.permute.xlu0 %1403
        %1407 = vset.pattern.permute.xlu0 0
        %1408 = vperm.xlu0 %1407, %v1158
        %v1409 = vpop.permute.xlu0 %1408
        %1412 = vset.pattern.permute.xlu0 0
        %1413 = vperm.xlu0 %1412, %v1159
        %v1414 = vpop.permute.xlu0 %1413
        %v1416 = vsub.f32 %v810, %v1259
        %v1417 = vsub.f32 %v812, %v1259
        %v1418 = vsub.f32 %v816, %v1264
        %v1419 = vsub.f32 %v818, %v1264
        %v1420 = vsub.f32 %v822, %v1269
        %v1421 = vsub.f32 %v824, %v1269
        %v1422 = vsub.f32 %v828, %v1274
        %v1423 = vsub.f32 %v830, %v1274
        %v1424 = vsub.f32 %v834, %v1279
        %v1425 = vsub.f32 %v836, %v1279
        %v1426 = vsub.f32 %v840, %v1284
        %v1427 = vsub.f32 %v842, %v1284
        %v1428 = vsub.f32 %v846, %v1289
        %v1429 = vsub.f32 %v848, %v1289
        %v1430 = vsub.f32 %v852, %v1294
        %v1431 = vsub.f32 %v854, %v1294
        %v1432 = vsub.f32 %v858, %v1299
        %v1433 = vsub.f32 %v860, %v1299
        %v1434 = vsub.f32 %v864, %v1304
        %v1435 = vsub.f32 %v866, %v1304
        %v1436 = vsub.f32 %v870, %v1309
        %v1437 = vsub.f32 %v872, %v1309
        %v1438 = vsub.f32 %v876, %v1314
        %v1439 = vsub.f32 %v878, %v1314
        %v1440 = vsub.f32 %v882, %v1319
        %v1441 = vsub.f32 %v884, %v1319
        %v1442 = vsub.f32 %v888, %v1324
        %v1443 = vsub.f32 %v890, %v1324
        %v1444 = vsub.f32 %v894, %v1329
        %v1445 = vsub.f32 %v896, %v1329
        %v1446 = vsub.f32 %v900, %v1334
        %v1447 = vsub.f32 %v902, %v1334
        %v1448 = vsub.f32 %v906, %v1339
        %v1449 = vsub.f32 %v908, %v1339
        %v1450 = vsub.f32 %v912, %v1344
        %v1451 = vsub.f32 %v914, %v1344
        %v1452 = vsub.f32 %v918, %v1349
        %v1453 = vsub.f32 %v920, %v1349
        %v1454 = vsub.f32 %v924, %v1354
        %v1455 = vsub.f32 %v926, %v1354
        %v1456 = vsub.f32 %v930, %v1359
        %v1457 = vsub.f32 %v932, %v1359
        %v1458 = vsub.f32 %v936, %v1364
        %v1459 = vsub.f32 %v938, %v1364
        %v1460 = vsub.f32 %v942, %v1369
        %v1461 = vsub.f32 %v944, %v1369
        %v1462 = vsub.f32 %v948, %v1374
        %v1463 = vsub.f32 %v950, %v1374
        %v1464 = vsub.f32 %v954, %v1379
        %v1465 = vsub.f32 %v956, %v1379
        %v1466 = vsub.f32 %v960, %v1384
        %v1467 = vsub.f32 %v962, %v1384
        %v1468 = vsub.f32 %v966, %v1389
        %v1469 = vsub.f32 %v968, %v1389
        %v1470 = vsub.f32 %v972, %v1394
        %v1471 = vsub.f32 %v974, %v1394
        %v1472 = vsub.f32 %v978, %v1399
        %v1473 = vsub.f32 %v980, %v1399
        %v1474 = vsub.f32 %v984, %v1404
        %v1475 = vsub.f32 %v986, %v1404
        %v1476 = vsub.f32 %v990, %v1409
        %v1477 = vsub.f32 %v992, %v1409
        %v1478 = vsub.f32 %v996, %v1414
        %v1479 = vsub.f32 %v998, %v1414
        %v1480 = vmul.f32 %v1416, 1.442695
        %v1481 = vpow.pop %v1480
        %v1482 = vmul.f32 %v1417, 1.442695
        %v1483 = vpow.pop %v1482
        %v1484 = vmul.f32 %v1418, 1.442695
        %v1485 = vpow.pop %v1484
        %v1486 = vmul.f32 %v1419, 1.442695
        %v1487 = vpow.pop %v1486
        %v1488 = vmul.f32 %v1420, 1.442695
        %v1489 = vpow.pop %v1488
        %v1490 = vmul.f32 %v1421, 1.442695
        %v1491 = vpow.pop %v1490
        %v1492 = vmul.f32 %v1422, 1.442695
        %v1493 = vpow.pop %v1492
        %v1494 = vmul.f32 %v1423, 1.442695
        %v1495 = vpow.pop %v1494
        %v1496 = vmul.f32 %v1424, 1.442695
        %v1497 = vpow.pop %v1496
        %v1498 = vmul.f32 %v1425, 1.442695
        %v1499 = vpow.pop %v1498
        %v1500 = vmul.f32 %v1426, 1.442695
        %v1501 = vpow.pop %v1500
        %v1502 = vmul.f32 %v1427, 1.442695
        %v1503 = vpow.pop %v1502
        %v1504 = vmul.f32 %v1428, 1.442695
        %v1505 = vpow.pop %v1504
        %v1506 = vmul.f32 %v1429, 1.442695
        %v1507 = vpow.pop %v1506
        %v1508 = vmul.f32 %v1430, 1.442695
        %v1509 = vpow.pop %v1508
        %v1510 = vmul.f32 %v1431, 1.442695
        %v1511 = vpow.pop %v1510
        %v1512 = vmul.f32 %v1432, 1.442695
        %v1513 = vpow.pop %v1512
        %v1514 = vmul.f32 %v1433, 1.442695
        %v1515 = vpow.pop %v1514
        %v1516 = vmul.f32 %v1434, 1.442695
        %v1517 = vpow.pop %v1516
        %v1518 = vmul.f32 %v1435, 1.442695
        %v1519 = vpow.pop %v1518
        %v1520 = vmul.f32 %v1436, 1.442695
        %v1521 = vpow.pop %v1520
        %v1522 = vmul.f32 %v1437, 1.442695
        %v1523 = vpow.pop %v1522
        %v1524 = vmul.f32 %v1438, 1.442695
        %v1525 = vpow.pop %v1524
        %v1526 = vmul.f32 %v1439, 1.442695
        %v1527 = vpow.pop %v1526
        %v1528 = vmul.f32 %v1440, 1.442695
        %v1529 = vpow.pop %v1528
        %v1530 = vmul.f32 %v1441, 1.442695
        %v1531 = vpow.pop %v1530
        %v1532 = vmul.f32 %v1442, 1.442695
        %v1533 = vpow.pop %v1532
        %v1534 = vmul.f32 %v1443, 1.442695
        %v1535 = vpow.pop %v1534
        %v1536 = vmul.f32 %v1444, 1.442695
        %v1537 = vpow.pop %v1536
        %v1538 = vmul.f32 %v1445, 1.442695
        %v1539 = vpow.pop %v1538
        %v1540 = vmul.f32 %v1446, 1.442695
        %v1541 = vpow.pop %v1540
        %v1542 = vmul.f32 %v1447, 1.442695
        %v1543 = vpow.pop %v1542
        %v1544 = vmul.f32 %v1448, 1.442695
        %v1545 = vpow.pop %v1544
        %v1546 = vmul.f32 %v1449, 1.442695
        %v1547 = vpow.pop %v1546
        %v1548 = vmul.f32 %v1450, 1.442695
        %v1549 = vpow.pop %v1548
        %v1550 = vmul.f32 %v1451, 1.442695
        %v1551 = vpow.pop %v1550
        %v1552 = vmul.f32 %v1452, 1.442695
        %v1553 = vpow.pop %v1552
        %v1554 = vmul.f32 %v1453, 1.442695
        %v1555 = vpow.pop %v1554
        %v1556 = vmul.f32 %v1454, 1.442695
        %v1557 = vpow.pop %v1556
        %v1558 = vmul.f32 %v1455, 1.442695
        %v1559 = vpow.pop %v1558
        %v1560 = vmul.f32 %v1456, 1.442695
        %v1561 = vpow.pop %v1560
        %v1562 = vmul.f32 %v1457, 1.442695
        %v1563 = vpow.pop %v1562
        %v1564 = vmul.f32 %v1458, 1.442695
        %v1565 = vpow.pop %v1564
        %v1566 = vmul.f32 %v1459, 1.442695
        %v1567 = vpow.pop %v1566
        %v1568 = vmul.f32 %v1460, 1.442695
        %v1569 = vpow.pop %v1568
        %v1570 = vmul.f32 %v1461, 1.442695
        %v1571 = vpow.pop %v1570
        %v1572 = vmul.f32 %v1462, 1.442695
        %v1573 = vpow.pop %v1572
        %v1574 = vmul.f32 %v1463, 1.442695
        %v1575 = vpow.pop %v1574
        %v1576 = vmul.f32 %v1464, 1.442695
        %v1577 = vpow.pop %v1576
        %v1578 = vmul.f32 %v1465, 1.442695
        %v1579 = vpow.pop %v1578
        %v1580 = vmul.f32 %v1466, 1.442695
        %v1581 = vpow.pop %v1580
        %v1582 = vmul.f32 %v1467, 1.442695
        %v1583 = vpow.pop %v1582
        %v1584 = vmul.f32 %v1468, 1.442695
        %v1585 = vpow.pop %v1584
        %v1586 = vmul.f32 %v1469, 1.442695
        %v1587 = vpow.pop %v1586
        %v1588 = vmul.f32 %v1470, 1.442695
        %v1589 = vpow.pop %v1588
        %v1590 = vmul.f32 %v1471, 1.442695
        %v1591 = vpow.pop %v1590
        %v1592 = vmul.f32 %v1472, 1.442695
        %v1593 = vpow.pop %v1592
        %v1594 = vmul.f32 %v1473, 1.442695
        %v1595 = vpow.pop %v1594
        %v1596 = vmul.f32 %v1474, 1.442695
        %v1597 = vpow.pop %v1596
        %v1598 = vmul.f32 %v1475, 1.442695
        %v1599 = vpow.pop %v1598
        %v1600 = vmul.f32 %v1476, 1.442695
        %v1601 = vpow.pop %v1600
        %v1602 = vmul.f32 %v1477, 1.442695
        %v1603 = vpow.pop %v1602
        %v1604 = vmul.f32 %v1478, 1.442695
        %v1605 = vpow.pop %v1604
        %v1606 = vmul.f32 %v1479, 1.442695
        %v1607 = vpow.pop %v1606
        %v1608 = vld [vmem:[#allocation3] sm:$0xff]
        %v1609 = vld [vmem:[#allocation3 + $0x8] sm:$0xff]
        %v1610 = vld [vmem:[#allocation3 + $0x10] sm:$0xff]
        %v1611 = vld [vmem:[#allocation3 + $0x18] sm:$0xff]
        %v1612 = vld [vmem:[#allocation3 + $0x20] sm:$0xff]
        %v1613 = vld [vmem:[#allocation3 + $0x28] sm:$0xff]
        %v1614 = vld [vmem:[#allocation3 + $0x30] sm:$0xff]
        %v1615 = vld [vmem:[#allocation3 + $0x38] sm:$0xff]
        %v1616 = vld [vmem:[#allocation3 + $0x40] sm:$0xff]
        %v1617 = vld [vmem:[#allocation3 + $0x48] sm:$0xff]
        %v1618 = vld [vmem:[#allocation3 + $0x50] sm:$0xff]
        %v1619 = vld [vmem:[#allocation3 + $0x58] sm:$0xff]
        %v1620 = vld [vmem:[#allocation3 + $0x60] sm:$0xff]
        %v1621 = vld [vmem:[#allocation3 + $0x68] sm:$0xff]
        %v1622 = vld [vmem:[#allocation3 + $0x70] sm:$0xff]
        %v1623 = vld [vmem:[#allocation3 + $0x78] sm:$0xff]
        %v1624 = vld [vmem:[#allocation3 + $0x80] sm:$0xff]
        %v1625 = vld [vmem:[#allocation3 + $0x88] sm:$0xff]
        %v1626 = vld [vmem:[#allocation3 + $0x90] sm:$0xff]
        %v1627 = vld [vmem:[#allocation3 + $0x98] sm:$0xff]
        %v1628 = vld [vmem:[#allocation3 + $0xa0] sm:$0xff]
        %v1629 = vld [vmem:[#allocation3 + $0xa8] sm:$0xff]
        %v1630 = vld [vmem:[#allocation3 + $0xb0] sm:$0xff]
        %v1631 = vld [vmem:[#allocation3 + $0xb8] sm:$0xff]
        %v1632 = vld [vmem:[#allocation3 + $0xc0] sm:$0xff]
        %v1633 = vld [vmem:[#allocation3 + $0xc8] sm:$0xff]
        %v1634 = vld [vmem:[#allocation3 + $0xd0] sm:$0xff]
        %v1635 = vld [vmem:[#allocation3 + $0xd8] sm:$0xff]
        %v1636 = vld [vmem:[#allocation3 + $0xe0] sm:$0xff]
        %v1637 = vld [vmem:[#allocation3 + $0xe8] sm:$0xff]
        %v1638 = vld [vmem:[#allocation3 + $0xf0] sm:$0xff]
        %v1639 = vld [vmem:[#allocation3 + $0xf8] sm:$0xff]
        %v1640 = vmul.f32 %v1193, %v1608
        %v1641 = vmul.f32 %v1195, %v1609
        %v1642 = vmul.f32 %v1197, %v1610
        %v1643 = vmul.f32 %v1199, %v1611
        %v1644 = vmul.f32 %v1201, %v1612
        %v1645 = vmul.f32 %v1203, %v1613
        %v1646 = vmul.f32 %v1205, %v1614
        %v1647 = vmul.f32 %v1207, %v1615
        %v1648 = vmul.f32 %v1209, %v1616
        %v1649 = vmul.f32 %v1211, %v1617
        %v1650 = vmul.f32 %v1213, %v1618
        %v1651 = vmul.f32 %v1215, %v1619
        %v1652 = vmul.f32 %v1217, %v1620
        %v1653 = vmul.f32 %v1219, %v1621
        %v1654 = vmul.f32 %v1221, %v1622
        %v1655 = vmul.f32 %v1223, %v1623
        %v1656 = vmul.f32 %v1225, %v1624
        %v1657 = vmul.f32 %v1227, %v1625
        %v1658 = vmul.f32 %v1229, %v1626
        %v1659 = vmul.f32 %v1231, %v1627
        %v1660 = vmul.f32 %v1233, %v1628
        %v1661 = vmul.f32 %v1235, %v1629
        %v1662 = vmul.f32 %v1237, %v1630
        %v1663 = vmul.f32 %v1239, %v1631
        %v1664 = vmul.f32 %v1241, %v1632
        %v1665 = vmul.f32 %v1243, %v1633
        %v1666 = vmul.f32 %v1245, %v1634
        %v1667 = vmul.f32 %v1247, %v1635
        %v1668 = vmul.f32 %v1249, %v1636
        %v1669 = vmul.f32 %v1251, %v1637
        %v1670 = vmul.f32 %v1253, %v1638
        %v1671 = vmul.f32 %v1255, %v1639
        %v1672 = vadd.f32 %v1481, %v1483
        %1673 = vadd.xlane.f32.xlu0 %v1672
        %v1674 = vpop.xlane.xlu0 %1673
        %v1675 = vadd.f32 %v1485, %v1487
        %1676 = vadd.xlane.f32.xlu0 %v1675
        %v1677 = vpop.xlane.xlu0 %1676
        %v1678 = vadd.f32 %v1489, %v1491
        %1679 = vadd.xlane.f32.xlu0 %v1678
        %v1680 = vpop.xlane.xlu0 %1679
        %v1681 = vadd.f32 %v1493, %v1495
        %1682 = vadd.xlane.f32.xlu0 %v1681
        %v1683 = vpop.xlane.xlu0 %1682
        %v1684 = vadd.f32 %v1497, %v1499
        %1685 = vadd.xlane.f32.xlu0 %v1684
        %v1686 = vpop.xlane.xlu0 %1685
        %v1687 = vadd.f32 %v1501, %v1503
        %1688 = vadd.xlane.f32.xlu0 %v1687
        %v1689 = vpop.xlane.xlu0 %1688
        %v1690 = vadd.f32 %v1505, %v1507
        %1691 = vadd.xlane.f32.xlu0 %v1690
        %v1692 = vpop.xlane.xlu0 %1691
        %v1693 = vadd.f32 %v1509, %v1511
        %1694 = vadd.xlane.f32.xlu0 %v1693
        %v1695 = vpop.xlane.xlu0 %1694
        %v1696 = vadd.f32 %v1513, %v1515
        %1697 = vadd.xlane.f32.xlu0 %v1696
        %v1698 = vpop.xlane.xlu0 %1697
        %v1699 = vadd.f32 %v1517, %v1519
        %1700 = vadd.xlane.f32.xlu0 %v1699
        %v1701 = vpop.xlane.xlu0 %1700
        %v1702 = vadd.f32 %v1521, %v1523
        %1703 = vadd.xlane.f32.xlu0 %v1702
        %v1704 = vpop.xlane.xlu0 %1703
        %v1705 = vadd.f32 %v1525, %v1527
        %1706 = vadd.xlane.f32.xlu0 %v1705
        %v1707 = vpop.xlane.xlu0 %1706
        %v1708 = vadd.f32 %v1529, %v1531
        %1709 = vadd.xlane.f32.xlu0 %v1708
        %v1710 = vpop.xlane.xlu0 %1709
        %v1711 = vadd.f32 %v1533, %v1535
        %1712 = vadd.xlane.f32.xlu0 %v1711
        %v1713 = vpop.xlane.xlu0 %1712
        %v1714 = vadd.f32 %v1537, %v1539
        %1715 = vadd.xlane.f32.xlu0 %v1714
        %v1716 = vpop.xlane.xlu0 %1715
        %v1717 = vadd.f32 %v1541, %v1543
        %1718 = vadd.xlane.f32.xlu0 %v1717
        %v1719 = vpop.xlane.xlu0 %1718
        %v1720 = vadd.f32 %v1545, %v1547
        %1721 = vadd.xlane.f32.xlu0 %v1720
        %v1722 = vpop.xlane.xlu0 %1721
        %v1723 = vadd.f32 %v1549, %v1551
        %1724 = vadd.xlane.f32.xlu0 %v1723
        %v1725 = vpop.xlane.xlu0 %1724
        %v1726 = vadd.f32 %v1553, %v1555
        %1727 = vadd.xlane.f32.xlu0 %v1726
        %v1728 = vpop.xlane.xlu0 %1727
        %v1729 = vadd.f32 %v1557, %v1559
        %1730 = vadd.xlane.f32.xlu0 %v1729
        %v1731 = vpop.xlane.xlu0 %1730
        %v1732 = vadd.f32 %v1561, %v1563
        %1733 = vadd.xlane.f32.xlu0 %v1732
        %v1734 = vpop.xlane.xlu0 %1733
        %v1735 = vadd.f32 %v1565, %v1567
        %1736 = vadd.xlane.f32.xlu0 %v1735
        %v1737 = vpop.xlane.xlu0 %1736
        %v1738 = vadd.f32 %v1569, %v1571
        %1739 = vadd.xlane.f32.xlu0 %v1738
        %v1740 = vpop.xlane.xlu0 %1739
        %v1741 = vadd.f32 %v1573, %v1575
        %1742 = vadd.xlane.f32.xlu0 %v1741
        %v1743 = vpop.xlane.xlu0 %1742
        %v1744 = vadd.f32 %v1577, %v1579
        %1745 = vadd.xlane.f32.xlu0 %v1744
        %v1746 = vpop.xlane.xlu0 %1745
        %v1747 = vadd.f32 %v1581, %v1583
        %1748 = vadd.xlane.f32.xlu0 %v1747
        %v1749 = vpop.xlane.xlu0 %1748
        %v1750 = vadd.f32 %v1585, %v1587
        %1751 = vadd.xlane.f32.xlu0 %v1750
        %v1752 = vpop.xlane.xlu0 %1751
        %v1753 = vadd.f32 %v1589, %v1591
        %1754 = vadd.xlane.f32.xlu0 %v1753
        %v1755 = vpop.xlane.xlu0 %1754
        %v1756 = vadd.f32 %v1593, %v1595
        %1757 = vadd.xlane.f32.xlu0 %v1756
        %v1758 = vpop.xlane.xlu0 %1757
        %v1759 = vadd.f32 %v1597, %v1599
        %1760 = vadd.xlane.f32.xlu0 %v1759
        %v1761 = vpop.xlane.xlu0 %1760
        %v1762 = vadd.f32 %v1601, %v1603
        %1763 = vadd.xlane.f32.xlu0 %v1762
        %v1764 = vpop.xlane.xlu0 %1763
        %v1765 = vadd.f32 %v1605, %v1607
        %1766 = vadd.xlane.f32.xlu0 %v1765
        %v1767 = vpop.xlane.xlu0 %1766
        %v1768 = vadd.f32 %v1640, %v1674
        %v1769 = vadd.f32 %v1641, %v1677
        %v1770 = vadd.f32 %v1642, %v1680
        %v1771 = vadd.f32 %v1643, %v1683
        %v1772 = vadd.f32 %v1644, %v1686
        %v1773 = vadd.f32 %v1645, %v1689
        %v1774 = vadd.f32 %v1646, %v1692
        %v1775 = vadd.f32 %v1647, %v1695
        %v1776 = vadd.f32 %v1648, %v1698
        %v1777 = vadd.f32 %v1649, %v1701
        %v1778 = vadd.f32 %v1650, %v1704
        %v1779 = vadd.f32 %v1651, %v1707
        %v1780 = vadd.f32 %v1652, %v1710
        %v1781 = vadd.f32 %v1653, %v1713
        %v1782 = vadd.f32 %v1654, %v1716
        %v1783 = vadd.f32 %v1655, %v1719
        %v1784 = vadd.f32 %v1656, %v1722
        %v1785 = vadd.f32 %v1657, %v1725
        %v1786 = vadd.f32 %v1658, %v1728
        %v1787 = vadd.f32 %v1659, %v1731
        %v1788 = vadd.f32 %v1660, %v1734
        %v1789 = vadd.f32 %v1661, %v1737
        %v1790 = vadd.f32 %v1662, %v1740
        %v1791 = vadd.f32 %v1663, %v1743
        %v1792 = vadd.f32 %v1664, %v1746
        %v1793 = vadd.f32 %v1665, %v1749
        %v1794 = vadd.f32 %v1666, %v1752
        %v1795 = vadd.f32 %v1667, %v1755
        %v1796 = vadd.f32 %v1668, %v1758
        %v1797 = vadd.f32 %v1669, %v1761
        %v1798 = vadd.f32 %v1670, %v1764
        %v1799 = vadd.f32 %v1671, %v1767
        %vm1800 = vcmask 7168
        %1801 = vst.msk [vmem:[#allocation3] sm:$0xff] %vm1800, %v1768
        %1802 = vst.msk [vmem:[#allocation3 + $0x8] sm:$0xff] %vm1800, %v1769
        %1803 = vst.msk [vmem:[#allocation3 + $0x10] sm:$0xff] %vm1800, %v1770
        %1804 = vst.msk [vmem:[#allocation3 + $0x18] sm:$0xff] %vm1800, %v1771
        %1805 = vst.msk [vmem:[#allocation3 + $0x20] sm:$0xff] %vm1800, %v1772
        %1806 = vst.msk [vmem:[#allocation3 + $0x28] sm:$0xff] %vm1800, %v1773
        %1807 = vst.msk [vmem:[#allocation3 + $0x30] sm:$0xff] %vm1800, %v1774
        %1808 = vst.msk [vmem:[#allocation3 + $0x38] sm:$0xff] %vm1800, %v1775
        %1809 = vst.msk [vmem:[#allocation3 + $0x40] sm:$0xff] %vm1800, %v1776
        %1810 = vst.msk [vmem:[#allocation3 + $0x48] sm:$0xff] %vm1800, %v1777
        %1811 = vst.msk [vmem:[#allocation3 + $0x50] sm:$0xff] %vm1800, %v1778
        %1812 = vst.msk [vmem:[#allocation3 + $0x58] sm:$0xff] %vm1800, %v1779
        %1813 = vst.msk [vmem:[#allocation3 + $0x60] sm:$0xff] %vm1800, %v1780
        %1814 = vst.msk [vmem:[#allocation3 + $0x68] sm:$0xff] %vm1800, %v1781
        %1815 = vst.msk [vmem:[#allocation3 + $0x70] sm:$0xff] %vm1800, %v1782
        %1816 = vst.msk [vmem:[#allocation3 + $0x78] sm:$0xff] %vm1800, %v1783
        %1817 = vst.msk [vmem:[#allocation3 + $0x80] sm:$0xff] %vm1800, %v1784
        %1818 = vst.msk [vmem:[#allocation3 + $0x88] sm:$0xff] %vm1800, %v1785
        %1819 = vst.msk [vmem:[#allocation3 + $0x90] sm:$0xff] %vm1800, %v1786
        %1820 = vst.msk [vmem:[#allocation3 + $0x98] sm:$0xff] %vm1800, %v1787
        %1821 = vst.msk [vmem:[#allocation3 + $0xa0] sm:$0xff] %vm1800, %v1788
        %1822 = vst.msk [vmem:[#allocation3 + $0xa8] sm:$0xff] %vm1800, %v1789
        %1823 = vst.msk [vmem:[#allocation3 + $0xb0] sm:$0xff] %vm1800, %v1790
        %1824 = vst.msk [vmem:[#allocation3 + $0xb8] sm:$0xff] %vm1800, %v1791
        %1825 = vst.msk [vmem:[#allocation3 + $0xc0] sm:$0xff] %vm1800, %v1792
        %1826 = vst.msk [vmem:[#allocation3 + $0xc8] sm:$0xff] %vm1800, %v1793
        %1827 = vst.msk [vmem:[#allocation3 + $0xd0] sm:$0xff] %vm1800, %v1794
        %1828 = vst.msk [vmem:[#allocation3 + $0xd8] sm:$0xff] %vm1800, %v1795
        %1829 = vst.msk [vmem:[#allocation3 + $0xe0] sm:$0xff] %vm1800, %v1796
        %1830 = vst.msk [vmem:[#allocation3 + $0xe8] sm:$0xff] %vm1800, %v1797
        %1831 = vst.msk [vmem:[#allocation3 + $0xf0] sm:$0xff] %vm1800, %v1798
        %1832 = vst.msk [vmem:[#allocation3 + $0xf8] sm:$0xff] %vm1800, %v1799
        %1833 = vst.msk [vmem:[#allocation2] sm:$0xff] %vm1800, %v1128
        %1834 = vst.msk [vmem:[#allocation2 + $0x8] sm:$0xff] %vm1800, %v1129
        %1835 = vst.msk [vmem:[#allocation2 + $0x10] sm:$0xff] %vm1800, %v1130
        %1836 = vst.msk [vmem:[#allocation2 + $0x18] sm:$0xff] %vm1800, %v1131
        %1837 = vst.msk [vmem:[#allocation2 + $0x20] sm:$0xff] %vm1800, %v1132
        %1838 = vst.msk [vmem:[#allocation2 + $0x28] sm:$0xff] %vm1800, %v1133
        %1839 = vst.msk [vmem:[#allocation2 + $0x30] sm:$0xff] %vm1800, %v1134
        %1840 = vst.msk [vmem:[#allocation2 + $0x38] sm:$0xff] %vm1800, %v1135
        %1841 = vst.msk [vmem:[#allocation2 + $0x40] sm:$0xff] %vm1800, %v1136
        %1842 = vst.msk [vmem:[#allocation2 + $0x48] sm:$0xff] %vm1800, %v1137
        %1843 = vst.msk [vmem:[#allocation2 + $0x50] sm:$0xff] %vm1800, %v1138
        %1844 = vst.msk [vmem:[#allocation2 + $0x58] sm:$0xff] %vm1800, %v1139
        %1845 = vst.msk [vmem:[#allocation2 + $0x60] sm:$0xff] %vm1800, %v1140
        %1846 = vst.msk [vmem:[#allocation2 + $0x68] sm:$0xff] %vm1800, %v1141
        %1847 = vst.msk [vmem:[#allocation2 + $0x70] sm:$0xff] %vm1800, %v1142
        %1848 = vst.msk [vmem:[#allocation2 + $0x78] sm:$0xff] %vm1800, %v1143
        %1849 = vst.msk [vmem:[#allocation2 + $0x80] sm:$0xff] %vm1800, %v1144
        %1850 = vst.msk [vmem:[#allocation2 + $0x88] sm:$0xff] %vm1800, %v1145
        %1851 = vst.msk [vmem:[#allocation2 + $0x90] sm:$0xff] %vm1800, %v1146
        %1852 = vst.msk [vmem:[#allocation2 + $0x98] sm:$0xff] %vm1800, %v1147
        %1853 = vst.msk [vmem:[#allocation2 + $0xa0] sm:$0xff] %vm1800, %v1148
        %1854 = vst.msk [vmem:[#allocation2 + $0xa8] sm:$0xff] %vm1800, %v1149
        %1855 = vst.msk [vmem:[#allocation2 + $0xb0] sm:$0xff] %vm1800, %v1150
        %1856 = vst.msk [vmem:[#allocation2 + $0xb8] sm:$0xff] %vm1800, %v1151
        %1857 = vst.msk [vmem:[#allocation2 + $0xc0] sm:$0xff] %vm1800, %v1152
        %1858 = vst.msk [vmem:[#allocation2 + $0xc8] sm:$0xff] %vm1800, %v1153
        %1859 = vst.msk [vmem:[#allocation2 + $0xd0] sm:$0xff] %vm1800, %v1154
        %1860 = vst.msk [vmem:[#allocation2 + $0xd8] sm:$0xff] %vm1800, %v1155
        %1861 = vst.msk [vmem:[#allocation2 + $0xe0] sm:$0xff] %vm1800, %v1156
        %1862 = vst.msk [vmem:[#allocation2 + $0xe8] sm:$0xff] %vm1800, %v1157
        %1863 = vst.msk [vmem:[#allocation2 + $0xf0] sm:$0xff] %vm1800, %v1158
        %1864 = vst.msk [vmem:[#allocation2 + $0xf8] sm:$0xff] %vm1800, %v1159
        %v1865 = vld [vmem:[%s335] sm:$0xff]
        %v1866 = vld [vmem:[%s335 + $0x8] sm:$0xff]
        %v1867 = vld [vmem:[%s335 + $0x10] sm:$0xff]
        %v1868 = vld [vmem:[%s335 + $0x18] sm:$0xff]
        %v1869 = vld [vmem:[%s335 + $0x20] sm:$0xff]
        %v1870 = vld [vmem:[%s335 + $0x28] sm:$0xff]
        %v1871 = vld [vmem:[%s335 + $0x30] sm:$0xff]
        %v1872 = vld [vmem:[%s335 + $0x38] sm:$0xff]
        %v1873 = vld [vmem:[%s335 + $0x40] sm:$0xff]
        %v1874 = vld [vmem:[%s335 + $0x48] sm:$0xff]
        %v1875 = vld [vmem:[%s335 + $0x50] sm:$0xff]
        %v1876 = vld [vmem:[%s335 + $0x58] sm:$0xff]
        %v1877 = vld [vmem:[%s335 + $0x60] sm:$0xff]
        %v1878 = vld [vmem:[%s335 + $0x68] sm:$0xff]
        %v1879 = vld [vmem:[%s335 + $0x70] sm:$0xff]
        %v1880 = vld [vmem:[%s335 + $0x78] sm:$0xff]
        %v1881 = vld [vmem:[%s335 + $0x80] sm:$0xff]
        %v1882 = vld [vmem:[%s335 + $0x88] sm:$0xff]
        %v1883 = vld [vmem:[%s335 + $0x90] sm:$0xff]
        %v1884 = vld [vmem:[%s335 + $0x98] sm:$0xff]
        %v1885 = vld [vmem:[%s335 + $0xa0] sm:$0xff]
        %v1886 = vld [vmem:[%s335 + $0xa8] sm:$0xff]
        %v1887 = vld [vmem:[%s335 + $0xb0] sm:$0xff]
        %v1888 = vld [vmem:[%s335 + $0xb8] sm:$0xff]
        %v1889 = vld [vmem:[%s335 + $0xc0] sm:$0xff]
        %v1890 = vld [vmem:[%s335 + $0xc8] sm:$0xff]
        %v1891 = vld [vmem:[%s335 + $0xd0] sm:$0xff]
        %v1892 = vld [vmem:[%s335 + $0xd8] sm:$0xff]
        %v1893 = vld [vmem:[%s335 + $0xe0] sm:$0xff]
        %v1894 = vld [vmem:[%s335 + $0xe8] sm:$0xff]
        %v1895 = vld [vmem:[%s335 + $0xf0] sm:$0xff]
        %v1896 = vld [vmem:[%s335 + $0xf8] sm:$0xff]
        %1897 = vmatprep.subr.mxu0 0.0
        %1898 = vmatpush1.msra.mxu0 %v1865
        %1899 = vmatprep.subr.mxu0 0.0
        %1900 = vmatpush1.msra.mxu0 %v1866
        %1901 = vmatprep.subr.mxu0 0.0
        %1902 = vmatpush1.msra.mxu0 %v1867
        %1903 = vmatprep.subr.mxu0 0.0
        %1904 = vmatpush1.msra.mxu0 %v1868
        %1905 = vmatprep.subr.mxu0 0.0
        %1906 = vmatpush1.msra.mxu0 %v1869
        %1907 = vmatprep.subr.mxu0 0.0
        %1908 = vmatpush1.msra.mxu0 %v1870
        %1909 = vmatprep.subr.mxu0 0.0
        %1910 = vmatpush1.msra.mxu0 %v1871
        %1911 = vmatprep.subr.mxu0 0.0
        %1912 = vmatpush1.msra.mxu0 %v1872
        %1913 = vmatprep.subr.mxu0 0.0
        %1914 = vmatpush1.msra.mxu0 %v1873
        %1915 = vmatprep.subr.mxu0 0.0
        %1916 = vmatpush1.msra.mxu0 %v1874
        %1917 = vmatprep.subr.mxu0 0.0
        %1918 = vmatpush1.msra.mxu0 %v1875
        %1919 = vmatprep.subr.mxu0 0.0
        %1920 = vmatpush1.msra.mxu0 %v1876
        %1921 = vmatprep.subr.mxu0 0.0
        %1922 = vmatpush1.msra.mxu0 %v1877
        %1923 = vmatprep.subr.mxu0 0.0
        %1924 = vmatpush1.msra.mxu0 %v1878
        %1925 = vmatprep.subr.mxu0 0.0
        %1926 = vmatpush1.msra.mxu0 %v1879
        %1927 = vmatprep.subr.mxu0 0.0
        %1928 = vmatpush1.msra.mxu0 %v1880
        %1929 = vmatprep.subr.mxu0 0.0
        %1930 = vmatpush1.msra.mxu0 %v1881
        %1931 = vmatprep.subr.mxu0 0.0
        %1932 = vmatpush1.msra.mxu0 %v1882
        %1933 = vmatprep.subr.mxu0 0.0
        %1934 = vmatpush1.msra.mxu0 %v1883
        %1935 = vmatprep.subr.mxu0 0.0
        %1936 = vmatpush1.msra.mxu0 %v1884
        %1937 = vmatprep.subr.mxu0 0.0
        %1938 = vmatpush1.msra.mxu0 %v1885
        %1939 = vmatprep.subr.mxu0 0.0
        %1940 = vmatpush1.msra.mxu0 %v1886
        %1941 = vmatprep.subr.mxu0 0.0
        %1942 = vmatpush1.msra.mxu0 %v1887
        %1943 = vmatprep.subr.mxu0 0.0
        %1944 = vmatpush1.msra.mxu0 %v1888
        %1945 = vmatprep.subr.mxu0 0.0
        %1946 = vmatpush1.msra.mxu0 %v1889
        %1947 = vmatprep.subr.mxu0 0.0
        %1948 = vmatpush1.msra.mxu0 %v1890
        %1949 = vmatprep.subr.mxu0 0.0
        %1950 = vmatpush1.msra.mxu0 %v1891
        %1951 = vmatprep.subr.mxu0 0.0
        %1952 = vmatpush1.msra.mxu0 %v1892
        %1953 = vmatprep.subr.mxu0 0.0
        %1954 = vmatpush1.msra.mxu0 %v1893
        %1955 = vmatprep.subr.mxu0 0.0
        %1956 = vmatpush1.msra.mxu0 %v1894
        %1957 = vmatprep.subr.mxu0 0.0
        %1958 = vmatpush1.msra.mxu0 %v1895
        %1959 = vmatprep.subr.mxu0 0.0
        %1960 = vmatpush1.msra.mxu0 %v1896
        %1961 = vmatprep.mubr.f32.mxu0 %v1483
        %1962 = vmatmul.mubr.f32.gmra.mrb[0].mxu0 %v1481
        %v1963 = vpop.f32.mrb[0].mxu0
        %v1964 = vadd.f32 0.0, %v1963
        %v1965 = vpop.f32.mrb[0].mxu0
        %1966 = vmatprep.mubr.f32.mxu0 %v1487
        %1967 = vmatmul.mubr.f32.gmra.mrb[0].mxu0 %v1485
        %v1968 = vpop.f32.mrb[0].mxu0
        %v1969 = vadd.f32 0.0, %v1968
        %v1970 = vpop.f32.mrb[0].mxu0
        %1971 = vmatprep.mubr.f32.mxu0 %v1491
        %1972 = vmatmul.mubr.f32.gmra.mrb[0].mxu0 %v1489
        %v1973 = vpop.f32.mrb[0].mxu0
        %v1974 = vadd.f32 0.0, %v1973
        %v1975 = vpop.f32.mrb[0].mxu0
        %1976 = vmatprep.mubr.f32.mxu0 %v1495
        %1977 = vmatmul.mubr.f32.gmra.mrb[0].mxu0 %v1493
        %v1978 = vpop.f32.mrb[0].mxu0
        %v1979 = vadd.f32 0.0, %v1978
        %v1980 = vpop.f32.mrb[0].mxu0
        %1981 = vmatprep.mubr.f32.mxu0 %v1499
        %1982 = vmatmul.mubr.f32.gmra.mrb[0].mxu0 %v1497
        %v1983 = vpop.f32.mrb[0].mxu0
        %v1984 = vadd.f32 0.0, %v1983
        %v1985 = vpop.f32.mrb[0].mxu0
        %1986 = vmatprep.mubr.f32.mxu0 %v1503
        %1987 = vmatmul.mubr.f32.gmra.mrb[0].mxu0 %v1501
        %v1988 = vpop.f32.mrb[0].mxu0
        %v1989 = vadd.f32 0.0, %v1988
        %v1990 = vpop.f32.mrb[0].mxu0
        %1991 = vmatprep.mubr.f32.mxu0 %v1507
        %1992 = vmatmul.mubr.f32.gmra.mrb[0].mxu0 %v1505
        %v1993 = vpop.f32.mrb[0].mxu0
        %v1994 = vadd.f32 0.0, %v1993
        %v1995 = vpop.f32.mrb[0].mxu0
        %1996 = vmatprep.mubr.f32.mxu0 %v1511
        %1997 = vmatmul.mubr.f32.gmra.mrb[0].mxu0 %v1509
        %v1998 = vpop.f32.mrb[0].mxu0
        %v1999 = vadd.f32 0.0, %v1998
        %v2000 = vpop.f32.mrb[0].mxu0
        %2001 = vmatprep.mubr.f32.mxu0 %v1515
        %2002 = vmatmul.mubr.f32.gmra.mrb[0].mxu0 %v1513
        %v2003 = vpop.f32.mrb[0].mxu0
        %v2004 = vadd.f32 0.0, %v2003
        %v2005 = vpop.f32.mrb[0].mxu0
        %2006 = vmatprep.mubr.f32.mxu0 %v1519
        %2007 = vmatmul.mubr.f32.gmra.mrb[0].mxu0 %v1517
        %v2008 = vpop.f32.mrb[0].mxu0
        %v2009 = vadd.f32 0.0, %v2008
        %v2010 = vpop.f32.mrb[0].mxu0
        %2011 = vmatprep.mubr.f32.mxu0 %v1523
        %2012 = vmatmul.mubr.f32.gmra.mrb[0].mxu0 %v1521
        %v2013 = vpop.f32.mrb[0].mxu0
        %v2014 = vadd.f32 0.0, %v2013
        %v2015 = vpop.f32.mrb[0].mxu0
        %2016 = vmatprep.mubr.f32.mxu0 %v1527
        %2017 = vmatmul.mubr.f32.gmra.mrb[0].mxu0 %v1525
        %v2018 = vpop.f32.mrb[0].mxu0
        %v2019 = vadd.f32 0.0, %v2018
        %v2020 = vpop.f32.mrb[0].mxu0
        %2021 = vmatprep.mubr.f32.mxu0 %v1531
        %2022 = vmatmul.mubr.f32.gmra.mrb[0].mxu0 %v1529
        %v2023 = vpop.f32.mrb[0].mxu0
        %v2024 = vadd.f32 0.0, %v2023
        %v2025 = vpop.f32.mrb[0].mxu0
        %2026 = vmatprep.mubr.f32.mxu0 %v1535
        %2027 = vmatmul.mubr.f32.gmra.mrb[0].mxu0 %v1533
        %v2028 = vpop.f32.mrb[0].mxu0
        %v2029 = vadd.f32 0.0, %v2028
        %v2030 = vpop.f32.mrb[0].mxu0
        %2031 = vmatprep.mubr.f32.mxu0 %v1539
        %2032 = vmatmul.mubr.f32.gmra.mrb[0].mxu0 %v1537
        %v2033 = vpop.f32.mrb[0].mxu0
        %v2034 = vadd.f32 0.0, %v2033
        %v2035 = vpop.f32.mrb[0].mxu0
        %2036 = vmatprep.mubr.f32.mxu0 %v1543
        %2037 = vmatmul.mubr.f32.gmra.mrb[0].mxu0 %v1541
        %v2038 = vpop.f32.mrb[0].mxu0
        %v2039 = vadd.f32 0.0, %v2038
        %v2040 = vpop.f32.mrb[0].mxu0
        %2041 = vmatprep.mubr.f32.mxu0 %v1547
        %2042 = vmatmul.mubr.f32.gmra.mrb[0].mxu0 %v1545
        %v2043 = vpop.f32.mrb[0].mxu0
        %v2044 = vadd.f32 0.0, %v2043
        %v2045 = vpop.f32.mrb[0].mxu0
        %2046 = vmatprep.mubr.f32.mxu0 %v1551
        %2047 = vmatmul.mubr.f32.gmra.mrb[0].mxu0 %v1549
        %v2048 = vpop.f32.mrb[0].mxu0
        %v2049 = vadd.f32 0.0, %v2048
        %v2050 = vpop.f32.mrb[0].mxu0
        %2051 = vmatprep.mubr.f32.mxu0 %v1555
        %2052 = vmatmul.mubr.f32.gmra.mrb[0].mxu0 %v1553
        %v2053 = vpop.f32.mrb[0].mxu0
        %v2054 = vadd.f32 0.0, %v2053
        %v2055 = vpop.f32.mrb[0].mxu0
        %2056 = vmatprep.mubr.f32.mxu0 %v1559
        %2057 = vmatmul.mubr.f32.gmra.mrb[0].mxu0 %v1557
        %v2058 = vpop.f32.mrb[0].mxu0
        %v2059 = vadd.f32 0.0, %v2058
        %v2060 = vpop.f32.mrb[0].mxu0
        %2061 = vmatprep.mubr.f32.mxu0 %v1563
        %2062 = vmatmul.mubr.f32.gmra.mrb[0].mxu0 %v1561
        %v2063 = vpop.f32.mrb[0].mxu0
        %v2064 = vadd.f32 0.0, %v2063
        %v2065 = vpop.f32.mrb[0].mxu0
        %2066 = vmatprep.mubr.f32.mxu0 %v1567
        %2067 = vmatmul.mubr.f32.gmra.mrb[0].mxu0 %v1565
        %v2068 = vpop.f32.mrb[0].mxu0
        %v2069 = vadd.f32 0.0, %v2068
        %v2070 = vpop.f32.mrb[0].mxu0
        %2071 = vmatprep.mubr.f32.mxu0 %v1571
        %2072 = vmatmul.mubr.f32.gmra.mrb[0].mxu0 %v1569
        %v2073 = vpop.f32.mrb[0].mxu0
        %v2074 = vadd.f32 0.0, %v2073
        %v2075 = vpop.f32.mrb[0].mxu0
        %2076 = vmatprep.mubr.f32.mxu0 %v1575
        %2077 = vmatmul.mubr.f32.gmra.mrb[0].mxu0 %v1573
        %v2078 = vpop.f32.mrb[0].mxu0
        %v2079 = vadd.f32 0.0, %v2078
        %v2080 = vpop.f32.mrb[0].mxu0
        %2081 = vmatprep.mubr.f32.mxu0 %v1579
        %2082 = vmatmul.mubr.f32.gmra.mrb[0].mxu0 %v1577
        %v2083 = vpop.f32.mrb[0].mxu0
        %v2084 = vadd.f32 0.0, %v2083
        %v2085 = vpop.f32.mrb[0].mxu0
        %2086 = vmatprep.mubr.f32.mxu0 %v1583
        %2087 = vmatmul.mubr.f32.gmra.mrb[0].mxu0 %v1581
        %v2088 = vpop.f32.mrb[0].mxu0
        %v2089 = vadd.f32 0.0, %v2088
        %v2090 = vpop.f32.mrb[0].mxu0
        %2091 = vmatprep.mubr.f32.mxu0 %v1587
        %2092 = vmatmul.mubr.f32.gmra.mrb[0].mxu0 %v1585
        %v2093 = vpop.f32.mrb[0].mxu0
        %v2094 = vadd.f32 0.0, %v2093
        %v2095 = vpop.f32.mrb[0].mxu0
        %2096 = vmatprep.mubr.f32.mxu0 %v1591
        %2097 = vmatmul.mubr.f32.gmra.mrb[0].mxu0 %v1589
        %v2098 = vpop.f32.mrb[0].mxu0
        %v2099 = vadd.f32 0.0, %v2098
        %v2100 = vpop.f32.mrb[0].mxu0
        %2101 = vmatprep.mubr.f32.mxu0 %v1595
        %2102 = vmatmul.mubr.f32.gmra.mrb[0].mxu0 %v1593
        %v2103 = vpop.f32.mrb[0].mxu0
        %v2104 = vadd.f32 0.0, %v2103
        %v2105 = vpop.f32.mrb[0].mxu0
        %2106 = vmatprep.mubr.f32.mxu0 %v1599
        %2107 = vmatmul.mubr.f32.gmra.mrb[0].mxu0 %v1597
        %v2108 = vpop.f32.mrb[0].mxu0
        %v2109 = vadd.f32 0.0, %v2108
        %v2110 = vpop.f32.mrb[0].mxu0
        %2111 = vmatprep.mubr.f32.mxu0 %v1603
        %2112 = vmatmul.mubr.f32.gmra.mrb[0].mxu0 %v1601
        %v2113 = vpop.f32.mrb[0].mxu0
        %v2114 = vadd.f32 0.0, %v2113
        %v2115 = vpop.f32.mrb[0].mxu0
        %2116 = vmatprep.mubr.f32.mxu0 %v1607
        %2117 = vmatmul.mubr.f32.gmra.mrb[0].mxu0 %v1605
        %v2118 = vpop.f32.mrb[0].mxu0
        %v2119 = vadd.f32 0.0, %v2118
        %v2120 = vpop.f32.mrb[0].mxu0
        %2121 = vdwg.mxu0
        %v2122 = vld [vmem:[#allocation4] sm:$0xff]
        %v2123 = vld [vmem:[#allocation4 + $0x8] sm:$0xff]
        %v2124 = vld [vmem:[#allocation4 + $0x10] sm:$0xff]
        %v2125 = vld [vmem:[#allocation4 + $0x18] sm:$0xff]
        %v2126 = vld [vmem:[#allocation4 + $0x20] sm:$0xff]
        %v2127 = vld [vmem:[#allocation4 + $0x28] sm:$0xff]
        %v2128 = vld [vmem:[#allocation4 + $0x30] sm:$0xff]
        %v2129 = vld [vmem:[#allocation4 + $0x38] sm:$0xff]
        %v2130 = vld [vmem:[#allocation4 + $0x40] sm:$0xff]
        %v2131 = vld [vmem:[#allocation4 + $0x48] sm:$0xff]
        %v2132 = vld [vmem:[#allocation4 + $0x50] sm:$0xff]
        %v2133 = vld [vmem:[#allocation4 + $0x58] sm:$0xff]
        %v2134 = vld [vmem:[#allocation4 + $0x60] sm:$0xff]
        %v2135 = vld [vmem:[#allocation4 + $0x68] sm:$0xff]
        %v2136 = vld [vmem:[#allocation4 + $0x70] sm:$0xff]
        %v2137 = vld [vmem:[#allocation4 + $0x78] sm:$0xff]
        %v2138 = vld [vmem:[#allocation4 + $0x80] sm:$0xff]
        %v2139 = vld [vmem:[#allocation4 + $0x88] sm:$0xff]
        %v2140 = vld [vmem:[#allocation4 + $0x90] sm:$0xff]
        %v2141 = vld [vmem:[#allocation4 + $0x98] sm:$0xff]
        %v2142 = vld [vmem:[#allocation4 + $0xa0] sm:$0xff]
        %v2143 = vld [vmem:[#allocation4 + $0xa8] sm:$0xff]
        %v2144 = vld [vmem:[#allocation4 + $0xb0] sm:$0xff]
        %v2145 = vld [vmem:[#allocation4 + $0xb8] sm:$0xff]
        %v2146 = vld [vmem:[#allocation4 + $0xc0] sm:$0xff]
        %v2147 = vld [vmem:[#allocation4 + $0xc8] sm:$0xff]
        %v2148 = vld [vmem:[#allocation4 + $0xd0] sm:$0xff]
        %v2149 = vld [vmem:[#allocation4 + $0xd8] sm:$0xff]
        %v2150 = vld [vmem:[#allocation4 + $0xe0] sm:$0xff]
        %v2151 = vld [vmem:[#allocation4 + $0xe8] sm:$0xff]
        %v2152 = vld [vmem:[#allocation4 + $0xf0] sm:$0xff]
        %v2153 = vld [vmem:[#allocation4 + $0xf8] sm:$0xff]
        %2155 = vset.pattern.permute.xlu0 0
        %2156 = vperm.xlu0 %2155, %v1193
        %v2157 = vpop.permute.xlu0 %2156
        %2160 = vset.pattern.permute.xlu0 0
        %2161 = vperm.xlu0 %2160, %v1195
        %v2162 = vpop.permute.xlu0 %2161
        %2165 = vset.pattern.permute.xlu0 0
        %2166 = vperm.xlu0 %2165, %v1197
        %v2167 = vpop.permute.xlu0 %2166
        %2170 = vset.pattern.permute.xlu0 0
        %2171 = vperm.xlu0 %2170, %v1199
        %v2172 = vpop.permute.xlu0 %2171
        %2175 = vset.pattern.permute.xlu0 0
        %2176 = vperm.xlu0 %2175, %v1201
        %v2177 = vpop.permute.xlu0 %2176
        %2180 = vset.pattern.permute.xlu0 0
        %2181 = vperm.xlu0 %2180, %v1203
        %v2182 = vpop.permute.xlu0 %2181
        %2185 = vset.pattern.permute.xlu0 0
        %2186 = vperm.xlu0 %2185, %v1205
        %v2187 = vpop.permute.xlu0 %2186
        %2190 = vset.pattern.permute.xlu0 0
        %2191 = vperm.xlu0 %2190, %v1207
        %v2192 = vpop.permute.xlu0 %2191
        %2195 = vset.pattern.permute.xlu0 0
        %2196 = vperm.xlu0 %2195, %v1209
        %v2197 = vpop.permute.xlu0 %2196
        %2200 = vset.pattern.permute.xlu0 0
        %2201 = vperm.xlu0 %2200, %v1211
        %v2202 = vpop.permute.xlu0 %2201
        %2205 = vset.pattern.permute.xlu0 0
        %2206 = vperm.xlu0 %2205, %v1213
        %v2207 = vpop.permute.xlu0 %2206
        %2210 = vset.pattern.permute.xlu0 0
        %2211 = vperm.xlu0 %2210, %v1215
        %v2212 = vpop.permute.xlu0 %2211
        %2215 = vset.pattern.permute.xlu0 0
        %2216 = vperm.xlu0 %2215, %v1217
        %v2217 = vpop.permute.xlu0 %2216
        %2220 = vset.pattern.permute.xlu0 0
        %2221 = vperm.xlu0 %2220, %v1219
        %v2222 = vpop.permute.xlu0 %2221
        %2225 = vset.pattern.permute.xlu0 0
        %2226 = vperm.xlu0 %2225, %v1221
        %v2227 = vpop.permute.xlu0 %2226
        %2230 = vset.pattern.permute.xlu0 0
        %2231 = vperm.xlu0 %2230, %v1223
        %v2232 = vpop.permute.xlu0 %2231
        %2235 = vset.pattern.permute.xlu0 0
        %2236 = vperm.xlu0 %2235, %v1225
        %v2237 = vpop.permute.xlu0 %2236
        %2240 = vset.pattern.permute.xlu0 0
        %2241 = vperm.xlu0 %2240, %v1227
        %v2242 = vpop.permute.xlu0 %2241
        %2245 = vset.pattern.permute.xlu0 0
        %2246 = vperm.xlu0 %2245, %v1229
        %v2247 = vpop.permute.xlu0 %2246
        %2250 = vset.pattern.permute.xlu0 0
        %2251 = vperm.xlu0 %2250, %v1231
        %v2252 = vpop.permute.xlu0 %2251
        %2255 = vset.pattern.permute.xlu0 0
        %2256 = vperm.xlu0 %2255, %v1233
        %v2257 = vpop.permute.xlu0 %2256
        %2260 = vset.pattern.permute.xlu0 0
        %2261 = vperm.xlu0 %2260, %v1235
        %v2262 = vpop.permute.xlu0 %2261
        %2265 = vset.pattern.permute.xlu0 0
        %2266 = vperm.xlu0 %2265, %v1237
        %v2267 = vpop.permute.xlu0 %2266
        %2270 = vset.pattern.permute.xlu0 0
        %2271 = vperm.xlu0 %2270, %v1239
        %v2272 = vpop.permute.xlu0 %2271
        %2275 = vset.pattern.permute.xlu0 0
        %2276 = vperm.xlu0 %2275, %v1241
        %v2277 = vpop.permute.xlu0 %2276
        %2280 = vset.pattern.permute.xlu0 0
        %2281 = vperm.xlu0 %2280, %v1243
        %v2282 = vpop.permute.xlu0 %2281
        %2285 = vset.pattern.permute.xlu0 0
        %2286 = vperm.xlu0 %2285, %v1245
        %v2287 = vpop.permute.xlu0 %2286
        %2290 = vset.pattern.permute.xlu0 0
        %2291 = vperm.xlu0 %2290, %v1247
        %v2292 = vpop.permute.xlu0 %2291
        %2295 = vset.pattern.permute.xlu0 0
        %2296 = vperm.xlu0 %2295, %v1249
        %v2297 = vpop.permute.xlu0 %2296
        %2300 = vset.pattern.permute.xlu0 0
        %2301 = vperm.xlu0 %2300, %v1251
        %v2302 = vpop.permute.xlu0 %2301
        %2305 = vset.pattern.permute.xlu0 0
        %2306 = vperm.xlu0 %2305, %v1253
        %v2307 = vpop.permute.xlu0 %2306
        %2310 = vset.pattern.permute.xlu0 0
        %2311 = vperm.xlu0 %2310, %v1255
        %v2312 = vpop.permute.xlu0 %2311
        %v2314 = vmul.f32 %v2157, %v2122
        %v2315 = vmul.f32 %v2162, %v2123
        %v2316 = vmul.f32 %v2167, %v2124
        %v2317 = vmul.f32 %v2172, %v2125
        %v2318 = vmul.f32 %v2177, %v2126
        %v2319 = vmul.f32 %v2182, %v2127
        %v2320 = vmul.f32 %v2187, %v2128
        %v2321 = vmul.f32 %v2192, %v2129
        %v2322 = vmul.f32 %v2197, %v2130
        %v2323 = vmul.f32 %v2202, %v2131
        %v2324 = vmul.f32 %v2207, %v2132
        %v2325 = vmul.f32 %v2212, %v2133
        %v2326 = vmul.f32 %v2217, %v2134
        %v2327 = vmul.f32 %v2222, %v2135
        %v2328 = vmul.f32 %v2227, %v2136
        %v2329 = vmul.f32 %v2232, %v2137
        %v2330 = vmul.f32 %v2237, %v2138
        %v2331 = vmul.f32 %v2242, %v2139
        %v2332 = vmul.f32 %v2247, %v2140
        %v2333 = vmul.f32 %v2252, %v2141
        %v2334 = vmul.f32 %v2257, %v2142
        %v2335 = vmul.f32 %v2262, %v2143
        %v2336 = vmul.f32 %v2267, %v2144
        %v2337 = vmul.f32 %v2272, %v2145
        %v2338 = vmul.f32 %v2277, %v2146
        %v2339 = vmul.f32 %v2282, %v2147
        %v2340 = vmul.f32 %v2287, %v2148
        %v2341 = vmul.f32 %v2292, %v2149
        %v2342 = vmul.f32 %v2297, %v2150
        %v2343 = vmul.f32 %v2302, %v2151
        %v2344 = vmul.f32 %v2307, %v2152
        %v2345 = vmul.f32 %v2312, %v2153
        %v2346 = vadd.f32 %v2314, %v1964
        %v2347 = vadd.f32 %v2315, %v1969
        %v2348 = vadd.f32 %v2316, %v1974
        %v2349 = vadd.f32 %v2317, %v1979
        %v2350 = vadd.f32 %v2318, %v1984
        %v2351 = vadd.f32 %v2319, %v1989
        %v2352 = vadd.f32 %v2320, %v1994
        %v2353 = vadd.f32 %v2321, %v1999
        %v2354 = vadd.f32 %v2322, %v2004
        %v2355 = vadd.f32 %v2323, %v2009
        %v2356 = vadd.f32 %v2324, %v2014
        %v2357 = vadd.f32 %v2325, %v2019
        %v2358 = vadd.f32 %v2326, %v2024
        %v2359 = vadd.f32 %v2327, %v2029
        %v2360 = vadd.f32 %v2328, %v2034
        %v2361 = vadd.f32 %v2329, %v2039
        %v2362 = vadd.f32 %v2330, %v2044
        %v2363 = vadd.f32 %v2331, %v2049
        %v2364 = vadd.f32 %v2332, %v2054
        %v2365 = vadd.f32 %v2333, %v2059
        %v2366 = vadd.f32 %v2334, %v2064
        %v2367 = vadd.f32 %v2335, %v2069
        %v2368 = vadd.f32 %v2336, %v2074
        %v2369 = vadd.f32 %v2337, %v2079
        %v2370 = vadd.f32 %v2338, %v2084
        %v2371 = vadd.f32 %v2339, %v2089
        %v2372 = vadd.f32 %v2340, %v2094
        %v2373 = vadd.f32 %v2341, %v2099
        %v2374 = vadd.f32 %v2342, %v2104
        %v2375 = vadd.f32 %v2343, %v2109
        %v2376 = vadd.f32 %v2344, %v2114
        %v2377 = vadd.f32 %v2345, %v2119
        %2378 = vst.msk [vmem:[#allocation4] sm:$0xff] %vm550, %v2346
        %2379 = vst.msk [vmem:[#allocation4 + $0x8] sm:$0xff] %vm550, %v2347
        %2380 = vst.msk [vmem:[#allocation4 + $0x10] sm:$0xff] %vm550, %v2348
        %2381 = vst.msk [vmem:[#allocation4 + $0x18] sm:$0xff] %vm550, %v2349
        %2382 = vst.msk [vmem:[#allocation4 + $0x20] sm:$0xff] %vm550, %v2350
        %2383 = vst.msk [vmem:[#allocation4 + $0x28] sm:$0xff] %vm550, %v2351
        %2384 = vst.msk [vmem:[#allocation4 + $0x30] sm:$0xff] %vm550, %v2352
        %2385 = vst.msk [vmem:[#allocation4 + $0x38] sm:$0xff] %vm550, %v2353
        %2386 = vst.msk [vmem:[#allocation4 + $0x40] sm:$0xff] %vm550, %v2354
        %2387 = vst.msk [vmem:[#allocation4 + $0x48] sm:$0xff] %vm550, %v2355
        %2388 = vst.msk [vmem:[#allocation4 + $0x50] sm:$0xff] %vm550, %v2356
        %2389 = vst.msk [vmem:[#allocation4 + $0x58] sm:$0xff] %vm550, %v2357
        %2390 = vst.msk [vmem:[#allocation4 + $0x60] sm:$0xff] %vm550, %v2358
        %2391 = vst.msk [vmem:[#allocation4 + $0x68] sm:$0xff] %vm550, %v2359
        %2392 = vst.msk [vmem:[#allocation4 + $0x70] sm:$0xff] %vm550, %v2360
        %2393 = vst.msk [vmem:[#allocation4 + $0x78] sm:$0xff] %vm550, %v2361
        %2394 = vst.msk [vmem:[#allocation4 + $0x80] sm:$0xff] %vm550, %v2362
        %2395 = vst.msk [vmem:[#allocation4 + $0x88] sm:$0xff] %vm550, %v2363
        %2396 = vst.msk [vmem:[#allocation4 + $0x90] sm:$0xff] %vm550, %v2364
        %2397 = vst.msk [vmem:[#allocation4 + $0x98] sm:$0xff] %vm550, %v2365
        %2398 = vst.msk [vmem:[#allocation4 + $0xa0] sm:$0xff] %vm550, %v2366
        %2399 = vst.msk [vmem:[#allocation4 + $0xa8] sm:$0xff] %vm550, %v2367
        %2400 = vst.msk [vmem:[#allocation4 + $0xb0] sm:$0xff] %vm550, %v2368
        %2401 = vst.msk [vmem:[#allocation4 + $0xb8] sm:$0xff] %vm550, %v2369
        %2402 = vst.msk [vmem:[#allocation4 + $0xc0] sm:$0xff] %vm550, %v2370
        %2403 = vst.msk [vmem:[#allocation4 + $0xc8] sm:$0xff] %vm550, %v2371
        %2404 = vst.msk [vmem:[#allocation4 + $0xd0] sm:$0xff] %vm550, %v2372
        %2405 = vst.msk [vmem:[#allocation4 + $0xd8] sm:$0xff] %vm550, %v2373
        %2406 = vst.msk [vmem:[#allocation4 + $0xe0] sm:$0xff] %vm550, %v2374
        %2407 = vst.msk [vmem:[#allocation4 + $0xe8] sm:$0xff] %vm550, %v2375
        %2408 = vst.msk [vmem:[#allocation4 + $0xf0] sm:$0xff] %vm550, %v2376
        %2409 = vst.msk [vmem:[#allocation4 + $0xf8] sm:$0xff] %vm550, %v2377
        // Predicated region
        $region65: #{tpu_custom_call.1} parent=39 // pred_check
          %p2410 = pneg %p384
        $region66: #{tpu_custom_call.1} parent=39 // pred_check_branch
          %2412 = sbr.rel (%p2410) target = $region68
        $region67: #{tpu_custom_call.1} parent=39 // pred_region
          %v2413 = vld [vmem:[#allocation3] sm:$0xff]
          %v2414 = vld [vmem:[#allocation3 + $0x8] sm:$0xff]
          %v2415 = vld [vmem:[#allocation3 + $0x10] sm:$0xff]
          %v2416 = vld [vmem:[#allocation3 + $0x18] sm:$0xff]
          %v2417 = vld [vmem:[#allocation3 + $0x20] sm:$0xff]
          %v2418 = vld [vmem:[#allocation3 + $0x28] sm:$0xff]
          %v2419 = vld [vmem:[#allocation3 + $0x30] sm:$0xff]
          %v2420 = vld [vmem:[#allocation3 + $0x38] sm:$0xff]
          %v2421 = vld [vmem:[#allocation3 + $0x40] sm:$0xff]
          %v2422 = vld [vmem:[#allocation3 + $0x48] sm:$0xff]
          %v2423 = vld [vmem:[#allocation3 + $0x50] sm:$0xff]
          %v2424 = vld [vmem:[#allocation3 + $0x58] sm:$0xff]
          %v2425 = vld [vmem:[#allocation3 + $0x60] sm:$0xff]
          %v2426 = vld [vmem:[#allocation3 + $0x68] sm:$0xff]
          %v2427 = vld [vmem:[#allocation3 + $0x70] sm:$0xff]
          %v2428 = vld [vmem:[#allocation3 + $0x78] sm:$0xff]
          %v2429 = vld [vmem:[#allocation3 + $0x80] sm:$0xff]
          %v2430 = vld [vmem:[#allocation3 + $0x88] sm:$0xff]
          %v2431 = vld [vmem:[#allocation3 + $0x90] sm:$0xff]
          %v2432 = vld [vmem:[#allocation3 + $0x98] sm:$0xff]
          %v2433 = vld [vmem:[#allocation3 + $0xa0] sm:$0xff]
          %v2434 = vld [vmem:[#allocation3 + $0xa8] sm:$0xff]
          %v2435 = vld [vmem:[#allocation3 + $0xb0] sm:$0xff]
          %v2436 = vld [vmem:[#allocation3 + $0xb8] sm:$0xff]
          %v2437 = vld [vmem:[#allocation3 + $0xc0] sm:$0xff]
          %v2438 = vld [vmem:[#allocation3 + $0xc8] sm:$0xff]
          %v2439 = vld [vmem:[#allocation3 + $0xd0] sm:$0xff]
          %v2440 = vld [vmem:[#allocation3 + $0xd8] sm:$0xff]
          %v2441 = vld [vmem:[#allocation3 + $0xe0] sm:$0xff]
          %v2442 = vld [vmem:[#allocation3 + $0xe8] sm:$0xff]
          %v2443 = vld [vmem:[#allocation3 + $0xf0] sm:$0xff]
          %v2444 = vld [vmem:[#allocation3 + $0xf8] sm:$0xff]
          %v2445 = vrcp.pop %v2413
          %v2446 = vrcp.pop %v2414
          %v2447 = vrcp.pop %v2415
          %v2448 = vrcp.pop %v2416
          %v2449 = vrcp.pop %v2417
          %v2450 = vrcp.pop %v2418
          %v2451 = vrcp.pop %v2419
          %v2452 = vrcp.pop %v2420
          %v2453 = vrcp.pop %v2421
          %v2454 = vrcp.pop %v2422
          %v2455 = vrcp.pop %v2423
          %v2456 = vrcp.pop %v2424
          %v2457 = vrcp.pop %v2425
          %v2458 = vrcp.pop %v2426
          %v2459 = vrcp.pop %v2427
          %v2460 = vrcp.pop %v2428
          %v2461 = vrcp.pop %v2429
          %v2462 = vrcp.pop %v2430
          %v2463 = vrcp.pop %v2431
          %v2464 = vrcp.pop %v2432
          %v2465 = vrcp.pop %v2433
          %v2466 = vrcp.pop %v2434
          %v2467 = vrcp.pop %v2435
          %v2468 = vrcp.pop %v2436
          %v2469 = vrcp.pop %v2437
          %v2470 = vrcp.pop %v2438
          %v2471 = vrcp.pop %v2439
          %v2472 = vrcp.pop %v2440
          %v2473 = vrcp.pop %v2441
          %v2474 = vrcp.pop %v2442
          %v2475 = vrcp.pop %v2443
          %v2476 = vrcp.pop %v2444
          %v2477 = vld [vmem:[#allocation4] sm:$0xff]
          %v2478 = vld [vmem:[#allocation4 + $0x8] sm:$0xff]
          %v2479 = vld [vmem:[#allocation4 + $0x10] sm:$0xff]
          %v2480 = vld [vmem:[#allocation4 + $0x18] sm:$0xff]
          %v2481 = vld [vmem:[#allocation4 + $0x20] sm:$0xff]
          %v2482 = vld [vmem:[#allocation4 + $0x28] sm:$0xff]
          %v2483 = vld [vmem:[#allocation4 + $0x30] sm:$0xff]
          %v2484 = vld [vmem:[#allocation4 + $0x38] sm:$0xff]
          %v2485 = vld [vmem:[#allocation4 + $0x40] sm:$0xff]
          %v2486 = vld [vmem:[#allocation4 + $0x48] sm:$0xff]
          %v2487 = vld [vmem:[#allocation4 + $0x50] sm:$0xff]
          %v2488 = vld [vmem:[#allocation4 + $0x58] sm:$0xff]
          %v2489 = vld [vmem:[#allocation4 + $0x60] sm:$0xff]
          %v2490 = vld [vmem:[#allocation4 + $0x68] sm:$0xff]
          %v2491 = vld [vmem:[#allocation4 + $0x70] sm:$0xff]
          %v2492 = vld [vmem:[#allocation4 + $0x78] sm:$0xff]
          %v2493 = vld [vmem:[#allocation4 + $0x80] sm:$0xff]
          %v2494 = vld [vmem:[#allocation4 + $0x88] sm:$0xff]
          %v2495 = vld [vmem:[#allocation4 + $0x90] sm:$0xff]
          %v2496 = vld [vmem:[#allocation4 + $0x98] sm:$0xff]
          %v2497 = vld [vmem:[#allocation4 + $0xa0] sm:$0xff]
          %v2498 = vld [vmem:[#allocation4 + $0xa8] sm:$0xff]
          %v2499 = vld [vmem:[#allocation4 + $0xb0] sm:$0xff]
          %v2500 = vld [vmem:[#allocation4 + $0xb8] sm:$0xff]
          %v2501 = vld [vmem:[#allocation4 + $0xc0] sm:$0xff]
          %v2502 = vld [vmem:[#allocation4 + $0xc8] sm:$0xff]
          %v2503 = vld [vmem:[#allocation4 + $0xd0] sm:$0xff]
          %v2504 = vld [vmem:[#allocation4 + $0xd8] sm:$0xff]
          %v2505 = vld [vmem:[#allocation4 + $0xe0] sm:$0xff]
          %v2506 = vld [vmem:[#allocation4 + $0xe8] sm:$0xff]
          %v2507 = vld [vmem:[#allocation4 + $0xf0] sm:$0xff]
          %v2508 = vld [vmem:[#allocation4 + $0xf8] sm:$0xff]
          %2510 = vset.pattern.permute.xlu0 0
          %2511 = vperm.xlu0 %2510, %v2445
          %v2512 = vpop.permute.xlu0 %2511
          %2515 = vset.pattern.permute.xlu0 0
          %2516 = vperm.xlu0 %2515, %v2446
          %v2517 = vpop.permute.xlu0 %2516
          %2520 = vset.pattern.permute.xlu0 0
          %2521 = vperm.xlu0 %2520, %v2447
          %v2522 = vpop.permute.xlu0 %2521
          %2525 = vset.pattern.permute.xlu0 0
          %2526 = vperm.xlu0 %2525, %v2448
          %v2527 = vpop.permute.xlu0 %2526
          %2530 = vset.pattern.permute.xlu0 0
          %2531 = vperm.xlu0 %2530, %v2449
          %v2532 = vpop.permute.xlu0 %2531
          %2535 = vset.pattern.permute.xlu0 0
          %2536 = vperm.xlu0 %2535, %v2450
          %v2537 = vpop.permute.xlu0 %2536
          %2540 = vset.pattern.permute.xlu0 0
          %2541 = vperm.xlu0 %2540, %v2451
          %v2542 = vpop.permute.xlu0 %2541
          %2545 = vset.pattern.permute.xlu0 0
          %2546 = vperm.xlu0 %2545, %v2452
          %v2547 = vpop.permute.xlu0 %2546
          %2550 = vset.pattern.permute.xlu0 0
          %2551 = vperm.xlu0 %2550, %v2453
          %v2552 = vpop.permute.xlu0 %2551
          %2555 = vset.pattern.permute.xlu0 0
          %2556 = vperm.xlu0 %2555, %v2454
          %v2557 = vpop.permute.xlu0 %2556
          %2560 = vset.pattern.permute.xlu0 0
          %2561 = vperm.xlu0 %2560, %v2455
          %v2562 = vpop.permute.xlu0 %2561
          %2565 = vset.pattern.permute.xlu0 0
          %2566 = vperm.xlu0 %2565, %v2456
          %v2567 = vpop.permute.xlu0 %2566
          %2570 = vset.pattern.permute.xlu0 0
          %2571 = vperm.xlu0 %2570, %v2457
          %v2572 = vpop.permute.xlu0 %2571
          %2575 = vset.pattern.permute.xlu0 0
          %2576 = vperm.xlu0 %2575, %v2458
          %v2577 = vpop.permute.xlu0 %2576
          %2580 = vset.pattern.permute.xlu0 0
          %2581 = vperm.xlu0 %2580, %v2459
          %v2582 = vpop.permute.xlu0 %2581
          %2585 = vset.pattern.permute.xlu0 0
          %2586 = vperm.xlu0 %2585, %v2460
          %v2587 = vpop.permute.xlu0 %2586
          %2590 = vset.pattern.permute.xlu0 0
          %2591 = vperm.xlu0 %2590, %v2461
          %v2592 = vpop.permute.xlu0 %2591
          %2595 = vset.pattern.permute.xlu0 0
          %2596 = vperm.xlu0 %2595, %v2462
          %v2597 = vpop.permute.xlu0 %2596
          %2600 = vset.pattern.permute.xlu0 0
          %2601 = vperm.xlu0 %2600, %v2463
          %v2602 = vpop.permute.xlu0 %2601
          %2605 = vset.pattern.permute.xlu0 0
          %2606 = vperm.xlu0 %2605, %v2464
          %v2607 = vpop.permute.xlu0 %2606
          %2610 = vset.pattern.permute.xlu0 0
          %2611 = vperm.xlu0 %2610, %v2465
          %v2612 = vpop.permute.xlu0 %2611
          %2615 = vset.pattern.permute.xlu0 0
          %2616 = vperm.xlu0 %2615, %v2466
          %v2617 = vpop.permute.xlu0 %2616
          %2620 = vset.pattern.permute.xlu0 0
          %2621 = vperm.xlu0 %2620, %v2467
          %v2622 = vpop.permute.xlu0 %2621
          %2625 = vset.pattern.permute.xlu0 0
          %2626 = vperm.xlu0 %2625, %v2468
          %v2627 = vpop.permute.xlu0 %2626
          %2630 = vset.pattern.permute.xlu0 0
          %2631 = vperm.xlu0 %2630, %v2469
          %v2632 = vpop.permute.xlu0 %2631
          %2635 = vset.pattern.permute.xlu0 0
          %2636 = vperm.xlu0 %2635, %v2470
          %v2637 = vpop.permute.xlu0 %2636
          %2640 = vset.pattern.permute.xlu0 0
          %2641 = vperm.xlu0 %2640, %v2471
          %v2642 = vpop.permute.xlu0 %2641
          %2645 = vset.pattern.permute.xlu0 0
          %2646 = vperm.xlu0 %2645, %v2472
          %v2647 = vpop.permute.xlu0 %2646
          %2650 = vset.pattern.permute.xlu0 0
          %2651 = vperm.xlu0 %2650, %v2473
          %v2652 = vpop.permute.xlu0 %2651
          %2655 = vset.pattern.permute.xlu0 0
          %2656 = vperm.xlu0 %2655, %v2474
          %v2657 = vpop.permute.xlu0 %2656
          %2660 = vset.pattern.permute.xlu0 0
          %2661 = vperm.xlu0 %2660, %v2475
          %v2662 = vpop.permute.xlu0 %2661
          %2665 = vset.pattern.permute.xlu0 0
          %2666 = vperm.xlu0 %2665, %v2476
          %v2667 = vpop.permute.xlu0 %2666
          %v2669 = vmul.f32 %v2477, %v2512
          %v2670 = vmul.f32 %v2478, %v2517
          %v2671 = vmul.f32 %v2479, %v2522
          %v2672 = vmul.f32 %v2480, %v2527
          %v2673 = vmul.f32 %v2481, %v2532
          %v2674 = vmul.f32 %v2482, %v2537
          %v2675 = vmul.f32 %v2483, %v2542
          %v2676 = vmul.f32 %v2484, %v2547
          %v2677 = vmul.f32 %v2485, %v2552
          %v2678 = vmul.f32 %v2486, %v2557
          %v2679 = vmul.f32 %v2487, %v2562
          %v2680 = vmul.f32 %v2488, %v2567
          %v2681 = vmul.f32 %v2489, %v2572
          %v2682 = vmul.f32 %v2490, %v2577
          %v2683 = vmul.f32 %v2491, %v2582
          %v2684 = vmul.f32 %v2492, %v2587
          %v2685 = vmul.f32 %v2493, %v2592
          %v2686 = vmul.f32 %v2494, %v2597
          %v2687 = vmul.f32 %v2495, %v2602
          %v2688 = vmul.f32 %v2496, %v2607
          %v2689 = vmul.f32 %v2497, %v2612
          %v2690 = vmul.f32 %v2498, %v2617
          %v2691 = vmul.f32 %v2499, %v2622
          %v2692 = vmul.f32 %v2500, %v2627
          %v2693 = vmul.f32 %v2501, %v2632
          %v2694 = vmul.f32 %v2502, %v2637
          %v2695 = vmul.f32 %v2503, %v2642
          %v2696 = vmul.f32 %v2504, %v2647
          %v2697 = vmul.f32 %v2505, %v2652
          %v2698 = vmul.f32 %v2506, %v2657
          %v2699 = vmul.f32 %v2507, %v2662
          %v2700 = vmul.f32 %v2508, %v2667
          %v2701 = vld [vmem:[#allocation11] sm:$0xff]
          %v2702 = vld [vmem:[#allocation11 + $0x8] sm:$0xff]
          %v2703 = vld [vmem:[#allocation11 + $0x10] sm:$0xff]
          %v2704 = vld [vmem:[#allocation11 + $0x18] sm:$0xff]
          %v2705 = vld [vmem:[#allocation13] sm:$0x1]
          %v2707 = vlaneseq
          %v2708 = vshrl.u32 %v2707, 7
          %v2709 = vsub.s32 0, %v2708
          %v2710 = vrot.slane %v2705, %v2709
          %v2713 = vsel %vm550, %v2669, 0
          %v2716 = vsel %vm550, %v2670, 0
          %v2719 = vsel %vm550, %v2671, 0
          %v2722 = vsel %vm550, %v2672, 0
          %v2725 = vsel %vm550, %v2673, 0
          %v2728 = vsel %vm550, %v2674, 0
          %v2731 = vsel %vm550, %v2675, 0
          %v2734 = vsel %vm550, %v2676, 0
          %v2737 = vsel %vm550, %v2677, 0
          %v2740 = vsel %vm550, %v2678, 0
          %v2743 = vsel %vm550, %v2679, 0
          %v2746 = vsel %vm550, %v2680, 0
          %v2749 = vsel %vm550, %v2681, 0
          %v2752 = vsel %vm550, %v2682, 0
          %v2755 = vsel %vm550, %v2683, 0
          %v2758 = vsel %vm550, %v2684, 0
          %v2761 = vsel %vm550, %v2685, 0
          %v2764 = vsel %vm550, %v2686, 0
          %v2767 = vsel %vm550, %v2687, 0
          %v2770 = vsel %vm550, %v2688, 0
          %v2773 = vsel %vm550, %v2689, 0
          %v2776 = vsel %vm550, %v2690, 0
          %v2779 = vsel %vm550, %v2691, 0
          %v2782 = vsel %vm550, %v2692, 0
          %v2785 = vsel %vm550, %v2693, 0
          %v2788 = vsel %vm550, %v2694, 0
          %v2791 = vsel %vm550, %v2695, 0
          %v2794 = vsel %vm550, %v2696, 0
          %v2797 = vsel %vm550, %v2697, 0
          %v2800 = vsel %vm550, %v2698, 0
          %v2803 = vsel %vm550, %v2699, 0
          %v2806 = vsel %vm550, %v2700, 0
          %2808 = vmatprep.subr.mxu0 0.0
          %2809 = vmatpush1.msra.mxu0 %v2701
          %2810 = vmatprep.subr.mxu0 0.0
          %2811 = vmatpush1.msra.mxu0 %v2702
          %2812 = vmatprep.subr.mxu0 0.0
          %2813 = vmatpush1.msra.mxu0 %v2703
          %2814 = vmatprep.subr.mxu0 0.0
          %2815 = vmatpush1.msra.mxu0 %v2704
          %2816 = vmatprep.subr.mxu0 0.0
          %2817 = vmatpush1.msra.mxu0 0.0
          %2818 = vmatprep.subr.mxu0 0.0
          %2819 = vmatpush1.msra.mxu0 0.0
          %2820 = vmatprep.subr.mxu0 0.0
          %2821 = vmatpush1.msra.mxu0 0.0
          %2822 = vmatprep.subr.mxu0 0.0
          %2823 = vmatpush1.msra.mxu0 0.0
          %2824 = vmatprep.subr.mxu0 0.0
          %2825 = vmatpush1.msra.mxu0 0.0
          %2826 = vmatprep.subr.mxu0 0.0
          %2827 = vmatpush1.msra.mxu0 0.0
          %2828 = vmatprep.subr.mxu0 0.0
          %2829 = vmatpush1.msra.mxu0 0.0
          %2830 = vmatprep.subr.mxu0 0.0
          %2831 = vmatpush1.msra.mxu0 0.0
          %2832 = vmatprep.subr.mxu0 0.0
          %2833 = vmatpush1.msra.mxu0 0.0
          %2834 = vmatprep.subr.mxu0 0.0
          %2835 = vmatpush1.msra.mxu0 0.0
          %2836 = vmatprep.subr.mxu0 0.0
          %2837 = vmatpush1.msra.mxu0 0.0
          %2838 = vmatprep.subr.mxu0 0.0
          %2839 = vmatpush1.msra.mxu0 0.0
          %2840 = vmatprep.subr.mxu0 0.0
          %2841 = vmatpush1.msra.mxu0 0.0
          %2842 = vmatprep.subr.mxu0 0.0
          %2843 = vmatpush1.msra.mxu0 0.0
          %2844 = vmatprep.subr.mxu0 0.0
          %2845 = vmatpush1.msra.mxu0 0.0
          %2846 = vmatprep.subr.mxu0 0.0
          %2847 = vmatpush1.msra.mxu0 0.0
          %2848 = vmatprep.subr.mxu0 0.0
          %2849 = vmatpush1.msra.mxu0 0.0
          %2850 = vmatprep.subr.mxu0 0.0
          %2851 = vmatpush1.msra.mxu0 0.0
          %2852 = vmatprep.subr.mxu0 0.0
          %2853 = vmatpush1.msra.mxu0 0.0
          %2854 = vmatprep.subr.mxu0 0.0
          %2855 = vmatpush1.msra.mxu0 0.0
          %2856 = vmatprep.subr.mxu0 0.0
          %2857 = vmatpush1.msra.mxu0 0.0
          %2858 = vmatprep.subr.mxu0 0.0
          %2859 = vmatpush1.msra.mxu0 0.0
          %2860 = vmatprep.subr.mxu0 0.0
          %2861 = vmatpush1.msra.mxu0 0.0
          %2862 = vmatprep.subr.mxu0 0.0
          %2863 = vmatpush1.msra.mxu0 0.0
          %2864 = vmatprep.subr.mxu0 0.0
          %2865 = vmatpush1.msra.mxu0 0.0
          %2866 = vmatprep.subr.mxu0 0.0
          %2867 = vmatpush1.msra.mxu0 0.0
          %2868 = vmatprep.subr.mxu0 0.0
          %2869 = vmatpush1.msra.mxu0 0.0
          %2870 = vmatprep.subr.mxu0 0.0
          %2871 = vmatpush1.msra.mxu0 0.0
          %2872 = vmatprep.mubr.f32.mxu0 0.0
          %2873 = vmatmul.mubr.f32.gmra.mrb[0].mxu0 %v2713
          %v2874 = vpop.f32.mrb[0].mxu0
          %v2875 = vadd.f32 %v2710, %v2874
          %v2876 = vpop.f32.mrb[0].mxu0
          %2877 = vmatprep.mubr.f32.mxu0 0.0
          %2878 = vmatmul.mubr.f32.gmra.mrb[0].mxu0 %v2716
          %v2879 = vpop.f32.mrb[0].mxu0
          %v2880 = vadd.f32 %v2710, %v2879
          %v2881 = vpop.f32.mrb[0].mxu0
          %2882 = vmatprep.mubr.f32.mxu0 0.0
          %2883 = vmatmul.mubr.f32.gmra.mrb[0].mxu0 %v2719
          %v2884 = vpop.f32.mrb[0].mxu0
          %v2885 = vadd.f32 %v2710, %v2884
          %v2886 = vpop.f32.mrb[0].mxu0
          %2887 = vmatprep.mubr.f32.mxu0 0.0
          %2888 = vmatmul.mubr.f32.gmra.mrb[0].mxu0 %v2722
          %v2889 = vpop.f32.mrb[0].mxu0
          %v2890 = vadd.f32 %v2710, %v2889
          %v2891 = vpop.f32.mrb[0].mxu0
          %2892 = vmatprep.mubr.f32.mxu0 0.0
          %2893 = vmatmul.mubr.f32.gmra.mrb[0].mxu0 %v2725
          %v2894 = vpop.f32.mrb[0].mxu0
          %v2895 = vadd.f32 %v2710, %v2894
          %v2896 = vpop.f32.mrb[0].mxu0
          %2897 = vmatprep.mubr.f32.mxu0 0.0
          %2898 = vmatmul.mubr.f32.gmra.mrb[0].mxu0 %v2728
          %v2899 = vpop.f32.mrb[0].mxu0
          %v2900 = vadd.f32 %v2710, %v2899
          %v2901 = vpop.f32.mrb[0].mxu0
          %2902 = vmatprep.mubr.f32.mxu0 0.0
          %2903 = vmatmul.mubr.f32.gmra.mrb[0].mxu0 %v2731
          %v2904 = vpop.f32.mrb[0].mxu0
          %v2905 = vadd.f32 %v2710, %v2904
          %v2906 = vpop.f32.mrb[0].mxu0
          %2907 = vmatprep.mubr.f32.mxu0 0.0
          %2908 = vmatmul.mubr.f32.gmra.mrb[0].mxu0 %v2734
          %v2909 = vpop.f32.mrb[0].mxu0
          %v2910 = vadd.f32 %v2710, %v2909
          %v2911 = vpop.f32.mrb[0].mxu0
          %2912 = vmatprep.mubr.f32.mxu0 0.0
          %2913 = vmatmul.mubr.f32.gmra.mrb[0].mxu0 %v2737
          %v2914 = vpop.f32.mrb[0].mxu0
          %v2915 = vadd.f32 %v2710, %v2914
          %v2916 = vpop.f32.mrb[0].mxu0
          %2917 = vmatprep.mubr.f32.mxu0 0.0
          %2918 = vmatmul.mubr.f32.gmra.mrb[0].mxu0 %v2740
          %v2919 = vpop.f32.mrb[0].mxu0
          %v2920 = vadd.f32 %v2710, %v2919
          %v2921 = vpop.f32.mrb[0].mxu0
          %2922 = vmatprep.mubr.f32.mxu0 0.0
          %2923 = vmatmul.mubr.f32.gmra.mrb[0].mxu0 %v2743
          %v2924 = vpop.f32.mrb[0].mxu0
          %v2925 = vadd.f32 %v2710, %v2924
          %v2926 = vpop.f32.mrb[0].mxu0
          %2927 = vmatprep.mubr.f32.mxu0 0.0
          %2928 = vmatmul.mubr.f32.gmra.mrb[0].mxu0 %v2746
          %v2929 = vpop.f32.mrb[0].mxu0
          %v2930 = vadd.f32 %v2710, %v2929
          %v2931 = vpop.f32.mrb[0].mxu0
          %2932 = vmatprep.mubr.f32.mxu0 0.0
          %2933 = vmatmul.mubr.f32.gmra.mrb[0].mxu0 %v2749
          %v2934 = vpop.f32.mrb[0].mxu0
          %v2935 = vadd.f32 %v2710, %v2934
          %v2936 = vpop.f32.mrb[0].mxu0
          %2937 = vmatprep.mubr.f32.mxu0 0.0
          %2938 = vmatmul.mubr.f32.gmra.mrb[0].mxu0 %v2752
          %v2939 = vpop.f32.mrb[0].mxu0
          %v2940 = vadd.f32 %v2710, %v2939
          %v2941 = vpop.f32.mrb[0].mxu0
          %2942 = vmatprep.mubr.f32.mxu0 0.0
          %2943 = vmatmul.mubr.f32.gmra.mrb[0].mxu0 %v2755
          %v2944 = vpop.f32.mrb[0].mxu0
          %v2945 = vadd.f32 %v2710, %v2944
          %v2946 = vpop.f32.mrb[0].mxu0
          %2947 = vmatprep.mubr.f32.mxu0 0.0
          %2948 = vmatmul.mubr.f32.gmra.mrb[0].mxu0 %v2758
          %v2949 = vpop.f32.mrb[0].mxu0
          %v2950 = vadd.f32 %v2710, %v2949
          %v2951 = vpop.f32.mrb[0].mxu0
          %2952 = vmatprep.mubr.f32.mxu0 0.0
          %2953 = vmatmul.mubr.f32.gmra.mrb[0].mxu0 %v2761
          %v2954 = vpop.f32.mrb[0].mxu0
          %v2955 = vadd.f32 %v2710, %v2954
          %v2956 = vpop.f32.mrb[0].mxu0
          %2957 = vmatprep.mubr.f32.mxu0 0.0
          %2958 = vmatmul.mubr.f32.gmra.mrb[0].mxu0 %v2764
          %v2959 = vpop.f32.mrb[0].mxu0
          %v2960 = vadd.f32 %v2710, %v2959
          %v2961 = vpop.f32.mrb[0].mxu0
          %2962 = vmatprep.mubr.f32.mxu0 0.0
          %2963 = vmatmul.mubr.f32.gmra.mrb[0].mxu0 %v2767
          %v2964 = vpop.f32.mrb[0].mxu0
          %v2965 = vadd.f32 %v2710, %v2964
          %v2966 = vpop.f32.mrb[0].mxu0
          %2967 = vmatprep.mubr.f32.mxu0 0.0
          %2968 = vmatmul.mubr.f32.gmra.mrb[0].mxu0 %v2770
          %v2969 = vpop.f32.mrb[0].mxu0
          %v2970 = vadd.f32 %v2710, %v2969
          %v2971 = vpop.f32.mrb[0].mxu0
          %2972 = vmatprep.mubr.f32.mxu0 0.0
          %2973 = vmatmul.mubr.f32.gmra.mrb[0].mxu0 %v2773
          %v2974 = vpop.f32.mrb[0].mxu0
          %v2975 = vadd.f32 %v2710, %v2974
          %v2976 = vpop.f32.mrb[0].mxu0
          %2977 = vmatprep.mubr.f32.mxu0 0.0
          %2978 = vmatmul.mubr.f32.gmra.mrb[0].mxu0 %v2776
          %v2979 = vpop.f32.mrb[0].mxu0
          %v2980 = vadd.f32 %v2710, %v2979
          %v2981 = vpop.f32.mrb[0].mxu0
          %2982 = vmatprep.mubr.f32.mxu0 0.0
          %2983 = vmatmul.mubr.f32.gmra.mrb[0].mxu0 %v2779
          %v2984 = vpop.f32.mrb[0].mxu0
          %v2985 = vadd.f32 %v2710, %v2984
          %v2986 = vpop.f32.mrb[0].mxu0
          %2987 = vmatprep.mubr.f32.mxu0 0.0
          %2988 = vmatmul.mubr.f32.gmra.mrb[0].mxu0 %v2782
          %v2989 = vpop.f32.mrb[0].mxu0
          %v2990 = vadd.f32 %v2710, %v2989
          %v2991 = vpop.f32.mrb[0].mxu0
          %2992 = vmatprep.mubr.f32.mxu0 0.0
          %2993 = vmatmul.mubr.f32.gmra.mrb[0].mxu0 %v2785
          %v2994 = vpop.f32.mrb[0].mxu0
          %v2995 = vadd.f32 %v2710, %v2994
          %v2996 = vpop.f32.mrb[0].mxu0
          %2997 = vmatprep.mubr.f32.mxu0 0.0
          %2998 = vmatmul.mubr.f32.gmra.mrb[0].mxu0 %v2788
          %v2999 = vpop.f32.mrb[0].mxu0
          %v3000 = vadd.f32 %v2710, %v2999
          %v3001 = vpop.f32.mrb[0].mxu0
          %3002 = vmatprep.mubr.f32.mxu0 0.0
          %3003 = vmatmul.mubr.f32.gmra.mrb[0].mxu0 %v2791
          %v3004 = vpop.f32.mrb[0].mxu0
          %v3005 = vadd.f32 %v2710, %v3004
          %v3006 = vpop.f32.mrb[0].mxu0
          %3007 = vmatprep.mubr.f32.mxu0 0.0
          %3008 = vmatmul.mubr.f32.gmra.mrb[0].mxu0 %v2794
          %v3009 = vpop.f32.mrb[0].mxu0
          %v3010 = vadd.f32 %v2710, %v3009
          %v3011 = vpop.f32.mrb[0].mxu0
          %3012 = vmatprep.mubr.f32.mxu0 0.0
          %3013 = vmatmul.mubr.f32.gmra.mrb[0].mxu0 %v2797
          %v3014 = vpop.f32.mrb[0].mxu0
          %v3015 = vadd.f32 %v2710, %v3014
          %v3016 = vpop.f32.mrb[0].mxu0
          %3017 = vmatprep.mubr.f32.mxu0 0.0
          %3018 = vmatmul.mubr.f32.gmra.mrb[0].mxu0 %v2800
          %v3019 = vpop.f32.mrb[0].mxu0
          %v3020 = vadd.f32 %v2710, %v3019
          %v3021 = vpop.f32.mrb[0].mxu0
          %3022 = vmatprep.mubr.f32.mxu0 0.0
          %3023 = vmatmul.mubr.f32.gmra.mrb[0].mxu0 %v2803
          %v3024 = vpop.f32.mrb[0].mxu0
          %v3025 = vadd.f32 %v2710, %v3024
          %v3026 = vpop.f32.mrb[0].mxu0
          %3027 = vmatprep.mubr.f32.mxu0 0.0
          %3028 = vmatmul.mubr.f32.gmra.mrb[0].mxu0 %v2806
          %v3029 = vpop.f32.mrb[0].mxu0
          %v3030 = vadd.f32 %v2710, %v3029
          %v3031 = vpop.f32.mrb[0].mxu0
          %3032 = vdwg.mxu0
          %3033 = vst.msk [vmem:[%s379] sm:$0xff] %vm550, %v2875
          %3034 = vst.msk [vmem:[%s379 + $0x8] sm:$0xff] %vm550, %v2880
          %3035 = vst.msk [vmem:[%s379 + $0x10] sm:$0xff] %vm550, %v2885
          %3036 = vst.msk [vmem:[%s379 + $0x18] sm:$0xff] %vm550, %v2890
          %3037 = vst.msk [vmem:[%s379 + $0x20] sm:$0xff] %vm550, %v2895
          %3038 = vst.msk [vmem:[%s379 + $0x28] sm:$0xff] %vm550, %v2900
          %3039 = vst.msk [vmem:[%s379 + $0x30] sm:$0xff] %vm550, %v2905
          %3040 = vst.msk [vmem:[%s379 + $0x38] sm:$0xff] %vm550, %v2910
          %3041 = vst.msk [vmem:[%s379 + $0x40] sm:$0xff] %vm550, %v2915
          %3042 = vst.msk [vmem:[%s379 + $0x48] sm:$0xff] %vm550, %v2920
          %3043 = vst.msk [vmem:[%s379 + $0x50] sm:$0xff] %vm550, %v2925
          %3044 = vst.msk [vmem:[%s379 + $0x58] sm:$0xff] %vm550, %v2930
          %3045 = vst.msk [vmem:[%s379 + $0x60] sm:$0xff] %vm550, %v2935
          %3046 = vst.msk [vmem:[%s379 + $0x68] sm:$0xff] %vm550, %v2940
          %3047 = vst.msk [vmem:[%s379 + $0x70] sm:$0xff] %vm550, %v2945
          %3048 = vst.msk [vmem:[%s379 + $0x78] sm:$0xff] %vm550, %v2950
          %3049 = vst.msk [vmem:[%s379 + $0x80] sm:$0xff] %vm550, %v2955
          %3050 = vst.msk [vmem:[%s379 + $0x88] sm:$0xff] %vm550, %v2960
          %3051 = vst.msk [vmem:[%s379 + $0x90] sm:$0xff] %vm550, %v2965
          %3052 = vst.msk [vmem:[%s379 + $0x98] sm:$0xff] %vm550, %v2970
          %3053 = vst.msk [vmem:[%s379 + $0xa0] sm:$0xff] %vm550, %v2975
          %3054 = vst.msk [vmem:[%s379 + $0xa8] sm:$0xff] %vm550, %v2980
          %3055 = vst.msk [vmem:[%s379 + $0xb0] sm:$0xff] %vm550, %v2985
          %3056 = vst.msk [vmem:[%s379 + $0xb8] sm:$0xff] %vm550, %v2990
          %3057 = vst.msk [vmem:[%s379 + $0xc0] sm:$0xff] %vm550, %v2995
          %3058 = vst.msk [vmem:[%s379 + $0xc8] sm:$0xff] %vm550, %v3000
          %3059 = vst.msk [vmem:[%s379 + $0xd0] sm:$0xff] %vm550, %v3005
          %3060 = vst.msk [vmem:[%s379 + $0xd8] sm:$0xff] %vm550, %v3010
          %3061 = vst.msk [vmem:[%s379 + $0xe0] sm:$0xff] %vm550, %v3015
          %3062 = vst.msk [vmem:[%s379 + $0xe8] sm:$0xff] %vm550, %v3020
          %3063 = vst.msk [vmem:[%s379 + $0xf0] sm:$0xff] %vm550, %v3025
          %3064 = vst.msk [vmem:[%s379 + $0xf8] sm:$0xff] %vm550, %v3030
        $region68: #{tpu_custom_call.1} parent=39 // pred_fallthru
          _
        %s3065 = sand.u32 %s181, 1
        %s3066 = scalar_lea.sflag [#allocation7], %s3065
        %s3067 = sand.u32 %s181, 1
        %s3068 = smul.addr %s3067, 256
        %s3069 = scalar_lea.vmem [#allocation14], %s3068
        // Predicated region
        $region69: #{tpu_custom_call.1} parent=39 // pred_check
          %p3070 = pneg %p191
        $region70: #{tpu_custom_call.1} parent=39 // pred_check_branch
          %3072 = sbr.rel (%p3070) target = $region72
        $region71: #{tpu_custom_call.1} parent=39 // pred_region
          %s3073 = smul.u32 32, %s32
          %s3075 = ssub.s32 4096, 4096
          %3076 = vsyncadd %s3066, %s3075
          %s3077 = smul.addr %s31, 32
          %s3078 = sadd.s32 %s3073, %s3077
          %s3079 = smul.addr %s3078, 128
          %s3080 = scalar_lea.hbm %s5, %s3079
          %s3081 = sshll.u32 %s3069, 4
          %s3082 = int_to_ptr.vmem [resolvable:$true] %s3081
          %3087 = dma.vmem_to_hbm [thread:$0]  %s3082, 4096, %s3080, %s3066, 128, 128, 8
        $region72: #{tpu_custom_call.1} parent=39 // pred_fallthru
          _
      $region40: #{tpu_custom_call.1} parent=5 // pred_fallthru
        _
      %p3088 = scmp.le.s32.totalorder 2, %s21
      // Predicated region
      $region73: #{tpu_custom_call.1} parent=5 // pred_check
        %p3089 = pneg %p3088
      $region74: #{tpu_custom_call.1} parent=5 // pred_check_branch
        %3091 = sbr.rel (%p3089) target = $region76
      $region75: #{tpu_custom_call.1} parent=5 // pred_region
        %s3092 = ssub.s32 %s21, 2
        // Predicated region
        $region77: #{tpu_custom_call.1} parent=75 // pred_check
          %p3093 = pneg %p197
        $region78: #{tpu_custom_call.1} parent=75 // pred_check_branch
          %3095 = sbr.rel (%p3093) target = $region80
        $region79: #{tpu_custom_call.1} parent=75 // pred_region
          %s3096 = sand.u32 %s182, 1
          %s3097 = scalar_lea.sflag [#allocation7], %s3096
          %s3098 = sand.u32 %s182, 1
          %s3099 = smul.addr %s3098, 256
          %s3100 = scalar_lea.vmem [#allocation14], %s3099
          %3101 = dma.done %s3097, 4096
        $region80: #{tpu_custom_call.1} parent=75 // pred_fallthru
          _
      $region76: #{tpu_custom_call.1} parent=5 // pred_fallthru
        _
    $region6: #{tpu_custom_call.1} parent=1 // loop_footer
      %s25 = sadd.s32 1, %s21
    $region7: #{tpu_custom_call.1} parent=1 // loop_footer_branch
      %20 = sbr.rel target = $region3
    $region8: #{tpu_custom_call.1} parent=1 // loop_exit
      _
    %3102 = vsyncpa [#allocation6], 1
    %s3103 = scalar_lea.sflag [#allocation6], 1
    %3104 = vsyncpa %s3103, 1
    %3105 = vsyncpa [#allocation9], 1
    %s3106 = scalar_lea.sflag [#allocation9], 1
    %3107 = vsyncpa %s3106, 1
    %3108 = vsyncpa [#allocation12], 1
    %3109 = vsyncpa [#allocation7], 1
    %s3110 = scalar_lea.sflag [#allocation7], 1
    %3111 = vsyncpa %s3110, 1

</llo_original>
